<compile_context>
chip_gen: v7x
topology: tpu7x:2x2x1
jax: 0.10.0
libtpu: 0.0.40
codegen_flags: <defaults>
</compile_context>

<pallas_src>
import functools

import jax
import jax.numpy as jnp
import numpy as np
from jax.experimental import pallas as pl
from jax.experimental.pallas import tpu as pltpu


def _elu(x):
    # ELU(alpha=1): x if x > 0 else exp(x) - 1.
    # exp(min(x, 0)) keeps the discarded branch finite (where evaluates both).
    return jnp.where(x > 0, x, jnp.exp(jnp.minimum(x, 0.0)) - 1.0)


# ----------------------------------------------------------------------------
# Pallas kernel: full forward pass (LSTM recurrence + MLP + A/B/C heads)
# ----------------------------------------------------------------------------
def _lko_lstm_kernel(
    # inputs
    state_ref,      # (B, Ds)
    ctrl_ref,       # (B, Dc)
    seq_s_ref,      # (B, T, Ds)   state history (as given by the caller)
    seq_c_ref,      # (B, T, Dc)   control history
    wih_s_ref,      # (Ds, 4H)  rows of weight_ih_l0.T for state inputs, gates [i,f,o,g]
    wih_c_ref,      # (Dc, 4H)  rows of weight_ih_l0.T for control inputs, gates [i,f,o,g]
    whh_ref,        # (H, 4H)   weight_hh_l0.T, gates [i,f,o,g]
    blstm_ref,      # (1, 4H)   bias_ih + bias_hh, gates [i,f,o,g]
    w1s_ref,        # (Ds, Hm)  mlp W1.T rows multiplying state_current
    w1h_ref,        # (H, Hm)   mlp W1.T rows multiplying last hidden state
    b1_ref,         # (1, Hm)
    w2_ref,         # (Hm, Do)
    b2_ref,         # (1, Do)
    a_ref,          # (Do, Do)  A.weight.T
    bm_ref,         # (Dc, Do)  B.weight.T
    cw_ref,         # (Do, Ds)  C.weight.T
    cb_ref,         # (1, Ds)
    # outputs
    phi_ref,        # (B, Do)
    phi_pred_ref,   # (B, Do)
    state_pred_ref, # (B, Ds)
    # scratch
    gx_ref,         # (B, T, 4H)  pre-computed input projections for all steps
):
    f32 = jnp.float32
    B, T, Ds = seq_s_ref.shape
    H = whh_ref.shape[0]
    G = 4 * H

    # ---- Hoisted input projection + bias: one matmul pair over all T*B rows
    # instead of one matmul + one bias broadcast per recurrence step.
    seq_s = seq_s_ref[...].reshape(B * T, Ds)           # layout-preserving reshape
    seq_c = seq_c_ref[...].reshape(B * T, seq_c_ref.shape[2])
    gates_x = (
        jnp.dot(seq_s, wih_s_ref[...], preferred_element_type=f32)
        + jnp.dot(seq_c, wih_c_ref[...], preferred_element_type=f32)
        + blstm_ref[...]
    )                                                   # (B*T, 4H), row = b*T + t
    gx_ref[...] = gates_x.reshape(B, T, G)              # stage in VMEM scratch

    whh = whh_ref[...]                                  # hoisted weight load

    h = jnp.zeros((B, H), f32)
    c = jnp.zeros((B, H), f32)

    # ---- LSTM recurrence, fully unrolled (T is a static Python int).
    # Equivalent to lax.fori_loop(..., unroll=True) but with static slices.
    # Per step only h @ Whh + one sigmoid pass + two tanh passes remain on the
    # serial dependency chain.
    for t in range(T):
        gx_t = gx_ref[:, t, :]                          # (B, 4H) strided VMEM load
        gates = gx_t + jnp.dot(h, whh, preferred_element_type=f32)
        # permuted gate order: [i, f, o | g]
        sig = jax.nn.sigmoid(gates[:, : 3 * H])         # single EUP pass for i,f,o
        i_g = sig[:, 0 * H:1 * H]
        f_g = sig[:, 1 * H:2 * H]
        o_g = sig[:, 2 * H:3 * H]
        g_g = jnp.tanh(gates[:, 3 * H:])
        c = f_g * c + i_g * g_g
        h = o_g * jnp.tanh(c)

    # ---- MLP head: split-weight matmuls instead of lane-axis concat of
    # [state_current, last_hidden_state].
    z1 = _elu(
        jnp.dot(state_ref[...], w1s_ref[...], preferred_element_type=f32)
        + jnp.dot(h, w1h_ref[...], preferred_element_type=f32)
        + b1_ref[...]
    )
    phi = _elu(jnp.dot(z1, w2_ref[...], preferred_element_type=f32) + b2_ref[...])

    # ---- Koopman heads: phi_pred = A(phi) + B(u);  state_pred = C(phi_pred)
    phi_pred = (
        jnp.dot(phi, a_ref[...], preferred_element_type=f32)
        + jnp.dot(ctrl_ref[...], bm_ref[...], preferred_element_type=f32)
    )
    state_pred = (
        jnp.dot(phi_pred, cw_ref[...], preferred_element_type=f32) + cb_ref[...]
    )

    phi_ref[...] = phi
    phi_pred_ref[...] = phi_pred
    state_pred_ref[...] = state_pred


# ----------------------------------------------------------------------------
# One-time host-side weight preparation (no per-call glue HLOs)
# ----------------------------------------------------------------------------
def prepare_kernel_params(params, state_size, control_size):
    """Transpose to x @ W.T layout, permute LSTM gate columns [i,f,g,o]->[i,f,o,g],
    combine the two LSTM biases, and split row blocks so the kernel never
    concatenates along the lane axis."""
    f32 = jnp.float32
    Ds = state_size
    H = params["w_hh"].shape[1]                 # w_hh: (4H, H)
    # PyTorch gate order [i, f, g, o] -> kernel order [i, f, o, g]
    perm = np.concatenate([np.arange(0, 2 * H),         # i, f
                           np.arange(3 * H, 4 * H),     # o
                           np.arange(2 * H, 3 * H)])    # g

    w_ih_t = jnp.asarray(params["w_ih"]).T[:, perm]     # (Ds+Dc, 4H)
    w_hh_t = jnp.asarray(params["w_hh"]).T[:, perm]     # (H, 4H)
    b_lstm = (params["b_ih"] + params["b_hh"])[perm].reshape(1, 4 * H)
    w1_t = jnp.asarray(params["mlp_w1"]).T              # (Ds+H, Hm)

    return {
        "wih_s": w_ih_t[:Ds].astype(f32),
        "wih_c": w_ih_t[Ds:].astype(f32),
        "whh": w_hh_t.astype(f32),
        "b_lstm": b_lstm.astype(f32),
        "w1_s": w1_t[:Ds].astype(f32),
        "w1_h": w1_t[Ds:].astype(f32),
        "b1": params["mlp_b1"].reshape(1, -1).astype(f32),
        "w2": jnp.asarray(params["mlp_w2"]).T.astype(f32),
        "b2": params["mlp_b2"].reshape(1, -1).astype(f32),
        "a": jnp.asarray(params["A_w"]).T.astype(f32),
        "bm": jnp.asarray(params["B_w"]).T.astype(f32),
        "cw": jnp.asarray(params["C_w"]).T.astype(f32),
        "cb": params["C_b"].reshape(1, -1).astype(f32),
    }


# ----------------------------------------------------------------------------
# Wrapper: pallas_call (single un-gridded call, everything resident in VMEM)
# ----------------------------------------------------------------------------
def lko_lstm_forward(kparams, state_current, control_current,
                     state_sequence, control_sequence):
    B, Ds = state_current.shape
    T = state_sequence.shape[1]
    H = kparams["whh"].shape[0]
    Do = kparams["a"].shape[0]

    vmem = pl.BlockSpec(memory_space=pltpu.MemorySpace.VMEM)
    inputs = (
        state_current.astype(jnp.float32),
        control_current.astype(jnp.float32),
        state_sequence.astype(jnp.float32),
        control_sequence.astype(jnp.float32),
        kparams["wih_s"], kparams["wih_c"], kparams["whh"], kparams["b_lstm"],
        kparams["w1_s"], kparams["w1_h"], kparams["b1"],
        kparams["w2"], kparams["b2"],
        kparams["a"], kparams["bm"], kparams["cw"], kparams["cb"],
    )
    return pl.pallas_call(
        _lko_lstm_kernel,
        out_shape=(
            jax.ShapeDtypeStruct((B, Do), jnp.float32),
            jax.ShapeDtypeStruct((B, Do), jnp.float32),
            jax.ShapeDtypeStruct((B, Ds), jnp.float32),
        ),
        in_specs=[vmem] * len(inputs),
        out_specs=(vmem, vmem, vmem),
        scratch_shapes=[pltpu.VMEM((B, T, 4 * H), jnp.float32)],
    )(*inputs)  # (phi_current, phi_pred, state_pred)


# ----------------------------------------------------------------------------
# Pure-JAX reference (mirrors the PyTorch forward exactly)
# ----------------------------------------------------------------------------
def lko_lstm_reference(params, state_current, control_current,
                       state_sequence, control_sequence):
    hp = jax.lax.Precision.HIGHEST
    H = params["w_hh"].shape[1]
    hist = jnp.concatenate([state_sequence, control_sequence], axis=2)
    B, T, _ = hist.shape

    h = jnp.zeros((B, H), jnp.float32)
    c = jnp.zeros((B, H), jnp.float32)
    for t in range(T):
        x_t = hist[:, t, :]
        gates = (jnp.dot(x_t, params["w_ih"].T, precision=hp) + params["b_ih"]
                 + jnp.dot(h, params["w_hh"].T, precision=hp) + params["b_hh"])
        i_g = jax.nn.sigmoid(gates[:, 0 * H:1 * H])
        f_g = jax.nn.sigmoid(gates[:, 1 * H:2 * H])
        g_g = jnp.tanh(gates[:, 2 * H:3 * H])
        o_g = jax.nn.sigmoid(gates[:, 3 * H:4 * H])
        c = f_g * c + i_g * g_g
        h = o_g * jnp.tanh(c)

    hidden = jnp.concatenate([state_current, h], axis=1)
    z1 = _elu(jnp.dot(hidden, params["mlp_w1"].T, precision=hp) + params["mlp_b1"])
    phi_current = _elu(jnp.dot(z1, params["mlp_w2"].T, precision=hp) + params["mlp_b2"])
    out_a = jnp.dot(phi_current, params["A_w"].T, precision=hp)
    out_b = jnp.dot(control_current, params["B_w"].T, precision=hp)
    phi_pred = out_a + out_b
    state_pred = jnp.dot(phi_pred, params["C_w"].T, precision=hp) + params["C_b"]
    return phi_current, phi_pred, state_pred


# ----------------------------------------------------------------------------
# Deterministic parameter construction (PyTorch-layout weights)
# ----------------------------------------------------------------------------
def make_params(key, state_size, hidden_size_lstm, hidden_size_mlp,
                output_size, control_size):
    ks = jax.random.split(key, 12)
    d_in = state_size + control_size
    s = 0.1

    def rnd(k, shape):
        return (s * jax.random.normal(k, shape)).astype(jnp.float32)

    return {
        "w_ih": rnd(ks[0], (4 * hidden_size_lstm, d_in)),
        "w_hh": rnd(ks[1], (4 * hidden_size_lstm, hidden_size_lstm)),
        "b_ih": rnd(ks[2], (4 * hidden_size_lstm,)),
        "b_hh": rnd(ks[3], (4 * hidden_size_lstm,)),
        "mlp_w1": rnd(ks[4], (hidden_size_mlp, hidden_size_lstm + state_size)),
        "mlp_b1": rnd(ks[5], (hidden_size_mlp,)),
        "mlp_w2": rnd(ks[6], (output_size, hidden_size_mlp)),
        "mlp_b2": rnd(ks[7], (output_size,)),
        "A_w": rnd(ks[8], (output_size, output_size)),
        "B_w": rnd(ks[9], (output_size, control_size)),
        "C_w": rnd(ks[10], (state_size, output_size)),
        "C_b": rnd(ks[11], (state_size,)),
    }


if __name__ == "__main__":
    B = 8
    state_size = 4
    control_size = 2
    time_step = 8
    hidden_size_lstm = 32
    hidden_size_mlp = 32
    output_size = 16

    key = jax.random.PRNGKey(0)
    kp_key, k1, k2, k3, k4 = jax.random.split(key, 5)

    params = make_params(kp_key, state_size, hidden_size_lstm, hidden_size_mlp,
                         output_size, control_size)
    kparams = prepare_kernel_params(params, state_size, control_size)

    state_current = jax.random.normal(k1, (B, state_size), jnp.float32)
    control_current = jax.random.normal(k2, (B, control_size), jnp.float32)
    state_sequence = jax.random.normal(k3, (B, time_step, state_size), jnp.float32)
    control_sequence = jax.random.normal(k4, (B, time_step, control_size), jnp.float32)

    fwd = jax.jit(functools.partial(lko_lstm_forward, kparams))
    phi_current, phi_pred, state_pred = fwd(
        state_current, control_current, state_sequence, control_sequence)
    jax.block_until_ready((phi_current, phi_pred, state_pred))

    # Correctness check vs a HIGHEST-precision pure-JAX reference of the PyTorch
    # forward. Tolerance allows for MXU f32 pass-count differences; real bugs
    # (e.g. wrong gate permutation) produce errors orders of magnitude larger.
    ref_phi, ref_phi_pred, ref_state_pred = lko_lstm_reference(
        params, state_current, control_current, state_sequence, control_sequence)
    np.testing.assert_allclose(np.asarray(phi_current), np.asarray(ref_phi),
                               rtol=5e-3, atol=5e-3)
    np.testing.assert_allclose(np.asarray(phi_pred), np.asarray(ref_phi_pred),
                               rtol=5e-3, atol=5e-3)
    np.testing.assert_allclose(np.asarray(state_pred), np.asarray(ref_state_pred),
                               rtol=5e-3, atol=5e-3)

    print("KERNEL_OK")
</pallas_src>

<mosaic_0001>
module attributes {stable_mosaic.version = 11 : i64} {
  func.func @_lko_lstm_kernel(%arg0: memref<8x4xf32, #tpu.memory_space<vmem>>, %arg1: memref<8x2xf32, #tpu.memory_space<vmem>>, %arg2: memref<8x8x4xf32, #tpu.memory_space<vmem>>, %arg3: memref<8x8x2xf32, #tpu.memory_space<vmem>>, %arg4: memref<4x128xf32, #tpu.memory_space<vmem>>, %arg5: memref<2x128xf32, #tpu.memory_space<vmem>>, %arg6: memref<32x128xf32, #tpu.memory_space<vmem>>, %arg7: memref<1x128xf32, #tpu.memory_space<vmem>>, %arg8: memref<4x32xf32, #tpu.memory_space<vmem>>, %arg9: memref<32x32xf32, #tpu.memory_space<vmem>>, %arg10: memref<1x32xf32, #tpu.memory_space<vmem>>, %arg11: memref<32x16xf32, #tpu.memory_space<vmem>>, %arg12: memref<1x16xf32, #tpu.memory_space<vmem>>, %arg13: memref<16x16xf32, #tpu.memory_space<vmem>>, %arg14: memref<2x16xf32, #tpu.memory_space<vmem>>, %arg15: memref<16x4xf32, #tpu.memory_space<vmem>>, %arg16: memref<1x4xf32, #tpu.memory_space<vmem>>, %arg17: memref<8x16xf32, #tpu.memory_space<vmem>>, %arg18: memref<8x16xf32, #tpu.memory_space<vmem>>, %arg19: memref<8x4xf32, #tpu.memory_space<vmem>>, %arg20: memref<8x8x128xf32, #tpu.memory_space<vmem>>) attributes {dimension_semantics = [], scalar_prefetch = 0 : i64, scratch_operands = 1 : i64, tpu.core_type = #tpu.core_type<tc>} {
    %c0 = arith.constant 0 : index
    %c0_0 = arith.constant 0 : index
    %c0_1 = arith.constant 0 : index
    %0 = vector.load %arg2[%c0, %c0_0, %c0_1] : memref<8x8x4xf32, #tpu.memory_space<vmem>>, vector<8x8x4xf32>
    %1 = vector.shape_cast %0 : vector<8x8x4xf32> to vector<64x4xf32>
    %c0_2 = arith.constant 0 : index
    %c0_3 = arith.constant 0 : index
    %c0_4 = arith.constant 0 : index
    %2 = vector.load %arg3[%c0_2, %c0_3, %c0_4] : memref<8x8x2xf32, #tpu.memory_space<vmem>>, vector<8x8x2xf32>
    %3 = vector.shape_cast %2 : vector<8x8x2xf32> to vector<64x2xf32>
    %c0_5 = arith.constant 0 : index
    %c0_6 = arith.constant 0 : index
    %4 = vector.load %arg4[%c0_5, %c0_6] : memref<4x128xf32, #tpu.memory_space<vmem>>, vector<4x128xf32>
    %cst = arith.constant dense<0.000000e+00> : vector<64x128xf32>
    %5 = tpu.matmul %1, %4, %cst {dimension_numbers = #tpu.dot_dimension_numbers<[1], [0], [0], [1], [0, 0, 1, 1], [], []>} : vector<64x4xf32>, vector<4x128xf32>, vector<64x128xf32> -> vector<64x128xf32>
    %c0_7 = arith.constant 0 : index
    %c0_8 = arith.constant 0 : index
    %6 = vector.load %arg5[%c0_7, %c0_8] : memref<2x128xf32, #tpu.memory_space<vmem>>, vector<2x128xf32>
    %cst_9 = arith.constant dense<0.000000e+00> : vector<64x128xf32>
    %7 = tpu.matmul %3, %6, %cst_9 {dimension_numbers = #tpu.dot_dimension_numbers<[1], [0], [0], [1], [0, 0, 1, 1], [], []>} : vector<64x2xf32>, vector<2x128xf32>, vector<64x128xf32> -> vector<64x128xf32>
    %8 = arith.addf %5, %7 : vector<64x128xf32>
    %c0_10 = arith.constant 0 : index
    %c0_11 = arith.constant 0 : index
    %9 = vector.load %arg7[%c0_10, %c0_11] : memref<1x128xf32, #tpu.memory_space<vmem>>, vector<1x128xf32>
    %10 = vector.broadcast %9 : vector<1x128xf32> to vector<64x128xf32>
    %11 = arith.addf %8, %10 : vector<64x128xf32>
    %12 = vector.shape_cast %11 : vector<64x128xf32> to vector<8x8x128xf32>
    %c0_12 = arith.constant 0 : index
    %c0_13 = arith.constant 0 : index
    %c0_14 = arith.constant 0 : index
    %13 = vector.load %arg20[%c0_12, %c0_13, %c0_14] : memref<8x8x128xf32, #tpu.memory_space<vmem>>, vector<8x8x128xf32>
    tpu.vector_store %arg20[%c0_12, %c0_13, %c0_14], %12 {strides = array<i32>} : memref<8x8x128xf32, #tpu.memory_space<vmem>>, vector<8x8x128xf32>,
    %c0_15 = arith.constant 0 : index
    %c0_16 = arith.constant 0 : index
    %14 = vector.load %arg6[%c0_15, %c0_16] : memref<32x128xf32, #tpu.memory_space<vmem>>, vector<32x128xf32>
    %cst_17 = arith.constant 0.000000e+00 : f32
    %15 = vector.broadcast %cst_17 : f32 to vector<8x32xf32>
    %cst_18 = arith.constant 0.000000e+00 : f32
    %16 = vector.broadcast %cst_18 : f32 to vector<8x32xf32>
    %c0_19 = arith.constant 0 : index
    %c0_20 = arith.constant 0 : index
    %c0_21 = arith.constant 0 : index
    %17 = vector.load %arg20[%c0_19, %c0_20, %c0_21] : memref<8x8x128xf32, #tpu.memory_space<vmem>>, vector<8x1x128xf32>
    %18 = vector.shape_cast %17 : vector<8x1x128xf32> to vector<8x128xf32>
    %cst_22 = arith.constant dense<0.000000e+00> : vector<8x128xf32>
    %19 = tpu.matmul %15, %14, %cst_22 {dimension_numbers = #tpu.dot_dimension_numbers<[1], [0], [0], [1], [0, 0, 1, 1], [], []>} : vector<8x32xf32>, vector<32x128xf32>, vector<8x128xf32> -> vector<8x128xf32>
    %20 = arith.addf %18, %19 : vector<8x128xf32>
    %21 = vector.extract_strided_slice %20 {offsets = [0, 0], sizes = [8, 96], strides = [1, 1]} : vector<8x128xf32> to vector<8x96xf32>
    %22 = arith.negf %21 : vector<8x96xf32>
    %23 = math.exp %22 : vector<8x96xf32>
    %cst_23 = arith.constant 1.000000e+00 : f32
    %24 = vector.broadcast %cst_23 : f32 to vector<8x96xf32>
    %25 = arith.addf %24, %23 : vector<8x96xf32>
    %26 = arith.divf %24, %25 : vector<8x96xf32>
    %27 = vector.extract_strided_slice %26 {offsets = [0, 0], sizes = [8, 32], strides = [1, 1]} : vector<8x96xf32> to vector<8x32xf32>
    %28 = vector.extract_strided_slice %26 {offsets = [0, 32], sizes = [8, 32], strides = [1, 1]} : vector<8x96xf32> to vector<8x32xf32>
    %29 = vector.extract_strided_slice %26 {offsets = [0, 64], sizes = [8, 32], strides = [1, 1]} : vector<8x96xf32> to vector<8x32xf32>
    %30 = vector.extract_strided_slice %20 {offsets = [0, 96], sizes = [8, 32], strides = [1, 1]} : vector<8x128xf32> to vector<8x32xf32>
    %31 = math.tanh %30 : vector<8x32xf32>
    %32 = arith.mulf %28, %16 : vector<8x32xf32>
    %33 = arith.mulf %27, %31 : vector<8x32xf32>
    %34 = arith.addf %32, %33 : vector<8x32xf32>
    %35 = math.tanh %34 : vector<8x32xf32>
    %36 = arith.mulf %29, %35 : vector<8x32xf32>
    %c0_24 = arith.constant 0 : index
    %c1 = arith.constant 1 : index
    %c0_25 = arith.constant 0 : index
    %37 = vector.load %arg20[%c0_24, %c1, %c0_25] : memref<8x8x128xf32, #tpu.memory_space<vmem>>, vector<8x1x128xf32>
    %38 = vector.shape_cast %37 : vector<8x1x128xf32> to vector<8x128xf32>
    %cst_26 = arith.constant dense<0.000000e+00> : vector<8x128xf32>
    %39 = tpu.matmul %36, %14, %cst_26 {dimension_numbers = #tpu.dot_dimension_numbers<[1], [0], [0], [1], [0, 0, 1, 1], [], []>} : vector<8x32xf32>, vector<32x128xf32>, vector<8x128xf32> -> vector<8x128xf32>
    %40 = arith.addf %38, %39 : vector<8x128xf32>
    %41 = vector.extract_strided_slice %40 {offsets = [0, 0], sizes = [8, 96], strides = [1, 1]} : vector<8x128xf32> to vector<8x96xf32>
    %42 = arith.negf %41 : vector<8x96xf32>
    %43 = math.exp %42 : vector<8x96xf32>
    %cst_27 = arith.constant 1.000000e+00 : f32
    %44 = vector.broadcast %cst_27 : f32 to vector<8x96xf32>
    %45 = arith.addf %44, %43 : vector<8x96xf32>
    %46 = arith.divf %44, %45 : vector<8x96xf32>
    %47 = vector.extract_strided_slice %46 {offsets = [0, 0], sizes = [8, 32], strides = [1, 1]} : vector<8x96xf32> to vector<8x32xf32>
    %48 = vector.extract_strided_slice %46 {offsets = [0, 32], sizes = [8, 32], strides = [1, 1]} : vector<8x96xf32> to vector<8x32xf32>
    %49 = vector.extract_strided_slice %46 {offsets = [0, 64], sizes = [8, 32], strides = [1, 1]} : vector<8x96xf32> to vector<8x32xf32>
    %50 = vector.extract_strided_slice %40 {offsets = [0, 96], sizes = [8, 32], strides = [1, 1]} : vector<8x128xf32> to vector<8x32xf32>
    %51 = math.tanh %50 : vector<8x32xf32>
    %52 = arith.mulf %48, %34 : vector<8x32xf32>
    %53 = arith.mulf %47, %51 : vector<8x32xf32>
    %54 = arith.addf %52, %53 : vector<8x32xf32>
    %55 = math.tanh %54 : vector<8x32xf32>
    %56 = arith.mulf %49, %55 : vector<8x32xf32>
    %c0_28 = arith.constant 0 : index
    %c2 = arith.constant 2 : index
    %c0_29 = arith.constant 0 : index
    %57 = vector.load %arg20[%c0_28, %c2, %c0_29] : memref<8x8x128xf32, #tpu.memory_space<vmem>>, vector<8x1x128xf32>
    %58 = vector.shape_cast %57 : vector<8x1x128xf32> to vector<8x128xf32>
    %cst_30 = arith.constant dense<0.000000e+00> : vector<8x128xf32>
    %59 = tpu.matmul %56, %14, %cst_30 {dimension_numbers = #tpu.dot_dimension_numbers<[1], [0], [0], [1], [0, 0, 1, 1], [], []>} : vector<8x32xf32>, vector<32x128xf32>, vector<8x128xf32> -> vector<8x128xf32>
    %60 = arith.addf %58, %59 : vector<8x128xf32>
    %61 = vector.extract_strided_slice %60 {offsets = [0, 0], sizes = [8, 96], strides = [1, 1]} : vector<8x128xf32> to vector<8x96xf32>
    %62 = arith.negf %61 : vector<8x96xf32>
    %63 = math.exp %62 : vector<8x96xf32>
    %cst_31 = arith.constant 1.000000e+00 : f32
    %64 = vector.broadcast %cst_31 : f32 to vector<8x96xf32>
    %65 = arith.addf %64, %63 : vector<8x96xf32>
    %66 = arith.divf %64, %65 : vector<8x96xf32>
    %67 = vector.extract_strided_slice %66 {offsets = [0, 0], sizes = [8, 32], strides = [1, 1]} : vector<8x96xf32> to vector<8x32xf32>
    %68 = vector.extract_strided_slice %66 {offsets = [0, 32], sizes = [8, 32], strides = [1, 1]} : vector<8x96xf32> to vector<8x32xf32>
    %69 = vector.extract_strided_slice %66 {offsets = [0, 64], sizes = [8, 32], strides = [1, 1]} : vector<8x96xf32> to vector<8x32xf32>
    %70 = vector.extract_strided_slice %60 {offsets = [0, 96], sizes = [8, 32], strides = [1, 1]} : vector<8x128xf32> to vector<8x32xf32>
    %71 = math.tanh %70 : vector<8x32xf32>
    %72 = arith.mulf %68, %54 : vector<8x32xf32>
    %73 = arith.mulf %67, %71 : vector<8x32xf32>
    %74 = arith.addf %72, %73 : vector<8x32xf32>
    %75 = math.tanh %74 : vector<8x32xf32>
    %76 = arith.mulf %69, %75 : vector<8x32xf32>
    %c0_32 = arith.constant 0 : index
    %c3 = arith.constant 3 : index
    %c0_33 = arith.constant 0 : index
    %77 = vector.load %arg20[%c0_32, %c3, %c0_33] : memref<8x8x128xf32, #tpu.memory_space<vmem>>, vector<8x1x128xf32>
    %78 = vector.shape_cast %77 : vector<8x1x128xf32> to vector<8x128xf32>
    %cst_34 = arith.constant dense<0.000000e+00> : vector<8x128xf32>
    %79 = tpu.matmul %76, %14, %cst_34 {dimension_numbers = #tpu.dot_dimension_numbers<[1], [0], [0], [1], [0, 0, 1, 1], [], []>} : vector<8x32xf32>, vector<32x128xf32>, vector<8x128xf32> -> vector<8x128xf32>
    %80 = arith.addf %78, %79 : vector<8x128xf32>
    %81 = vector.extract_strided_slice %80 {offsets = [0, 0], sizes = [8, 96], strides = [1, 1]} : vector<8x128xf32> to vector<8x96xf32>
    %82 = arith.negf %81 : vector<8x96xf32>
    %83 = math.exp %82 : vector<8x96xf32>
    %cst_35 = arith.constant 1.000000e+00 : f32
    %84 = vector.broadcast %cst_35 : f32 to vector<8x96xf32>
    %85 = arith.addf %84, %83 : vector<8x96xf32>
    %86 = arith.divf %84, %85 : vector<8x96xf32>
    %87 = vector.extract_strided_slice %86 {offsets = [0, 0], sizes = [8, 32], strides = [1, 1]} : vector<8x96xf32> to vector<8x32xf32>
    %88 = vector.extract_strided_slice %86 {offsets = [0, 32], sizes = [8, 32], strides = [1, 1]} : vector<8x96xf32> to vector<8x32xf32>
    %89 = vector.extract_strided_slice %86 {offsets = [0, 64], sizes = [8, 32], strides = [1, 1]} : vector<8x96xf32> to vector<8x32xf32>
    %90 = vector.extract_strided_slice %80 {offsets = [0, 96], sizes = [8, 32], strides = [1, 1]} : vector<8x128xf32> to vector<8x32xf32>
    %91 = math.tanh %90 : vector<8x32xf32>
    %92 = arith.mulf %88, %74 : vector<8x32xf32>
    %93 = arith.mulf %87, %91 : vector<8x32xf32>
    %94 = arith.addf %92, %93 : vector<8x32xf32>
    %95 = math.tanh %94 : vector<8x32xf32>
    %96 = arith.mulf %89, %95 : vector<8x32xf32>
    %c0_36 = arith.constant 0 : index
    %c4 = arith.constant 4 : index
    %c0_37 = arith.constant 0 : index
    %97 = vector.load %arg20[%c0_36, %c4, %c0_37] : memref<8x8x128xf32, #tpu.memory_space<vmem>>, vector<8x1x128xf32>
    %98 = vector.shape_cast %97 : vector<8x1x128xf32> to vector<8x128xf32>
    %cst_38 = arith.constant dense<0.000000e+00> : vector<8x128xf32>
    %99 = tpu.matmul %96, %14, %cst_38 {dimension_numbers = #tpu.dot_dimension_numbers<[1], [0], [0], [1], [0, 0, 1, 1], [], []>} : vector<8x32xf32>, vector<32x128xf32>, vector<8x128xf32> -> vector<8x128xf32>
    %100 = arith.addf %98, %99 : vector<8x128xf32>
    %101 = vector.extract_strided_slice %100 {offsets = [0, 0], sizes = [8, 96], strides = [1, 1]} : vector<8x128xf32> to vector<8x96xf32>
    %102 = arith.negf %101 : vector<8x96xf32>
    %103 = math.exp %102 : vector<8x96xf32>
    %cst_39 = arith.constant 1.000000e+00 : f32
    %104 = vector.broadcast %cst_39 : f32 to vector<8x96xf32>
    %105 = arith.addf %104, %103 : vector<8x96xf32>
    %106 = arith.divf %104, %105 : vector<8x96xf32>
    %107 = vector.extract_strided_slice %106 {offsets = [0, 0], sizes = [8, 32], strides = [1, 1]} : vector<8x96xf32> to vector<8x32xf32>
    %108 = vector.extract_strided_slice %106 {offsets = [0, 32], sizes = [8, 32], strides = [1, 1]} : vector<8x96xf32> to vector<8x32xf32>
    %109 = vector.extract_strided_slice %106 {offsets = [0, 64], sizes = [8, 32], strides = [1, 1]} : vector<8x96xf32> to vector<8x32xf32>
    %110 = vector.extract_strided_slice %100 {offsets = [0, 96], sizes = [8, 32], strides = [1, 1]} : vector<8x128xf32> to vector<8x32xf32>
    %111 = math.tanh %110 : vector<8x32xf32>
    %112 = arith.mulf %108, %94 : vector<8x32xf32>
    %113 = arith.mulf %107, %111 : vector<8x32xf32>
    %114 = arith.addf %112, %113 : vector<8x32xf32>
    %115 = math.tanh %114 : vector<8x32xf32>
    %116 = arith.mulf %109, %115 : vector<8x32xf32>
    %c0_40 = arith.constant 0 : index
    %c5 = arith.constant 5 : index
    %c0_41 = arith.constant 0 : index
    %117 = vector.load %arg20[%c0_40, %c5, %c0_41] : memref<8x8x128xf32, #tpu.memory_space<vmem>>, vector<8x1x128xf32>
    %118 = vector.shape_cast %117 : vector<8x1x128xf32> to vector<8x128xf32>
    %cst_42 = arith.constant dense<0.000000e+00> : vector<8x128xf32>
    %119 = tpu.matmul %116, %14, %cst_42 {dimension_numbers = #tpu.dot_dimension_numbers<[1], [0], [0], [1], [0, 0, 1, 1], [], []>} : vector<8x32xf32>, vector<32x128xf32>, vector<8x128xf32> -> vector<8x128xf32>
    %120 = arith.addf %118, %119 : vector<8x128xf32>
    %121 = vector.extract_strided_slice %120 {offsets = [0, 0], sizes = [8, 96], strides = [1, 1]} : vector<8x128xf32> to vector<8x96xf32>
    %122 = arith.negf %121 : vector<8x96xf32>
    %123 = math.exp %122 : vector<8x96xf32>
    %cst_43 = arith.constant 1.000000e+00 : f32
    %124 = vector.broadcast %cst_43 : f32 to vector<8x96xf32>
    %125 = arith.addf %124, %123 : vector<8x96xf32>
    %126 = arith.divf %124, %125 : vector<8x96xf32>
    %127 = vector.extract_strided_slice %126 {offsets = [0, 0], sizes = [8, 32], strides = [1, 1]} : vector<8x96xf32> to vector<8x32xf32>
    %128 = vector.extract_strided_slice %126 {offsets = [0, 32], sizes = [8, 32], strides = [1, 1]} : vector<8x96xf32> to vector<8x32xf32>
    %129 = vector.extract_strided_slice %126 {offsets = [0, 64], sizes = [8, 32], strides = [1, 1]} : vector<8x96xf32> to vector<8x32xf32>
    %130 = vector.extract_strided_slice %120 {offsets = [0, 96], sizes = [8, 32], strides = [1, 1]} : vector<8x128xf32> to vector<8x32xf32>
    %131 = math.tanh %130 : vector<8x32xf32>
    %132 = arith.mulf %128, %114 : vector<8x32xf32>
    %133 = arith.mulf %127, %131 : vector<8x32xf32>
    %134 = arith.addf %132, %133 : vector<8x32xf32>
    %135 = math.tanh %134 : vector<8x32xf32>
    %136 = arith.mulf %129, %135 : vector<8x32xf32>
    %c0_44 = arith.constant 0 : index
    %c6 = arith.constant 6 : index
    %c0_45 = arith.constant 0 : index
    %137 = vector.load %arg20[%c0_44, %c6, %c0_45] : memref<8x8x128xf32, #tpu.memory_space<vmem>>, vector<8x1x128xf32>
    %138 = vector.shape_cast %137 : vector<8x1x128xf32> to vector<8x128xf32>
    %cst_46 = arith.constant dense<0.000000e+00> : vector<8x128xf32>
    %139 = tpu.matmul %136, %14, %cst_46 {dimension_numbers = #tpu.dot_dimension_numbers<[1], [0], [0], [1], [0, 0, 1, 1], [], []>} : vector<8x32xf32>, vector<32x128xf32>, vector<8x128xf32> -> vector<8x128xf32>
    %140 = arith.addf %138, %139 : vector<8x128xf32>
    %141 = vector.extract_strided_slice %140 {offsets = [0, 0], sizes = [8, 96], strides = [1, 1]} : vector<8x128xf32> to vector<8x96xf32>
    %142 = arith.negf %141 : vector<8x96xf32>
    %143 = math.exp %142 : vector<8x96xf32>
    %cst_47 = arith.constant 1.000000e+00 : f32
    %144 = vector.broadcast %cst_47 : f32 to vector<8x96xf32>
    %145 = arith.addf %144, %143 : vector<8x96xf32>
    %146 = arith.divf %144, %145 : vector<8x96xf32>
    %147 = vector.extract_strided_slice %146 {offsets = [0, 0], sizes = [8, 32], strides = [1, 1]} : vector<8x96xf32> to vector<8x32xf32>
    %148 = vector.extract_strided_slice %146 {offsets = [0, 32], sizes = [8, 32], strides = [1, 1]} : vector<8x96xf32> to vector<8x32xf32>
    %149 = vector.extract_strided_slice %146 {offsets = [0, 64], sizes = [8, 32], strides = [1, 1]} : vector<8x96xf32> to vector<8x32xf32>
    %150 = vector.extract_strided_slice %140 {offsets = [0, 96], sizes = [8, 32], strides = [1, 1]} : vector<8x128xf32> to vector<8x32xf32>
    %151 = math.tanh %150 : vector<8x32xf32>
    %152 = arith.mulf %148, %134 : vector<8x32xf32>
    %153 = arith.mulf %147, %151 : vector<8x32xf32>
    %154 = arith.addf %152, %153 : vector<8x32xf32>
    %155 = math.tanh %154 : vector<8x32xf32>
    %156 = arith.mulf %149, %155 : vector<8x32xf32>
    %c0_48 = arith.constant 0 : index
    %c7 = arith.constant 7 : index
    %c0_49 = arith.constant 0 : index
    %157 = vector.load %arg20[%c0_48, %c7, %c0_49] : memref<8x8x128xf32, #tpu.memory_space<vmem>>, vector<8x1x128xf32>
    %158 = vector.shape_cast %157 : vector<8x1x128xf32> to vector<8x128xf32>
    %cst_50 = arith.constant dense<0.000000e+00> : vector<8x128xf32>
    %159 = tpu.matmul %156, %14, %cst_50 {dimension_numbers = #tpu.dot_dimension_numbers<[1], [0], [0], [1], [0, 0, 1, 1], [], []>} : vector<8x32xf32>, vector<32x128xf32>, vector<8x128xf32> -> vector<8x128xf32>
    %160 = arith.addf %158, %159 : vector<8x128xf32>
    %161 = vector.extract_strided_slice %160 {offsets = [0, 0], sizes = [8, 96], strides = [1, 1]} : vector<8x128xf32> to vector<8x96xf32>
    %162 = arith.negf %161 : vector<8x96xf32>
    %163 = math.exp %162 : vector<8x96xf32>
    %cst_51 = arith.constant 1.000000e+00 : f32
    %164 = vector.broadcast %cst_51 : f32 to vector<8x96xf32>
    %165 = arith.addf %164, %163 : vector<8x96xf32>
    %166 = arith.divf %164, %165 : vector<8x96xf32>
    %167 = vector.extract_strided_slice %166 {offsets = [0, 0], sizes = [8, 32], strides = [1, 1]} : vector<8x96xf32> to vector<8x32xf32>
    %168 = vector.extract_strided_slice %166 {offsets = [0, 32], sizes = [8, 32], strides = [1, 1]} : vector<8x96xf32> to vector<8x32xf32>
    %169 = vector.extract_strided_slice %166 {offsets = [0, 64], sizes = [8, 32], strides = [1, 1]} : vector<8x96xf32> to vector<8x32xf32>
    %170 = vector.extract_strided_slice %160 {offsets = [0, 96], sizes = [8, 32], strides = [1, 1]} : vector<8x128xf32> to vector<8x32xf32>
    %171 = math.tanh %170 : vector<8x32xf32>
    %172 = arith.mulf %168, %154 : vector<8x32xf32>
    %173 = arith.mulf %167, %171 : vector<8x32xf32>
    %174 = arith.addf %172, %173 : vector<8x32xf32>
    %175 = math.tanh %174 : vector<8x32xf32>
    %176 = arith.mulf %169, %175 : vector<8x32xf32>
    %c0_52 = arith.constant 0 : index
    %c0_53 = arith.constant 0 : index
    %177 = vector.load %arg0[%c0_52, %c0_53] : memref<8x4xf32, #tpu.memory_space<vmem>>, vector<8x4xf32>
    %c0_54 = arith.constant 0 : index
    %c0_55 = arith.constant 0 : index
    %178 = vector.load %arg8[%c0_54, %c0_55] : memref<4x32xf32, #tpu.memory_space<vmem>>, vector<4x32xf32>
    %cst_56 = arith.constant dense<0.000000e+00> : vector<8x32xf32>
    %179 = tpu.matmul %177, %178, %cst_56 {dimension_numbers = #tpu.dot_dimension_numbers<[1], [0], [0], [1], [0, 0, 1, 1], [], []>} : vector<8x4xf32>, vector<4x32xf32>, vector<8x32xf32> -> vector<8x32xf32>
    %c0_57 = arith.constant 0 : index
    %c0_58 = arith.constant 0 : index
    %180 = vector.load %arg9[%c0_57, %c0_58] : memref<32x32xf32, #tpu.memory_space<vmem>>, vector<32x32xf32>
    %cst_59 = arith.constant dense<0.000000e+00> : vector<8x32xf32>
    %181 = tpu.matmul %176, %180, %cst_59 {dimension_numbers = #tpu.dot_dimension_numbers<[1], [0], [0], [1], [0, 0, 1, 1], [], []>} : vector<8x32xf32>, vector<32x32xf32>, vector<8x32xf32> -> vector<8x32xf32>
    %182 = arith.addf %179, %181 : vector<8x32xf32>
    %c0_60 = arith.constant 0 : index
    %c0_61 = arith.constant 0 : index
    %183 = vector.load %arg10[%c0_60, %c0_61] : memref<1x32xf32, #tpu.memory_space<vmem>>, vector<1x32xf32>
    %184 = vector.broadcast %183 : vector<1x32xf32> to vector<8x32xf32>
    %185 = arith.addf %182, %184 : vector<8x32xf32>
    %cst_62 = arith.constant 0.000000e+00 : f32
    %186 = vector.broadcast %cst_62 : f32 to vector<8x32xf32>
    %187 = arith.cmpf ogt, %185, %186 : vector<8x32xf32>
    %cst_63 = arith.constant 0.000000e+00 : f32
    %188 = vector.broadcast %cst_63 : f32 to vector<8x32xf32>
    %189 = arith.minimumf %185, %188 : vector<8x32xf32>
    %190 = math.exp %189 : vector<8x32xf32>
    %cst_64 = arith.constant 1.000000e+00 : f32
    %191 = vector.broadcast %cst_64 : f32 to vector<8x32xf32>
    %192 = arith.subf %190, %191 : vector<8x32xf32>
    %193 = arith.select %187, %185, %192 : vector<8x32xi1>, vector<8x32xf32>
    %c0_65 = arith.constant 0 : index
    %c0_66 = arith.constant 0 : index
    %194 = vector.load %arg11[%c0_65, %c0_66] : memref<32x16xf32, #tpu.memory_space<vmem>>, vector<32x16xf32>
    %cst_67 = arith.constant dense<0.000000e+00> : vector<8x16xf32>
    %195 = tpu.matmul %193, %194, %cst_67 {dimension_numbers = #tpu.dot_dimension_numbers<[1], [0], [0], [1], [0, 0, 1, 1], [], []>} : vector<8x32xf32>, vector<32x16xf32>, vector<8x16xf32> -> vector<8x16xf32>
    %c0_68 = arith.constant 0 : index
    %c0_69 = arith.constant 0 : index
    %196 = vector.load %arg12[%c0_68, %c0_69] : memref<1x16xf32, #tpu.memory_space<vmem>>, vector<1x16xf32>
    %197 = vector.broadcast %196 : vector<1x16xf32> to vector<8x16xf32>
    %198 = arith.addf %195, %197 : vector<8x16xf32>
    %cst_70 = arith.constant 0.000000e+00 : f32
    %199 = vector.broadcast %cst_70 : f32 to vector<8x16xf32>
    %200 = arith.cmpf ogt, %198, %199 : vector<8x16xf32>
    %cst_71 = arith.constant 0.000000e+00 : f32
    %201 = vector.broadcast %cst_71 : f32 to vector<8x16xf32>
    %202 = arith.minimumf %198, %201 : vector<8x16xf32>
    %203 = math.exp %202 : vector<8x16xf32>
    %cst_72 = arith.constant 1.000000e+00 : f32
    %204 = vector.broadcast %cst_72 : f32 to vector<8x16xf32>
    %205 = arith.subf %203, %204 : vector<8x16xf32>
    %206 = arith.select %200, %198, %205 : vector<8x16xi1>, vector<8x16xf32>
    %c0_73 = arith.constant 0 : index
    %c0_74 = arith.constant 0 : index
    %207 = vector.load %arg13[%c0_73, %c0_74] : memref<16x16xf32, #tpu.memory_space<vmem>>, vector<16x16xf32>
    %cst_75 = arith.constant dense<0.000000e+00> : vector<8x16xf32>
    %208 = tpu.matmul %206, %207, %cst_75 {dimension_numbers = #tpu.dot_dimension_numbers<[1], [0], [0], [1], [0, 0, 1, 1], [], []>} : vector<8x16xf32>, vector<16x16xf32>, vector<8x16xf32> -> vector<8x16xf32>
    %c0_76 = arith.constant 0 : index
    %c0_77 = arith.constant 0 : index
    %209 = vector.load %arg1[%c0_76, %c0_77] : memref<8x2xf32, #tpu.memory_space<vmem>>, vector<8x2xf32>
    %c0_78 = arith.constant 0 : index
    %c0_79 = arith.constant 0 : index
    %210 = vector.load %arg14[%c0_78, %c0_79] : memref<2x16xf32, #tpu.memory_space<vmem>>, vector<2x16xf32>
    %cst_80 = arith.constant dense<0.000000e+00> : vector<8x16xf32>
    %211 = tpu.matmul %209, %210, %cst_80 {dimension_numbers = #tpu.dot_dimension_numbers<[1], [0], [0], [1], [0, 0, 1, 1], [], []>} : vector<8x2xf32>, vector<2x16xf32>, vector<8x16xf32> -> vector<8x16xf32>
    %212 = arith.addf %208, %211 : vector<8x16xf32>
    %c0_81 = arith.constant 0 : index
    %c0_82 = arith.constant 0 : index
    %213 = vector.load %arg15[%c0_81, %c0_82] : memref<16x4xf32, #tpu.memory_space<vmem>>, vector<16x4xf32>
    %cst_83 = arith.constant dense<0.000000e+00> : vector<8x4xf32>
    %214 = tpu.matmul %212, %213, %cst_83 {dimension_numbers = #tpu.dot_dimension_numbers<[1], [0], [0], [1], [0, 0, 1, 1], [], []>} : vector<8x16xf32>, vector<16x4xf32>, vector<8x4xf32> -> vector<8x4xf32>
    %c0_84 = arith.constant 0 : index
    %c0_85 = arith.constant 0 : index
    %215 = vector.load %arg16[%c0_84, %c0_85] : memref<1x4xf32, #tpu.memory_space<vmem>>, vector<1x4xf32>
    %216 = vector.broadcast %215 : vector<1x4xf32> to vector<8x4xf32>
    %217 = arith.addf %214, %216 : vector<8x4xf32>
    %c0_86 = arith.constant 0 : index
    %c0_87 = arith.constant 0 : index
    %218 = vector.load %arg17[%c0_86, %c0_87] : memref<8x16xf32, #tpu.memory_space<vmem>>, vector<8x16xf32>
    tpu.vector_store %arg17[%c0_86, %c0_87], %206 {strides = array<i32>} : memref<8x16xf32, #tpu.memory_space<vmem>>, vector<8x16xf32>,
    %c0_88 = arith.constant 0 : index
    %c0_89 = arith.constant 0 : index
    %219 = vector.load %arg18[%c0_88, %c0_89] : memref<8x16xf32, #tpu.memory_space<vmem>>, vector<8x16xf32>
    tpu.vector_store %arg18[%c0_88, %c0_89], %212 {strides = array<i32>} : memref<8x16xf32, #tpu.memory_space<vmem>>, vector<8x16xf32>,
    %c0_90 = arith.constant 0 : index
    %c0_91 = arith.constant 0 : index
    %220 = vector.load %arg19[%c0_90, %c0_91] : memref<8x4xf32, #tpu.memory_space<vmem>>, vector<8x4xf32>
    tpu.vector_store %arg19[%c0_90, %c0_91], %217 {strides = array<i32>} : memref<8x4xf32, #tpu.memory_space<vmem>>, vector<8x4xf32>,
    return
  }
}

</mosaic_0001>

<llo_original>
// kernel: lko_lstm_forward.1
$region0: #{lko_lstm_forward.1}
  #allocation0 [shape = 'u32[]', space=smem, size = 0x4, offset = 0x4, fixed_abs, tag = 'smem constant byte address 0x4 - core index']
  #allocation1 [shape = 'u32[144,128]{1,0:T(1,128)}', space=vmem, size = 0x12000, scoped, tag = 'internal scratch']
  #allocation2 [shape = 'f32[8,8,128]{2,1,0:T(8,128)}', space=vmem, size = 0x8000, scoped, tag = 'scratch operand']
  %s0 = inlined_call_operand.vmem [shape: f32[8,4], index: 0, kind: input, shape index: {}]
  %s1 = inlined_call_operand.vmem [shape: f32[8,2], index: 1, kind: input, shape index: {}]
  %s2 = inlined_call_operand.vmem [shape: f32[8,8,4], index: 2, kind: input, shape index: {}]
  %s3 = inlined_call_operand.vmem [shape: f32[8,8,2], index: 3, kind: input, shape index: {}]
  %s4 = inlined_call_operand.vmem [shape: f32[4,128], index: 4, kind: input, shape index: {}]
  %s5 = inlined_call_operand.vmem [shape: f32[2,128], index: 5, kind: input, shape index: {}]
  %s6 = inlined_call_operand.vmem [shape: f32[32,128], index: 6, kind: input, shape index: {}]
  %s7 = inlined_call_operand.vmem [shape: f32[1,128], index: 7, kind: input, shape index: {}]
  %s8 = inlined_call_operand.vmem [shape: f32[4,32], index: 8, kind: input, shape index: {}]
  %s9 = inlined_call_operand.vmem [shape: f32[32,32], index: 9, kind: input, shape index: {}]
  %s10 = inlined_call_operand.vmem [shape: f32[1,32], index: 10, kind: input, shape index: {}]
  %s11 = inlined_call_operand.vmem [shape: f32[32,16], index: 11, kind: input, shape index: {}]
  %s12 = inlined_call_operand.vmem [shape: f32[1,16], index: 12, kind: input, shape index: {}]
  %s13 = inlined_call_operand.vmem [shape: f32[16,16], index: 13, kind: input, shape index: {}]
  %s14 = inlined_call_operand.vmem [shape: f32[2,16], index: 14, kind: input, shape index: {}]
  %s15 = inlined_call_operand.vmem [shape: f32[16,4], index: 15, kind: input, shape index: {}]
  %s16 = inlined_call_operand.vmem [shape: f32[1,4], index: 16, kind: input, shape index: {}]
  %s17 = inlined_call_operand.hbm [shape: f32[8,16], index: 17, kind: output, shape index: {0}]
  %s18 = inlined_call_operand.hbm [shape: f32[8,16], index: 18, kind: output, shape index: {1}]
  %s19 = inlined_call_operand.vmem [shape: f32[8,4], index: 19, kind: output, shape index: {2}]
  %20 = xla_tuple %s17, %s18, %s19
  %s21 = sld [smem:[#allocation0]]
  $region94: #{lko_lstm_forward.1} parent=0
    _
  %s23 = ssub.s32 1, %s21
  %s24 = scalar_select 0, %s23, %s21
  $region1: #{lko_lstm_forward.1} parent=0
    #allocation3 [shape = 'u8[4096]{0}', space=vmem, size = 0x1000, scoped, tag = 'output window, operand 0, single buffered']
    #allocation4 [shape = 's32[1]{0}', space=sflag, size = 0x4, scoped, tag = 'scoped memory for lko_lstm_forward.1']
    #allocation5 [shape = 'u8[4096]{0}', space=vmem, size = 0x1000, scoped, tag = 'output window, operand 1, single buffered']
    #allocation6 [shape = 's32[1]{0}', space=sflag, size = 0x4, scoped, tag = 'scoped memory for lko_lstm_forward.1']
    %25 = vsyncpa [#allocation4], 0
    %26 = vsyncpa [#allocation6], 0
    // Predicated region
    $region2: #{lko_lstm_forward.1} parent=1 // pred_check
      _
    $region3: #{lko_lstm_forward.1} parent=1 // pred_check_branch
      %28 = sbr.rel (0) target = $region5
    $region4: #{lko_lstm_forward.1} parent=1 // pred_region
      _
    $region5: #{lko_lstm_forward.1} parent=1 // pred_fallthru
      _
    // Predicated region
    $region6: #{lko_lstm_forward.1} parent=1 // pred_check
      _
    $region7: #{lko_lstm_forward.1} parent=1 // pred_check_branch
      %30 = sbr.rel (0) target = $region9
    $region8: #{lko_lstm_forward.1} parent=1 // pred_region
      _
    $region9: #{lko_lstm_forward.1} parent=1 // pred_fallthru
      _
    // Predicated region
    $region10: #{lko_lstm_forward.1} parent=1 // pred_check
      _
    $region11: #{lko_lstm_forward.1} parent=1 // pred_check_branch
      %32 = sbr.rel (0) target = $region13
    $region12: #{lko_lstm_forward.1} parent=1 // pred_region
      _
    $region13: #{lko_lstm_forward.1} parent=1 // pred_fallthru
      _
    // Predicated region
    $region14: #{lko_lstm_forward.1} parent=1 // pred_check
      _
    $region15: #{lko_lstm_forward.1} parent=1 // pred_check_branch
      %34 = sbr.rel (0) target = $region17
    $region16: #{lko_lstm_forward.1} parent=1 // pred_region
      _
    $region17: #{lko_lstm_forward.1} parent=1 // pred_fallthru
      _
    // Predicated region
    $region18: #{lko_lstm_forward.1} parent=1 // pred_check
      _
    $region19: #{lko_lstm_forward.1} parent=1 // pred_check_branch
      %36 = sbr.rel (0) target = $region21
    $region20: #{lko_lstm_forward.1} parent=1 // pred_region
      _
    $region21: #{lko_lstm_forward.1} parent=1 // pred_fallthru
      _
    // Predicated region
    $region22: #{lko_lstm_forward.1} parent=1 // pred_check
      _
    $region23: #{lko_lstm_forward.1} parent=1 // pred_check_branch
      %38 = sbr.rel (0) target = $region25
    $region24: #{lko_lstm_forward.1} parent=1 // pred_region
      _
    $region25: #{lko_lstm_forward.1} parent=1 // pred_fallthru
      _
    // Predicated region
    $region26: #{lko_lstm_forward.1} parent=1 // pred_check
      _
    $region27: #{lko_lstm_forward.1} parent=1 // pred_check_branch
      %40 = sbr.rel (0) target = $region29
    $region28: #{lko_lstm_forward.1} parent=1 // pred_region
      _
    $region29: #{lko_lstm_forward.1} parent=1 // pred_fallthru
      _
    // Predicated region
    $region30: #{lko_lstm_forward.1} parent=1 // pred_check
      _
    $region31: #{lko_lstm_forward.1} parent=1 // pred_check_branch
      %42 = sbr.rel (0) target = $region33
    $region32: #{lko_lstm_forward.1} parent=1 // pred_region
      _
    $region33: #{lko_lstm_forward.1} parent=1 // pred_fallthru
      _
    // Predicated region
    $region34: #{lko_lstm_forward.1} parent=1 // pred_check
      _
    $region35: #{lko_lstm_forward.1} parent=1 // pred_check_branch
      %44 = sbr.rel (0) target = $region37
    $region36: #{lko_lstm_forward.1} parent=1 // pred_region
      _
    $region37: #{lko_lstm_forward.1} parent=1 // pred_fallthru
      _
    // Predicated region
    $region38: #{lko_lstm_forward.1} parent=1 // pred_check
      _
    $region39: #{lko_lstm_forward.1} parent=1 // pred_check_branch
      %46 = sbr.rel (0) target = $region41
    $region40: #{lko_lstm_forward.1} parent=1 // pred_region
      _
    $region41: #{lko_lstm_forward.1} parent=1 // pred_fallthru
      _
    // Predicated region
    $region42: #{lko_lstm_forward.1} parent=1 // pred_check
      _
    $region43: #{lko_lstm_forward.1} parent=1 // pred_check_branch
      %48 = sbr.rel (0) target = $region45
    $region44: #{lko_lstm_forward.1} parent=1 // pred_region
      _
    $region45: #{lko_lstm_forward.1} parent=1 // pred_fallthru
      _
    // Predicated region
    $region46: #{lko_lstm_forward.1} parent=1 // pred_check
      _
    $region47: #{lko_lstm_forward.1} parent=1 // pred_check_branch
      %50 = sbr.rel (0) target = $region49
    $region48: #{lko_lstm_forward.1} parent=1 // pred_region
      _
    $region49: #{lko_lstm_forward.1} parent=1 // pred_fallthru
      _
    // Predicated region
    $region50: #{lko_lstm_forward.1} parent=1 // pred_check
      _
    $region51: #{lko_lstm_forward.1} parent=1 // pred_check_branch
      %52 = sbr.rel (0) target = $region53
    $region52: #{lko_lstm_forward.1} parent=1 // pred_region
      _
    $region53: #{lko_lstm_forward.1} parent=1 // pred_fallthru
      _
    // Predicated region
    $region54: #{lko_lstm_forward.1} parent=1 // pred_check
      _
    $region55: #{lko_lstm_forward.1} parent=1 // pred_check_branch
      %54 = sbr.rel (0) target = $region57
    $region56: #{lko_lstm_forward.1} parent=1 // pred_region
      _
    $region57: #{lko_lstm_forward.1} parent=1 // pred_fallthru
      _
    // Predicated region
    $region58: #{lko_lstm_forward.1} parent=1 // pred_check
      _
    $region59: #{lko_lstm_forward.1} parent=1 // pred_check_branch
      %56 = sbr.rel (0) target = $region61
    $region60: #{lko_lstm_forward.1} parent=1 // pred_region
      _
    $region61: #{lko_lstm_forward.1} parent=1 // pred_fallthru
      _
    // Predicated region
    $region62: #{lko_lstm_forward.1} parent=1 // pred_check
      _
    $region63: #{lko_lstm_forward.1} parent=1 // pred_check_branch
      %58 = sbr.rel (0) target = $region65
    $region64: #{lko_lstm_forward.1} parent=1 // pred_region
      _
    $region65: #{lko_lstm_forward.1} parent=1 // pred_fallthru
      _
    // Predicated region
    $region66: #{lko_lstm_forward.1} parent=1 // pred_check
      _
    $region67: #{lko_lstm_forward.1} parent=1 // pred_check_branch
      %60 = sbr.rel (0) target = $region69
    $region68: #{lko_lstm_forward.1} parent=1 // pred_region
      _
    $region69: #{lko_lstm_forward.1} parent=1 // pred_fallthru
      _
    %v61 = vld [vmem:[%s2] sm:$0xff]
    %v62 = vld [vmem:[%s2 + $0x8] sm:$0xff]
    %v63 = vld [vmem:[%s2 + $0x10] sm:$0xff]
    %v64 = vld [vmem:[%s2 + $0x18] sm:$0xff]
    %v65 = vld [vmem:[%s2 + $0x20] sm:$0xff]
    %v66 = vld [vmem:[%s2 + $0x28] sm:$0xff]
    %v67 = vld [vmem:[%s2 + $0x30] sm:$0xff]
    %v68 = vld [vmem:[%s2 + $0x38] sm:$0xff]
    %v69 = vld [vmem:[%s3] sm:$0xff]
    %v70 = vld [vmem:[%s3 + $0x8] sm:$0xff]
    %v71 = vld [vmem:[%s3 + $0x10] sm:$0xff]
    %v72 = vld [vmem:[%s3 + $0x18] sm:$0xff]
    %v73 = vld [vmem:[%s3 + $0x20] sm:$0xff]
    %v74 = vld [vmem:[%s3 + $0x28] sm:$0xff]
    %v75 = vld [vmem:[%s3 + $0x30] sm:$0xff]
    %v76 = vld [vmem:[%s3 + $0x38] sm:$0xff]
    %v77 = vld [vmem:[%s4] sm:$0xf]
    %v78 = vld [vmem:[%s5] sm:$0x3]
    %vm79 = vcmask 15360
    %v81 = vsel %vm79, %v69, 0
    %v84 = vsel %vm79, %v70, 0
    %v87 = vsel %vm79, %v71, 0
    %v90 = vsel %vm79, %v72, 0
    %v93 = vsel %vm79, %v73, 0
    %v96 = vsel %vm79, %v74, 0
    %v99 = vsel %vm79, %v75, 0
    %v102 = vsel %vm79, %v76, 0
    %vm104 = vcmask 1041408
    %v106 = vsel %vm104, %v78, 0
    %108 = vmatprep.subr.mxu0 0.0
    %109 = vmatpush1.msra.mxu0 %v106
    %110 = vmatprep.subr.mxu0 0.0
    %111 = vmatpush1.msra.mxu0 0.0
    %112 = vmatprep.subr.mxu0 0.0
    %113 = vmatpush1.msra.mxu0 0.0
    %114 = vmatprep.subr.mxu0 0.0
    %115 = vmatpush1.msra.mxu0 0.0
    %116 = vmatprep.subr.mxu0 0.0
    %117 = vmatpush1.msra.mxu0 0.0
    %118 = vmatprep.subr.mxu0 0.0
    %119 = vmatpush1.msra.mxu0 0.0
    %120 = vmatprep.subr.mxu0 0.0
    %121 = vmatpush1.msra.mxu0 0.0
    %122 = vmatprep.subr.mxu0 0.0
    %123 = vmatpush1.msra.mxu0 0.0
    %124 = vmatprep.subr.mxu0 0.0
    %125 = vmatpush1.msra.mxu0 0.0
    %126 = vmatprep.subr.mxu0 0.0
    %127 = vmatpush1.msra.mxu0 0.0
    %128 = vmatprep.subr.mxu0 0.0
    %129 = vmatpush1.msra.mxu0 0.0
    %130 = vmatprep.subr.mxu0 0.0
    %131 = vmatpush1.msra.mxu0 0.0
    %132 = vmatprep.subr.mxu0 0.0
    %133 = vmatpush1.msra.mxu0 0.0
    %134 = vmatprep.subr.mxu0 0.0
    %135 = vmatpush1.msra.mxu0 0.0
    %136 = vmatprep.subr.mxu0 0.0
    %137 = vmatpush1.msra.mxu0 0.0
    %138 = vmatprep.subr.mxu0 0.0
    %139 = vmatpush1.msra.mxu0 0.0
    %140 = vmatprep.subr.mxu0 0.0
    %141 = vmatpush1.msra.mxu0 0.0
    %142 = vmatprep.subr.mxu0 0.0
    %143 = vmatpush1.msra.mxu0 0.0
    %144 = vmatprep.subr.mxu0 0.0
    %145 = vmatpush1.msra.mxu0 0.0
    %146 = vmatprep.subr.mxu0 0.0
    %147 = vmatpush1.msra.mxu0 0.0
    %148 = vmatprep.subr.mxu0 0.0
    %149 = vmatpush1.msra.mxu0 0.0
    %150 = vmatprep.subr.mxu0 0.0
    %151 = vmatpush1.msra.mxu0 0.0
    %152 = vmatprep.subr.mxu0 0.0
    %153 = vmatpush1.msra.mxu0 0.0
    %154 = vmatprep.subr.mxu0 0.0
    %155 = vmatpush1.msra.mxu0 0.0
    %156 = vmatprep.subr.mxu0 0.0
    %157 = vmatpush1.msra.mxu0 0.0
    %158 = vmatprep.subr.mxu0 0.0
    %159 = vmatpush1.msra.mxu0 0.0
    %160 = vmatprep.subr.mxu0 0.0
    %161 = vmatpush1.msra.mxu0 0.0
    %162 = vmatprep.subr.mxu0 0.0
    %163 = vmatpush1.msra.mxu0 0.0
    %164 = vmatprep.subr.mxu0 0.0
    %165 = vmatpush1.msra.mxu0 0.0
    %166 = vmatprep.subr.mxu0 0.0
    %167 = vmatpush1.msra.mxu0 0.0
    %168 = vmatprep.subr.mxu0 0.0
    %169 = vmatpush1.msra.mxu0 0.0
    %170 = vmatprep.subr.mxu0 0.0
    %171 = vmatpush1.msra.mxu0 0.0
    %172 = vmatprep.mubr.f32.mxu0 0.0
    %173 = vmatmul.mubr.f32.gmra.mrb[0].mxu0 %v81
    %v174 = vpop.f32.mrb[0].mxu0
    %v175 = vadd.f32 0.0, %v174
    %v176 = vpop.f32.mrb[0].mxu0
    %177 = vmatprep.mubr.f32.mxu0 0.0
    %178 = vmatmul.mubr.f32.gmra.mrb[0].mxu0 %v84
    %v179 = vpop.f32.mrb[0].mxu0
    %v180 = vadd.f32 0.0, %v179
    %v181 = vpop.f32.mrb[0].mxu0
    %182 = vmatprep.mubr.f32.mxu0 0.0
    %183 = vmatmul.mubr.f32.gmra.mrb[0].mxu0 %v87
    %v184 = vpop.f32.mrb[0].mxu0
    %v185 = vadd.f32 0.0, %v184
    %v186 = vpop.f32.mrb[0].mxu0
    %187 = vmatprep.mubr.f32.mxu0 0.0
    %188 = vmatmul.mubr.f32.gmra.mrb[0].mxu0 %v90
    %v189 = vpop.f32.mrb[0].mxu0
    %v190 = vadd.f32 0.0, %v189
    %v191 = vpop.f32.mrb[0].mxu0
    %192 = vmatprep.mubr.f32.mxu0 0.0
    %193 = vmatmul.mubr.f32.gmra.mrb[0].mxu0 %v93
    %v194 = vpop.f32.mrb[0].mxu0
    %v195 = vadd.f32 0.0, %v194
    %v196 = vpop.f32.mrb[0].mxu0
    %197 = vmatprep.mubr.f32.mxu0 0.0
    %198 = vmatmul.mubr.f32.gmra.mrb[0].mxu0 %v96
    %v199 = vpop.f32.mrb[0].mxu0
    %v200 = vadd.f32 0.0, %v199
    %v201 = vpop.f32.mrb[0].mxu0
    %202 = vmatprep.mubr.f32.mxu0 0.0
    %203 = vmatmul.mubr.f32.gmra.mrb[0].mxu0 %v99
    %v204 = vpop.f32.mrb[0].mxu0
    %v205 = vadd.f32 0.0, %v204
    %v206 = vpop.f32.mrb[0].mxu0
    %207 = vmatprep.mubr.f32.mxu0 0.0
    %208 = vmatmul.mubr.f32.gmra.mrb[0].mxu0 %v102
    %v209 = vpop.f32.mrb[0].mxu0
    %v210 = vadd.f32 0.0, %v209
    %v211 = vpop.f32.mrb[0].mxu0
    %212 = vdwg.mxu0
    %vm213 = vcmask 31744
    %v215 = vsel %vm213, %v61, 0
    %v218 = vsel %vm213, %v62, 0
    %v221 = vsel %vm213, %v63, 0
    %v224 = vsel %vm213, %v64, 0
    %v227 = vsel %vm213, %v65, 0
    %v230 = vsel %vm213, %v66, 0
    %v233 = vsel %vm213, %v67, 0
    %v236 = vsel %vm213, %v68, 0
    %vm238 = vcmask 1043456
    %v240 = vsel %vm238, %v77, 0
    %242 = vmatprep.subr.mxu0 0.0
    %243 = vmatpush1.msra.mxu0 %v240
    %244 = vmatprep.subr.mxu0 0.0
    %245 = vmatpush1.msra.mxu0 0.0
    %246 = vmatprep.subr.mxu0 0.0
    %247 = vmatpush1.msra.mxu0 0.0
    %248 = vmatprep.subr.mxu0 0.0
    %249 = vmatpush1.msra.mxu0 0.0
    %250 = vmatprep.subr.mxu0 0.0
    %251 = vmatpush1.msra.mxu0 0.0
    %252 = vmatprep.subr.mxu0 0.0
    %253 = vmatpush1.msra.mxu0 0.0
    %254 = vmatprep.subr.mxu0 0.0
    %255 = vmatpush1.msra.mxu0 0.0
    %256 = vmatprep.subr.mxu0 0.0
    %257 = vmatpush1.msra.mxu0 0.0
    %258 = vmatprep.subr.mxu0 0.0
    %259 = vmatpush1.msra.mxu0 0.0
    %260 = vmatprep.subr.mxu0 0.0
    %261 = vmatpush1.msra.mxu0 0.0
    %262 = vmatprep.subr.mxu0 0.0
    %263 = vmatpush1.msra.mxu0 0.0
    %264 = vmatprep.subr.mxu0 0.0
    %265 = vmatpush1.msra.mxu0 0.0
    %266 = vmatprep.subr.mxu0 0.0
    %267 = vmatpush1.msra.mxu0 0.0
    %268 = vmatprep.subr.mxu0 0.0
    %269 = vmatpush1.msra.mxu0 0.0
    %270 = vmatprep.subr.mxu0 0.0
    %271 = vmatpush1.msra.mxu0 0.0
    %272 = vmatprep.subr.mxu0 0.0
    %273 = vmatpush1.msra.mxu0 0.0
    %274 = vmatprep.subr.mxu0 0.0
    %275 = vmatpush1.msra.mxu0 0.0
    %276 = vmatprep.subr.mxu0 0.0
    %277 = vmatpush1.msra.mxu0 0.0
    %278 = vmatprep.subr.mxu0 0.0
    %279 = vmatpush1.msra.mxu0 0.0
    %280 = vmatprep.subr.mxu0 0.0
    %281 = vmatpush1.msra.mxu0 0.0
    %282 = vmatprep.subr.mxu0 0.0
    %283 = vmatpush1.msra.mxu0 0.0
    %284 = vmatprep.subr.mxu0 0.0
    %285 = vmatpush1.msra.mxu0 0.0
    %286 = vmatprep.subr.mxu0 0.0
    %287 = vmatpush1.msra.mxu0 0.0
    %288 = vmatprep.subr.mxu0 0.0
    %289 = vmatpush1.msra.mxu0 0.0
    %290 = vmatprep.subr.mxu0 0.0
    %291 = vmatpush1.msra.mxu0 0.0
    %292 = vmatprep.subr.mxu0 0.0
    %293 = vmatpush1.msra.mxu0 0.0
    %294 = vmatprep.subr.mxu0 0.0
    %295 = vmatpush1.msra.mxu0 0.0
    %296 = vmatprep.subr.mxu0 0.0
    %297 = vmatpush1.msra.mxu0 0.0
    %298 = vmatprep.subr.mxu0 0.0
    %299 = vmatpush1.msra.mxu0 0.0
    %300 = vmatprep.subr.mxu0 0.0
    %301 = vmatpush1.msra.mxu0 0.0
    %302 = vmatprep.subr.mxu0 0.0
    %303 = vmatpush1.msra.mxu0 0.0
    %304 = vmatprep.subr.mxu0 0.0
    %305 = vmatpush1.msra.mxu0 0.0
    %306 = vmatprep.mubr.f32.mxu0 0.0
    %307 = vmatmul.mubr.f32.gmra.mrb[0].mxu0 %v215
    %v308 = vpop.f32.mrb[0].mxu0
    %v309 = vadd.f32 %v175, %v308
    %v310 = vpop.f32.mrb[0].mxu0
    %311 = vmatprep.mubr.f32.mxu0 0.0
    %312 = vmatmul.mubr.f32.gmra.mrb[0].mxu0 %v218
    %v313 = vpop.f32.mrb[0].mxu0
    %v314 = vadd.f32 %v180, %v313
    %v315 = vpop.f32.mrb[0].mxu0
    %316 = vmatprep.mubr.f32.mxu0 0.0
    %317 = vmatmul.mubr.f32.gmra.mrb[0].mxu0 %v221
    %v318 = vpop.f32.mrb[0].mxu0
    %v319 = vadd.f32 %v185, %v318
    %v320 = vpop.f32.mrb[0].mxu0
    %321 = vmatprep.mubr.f32.mxu0 0.0
    %322 = vmatmul.mubr.f32.gmra.mrb[0].mxu0 %v224
    %v323 = vpop.f32.mrb[0].mxu0
    %v324 = vadd.f32 %v190, %v323
    %v325 = vpop.f32.mrb[0].mxu0
    %326 = vmatprep.mubr.f32.mxu0 0.0
    %327 = vmatmul.mubr.f32.gmra.mrb[0].mxu0 %v227
    %v328 = vpop.f32.mrb[0].mxu0
    %v329 = vadd.f32 %v195, %v328
    %v330 = vpop.f32.mrb[0].mxu0
    %331 = vmatprep.mubr.f32.mxu0 0.0
    %332 = vmatmul.mubr.f32.gmra.mrb[0].mxu0 %v230
    %v333 = vpop.f32.mrb[0].mxu0
    %v334 = vadd.f32 %v200, %v333
    %v335 = vpop.f32.mrb[0].mxu0
    %336 = vmatprep.mubr.f32.mxu0 0.0
    %337 = vmatmul.mubr.f32.gmra.mrb[0].mxu0 %v233
    %v338 = vpop.f32.mrb[0].mxu0
    %v339 = vadd.f32 %v205, %v338
    %v340 = vpop.f32.mrb[0].mxu0
    %341 = vmatprep.mubr.f32.mxu0 0.0
    %342 = vmatmul.mubr.f32.gmra.mrb[0].mxu0 %v236
    %v343 = vpop.f32.mrb[0].mxu0
    %v344 = vadd.f32 %v210, %v343
    %v345 = vpop.f32.mrb[0].mxu0
    %346 = vdwg.mxu0
    %v347 = vld [vmem:[%s7] sm:$0x1]
    %v349 = vlaneseq
    %v350 = vshrl.u32 %v349, 7
    %v351 = vsub.s32 0, %v350
    %v352 = vrot.slane %v347, %v351
    %v354 = vadd.f32 %v309, %v352
    %v355 = vadd.f32 %v314, %v352
    %v356 = vadd.f32 %v319, %v352
    %v357 = vadd.f32 %v324, %v352
    %v358 = vadd.f32 %v329, %v352
    %v359 = vadd.f32 %v334, %v352
    %v360 = vadd.f32 %v339, %v352
    %v361 = vadd.f32 %v344, %v352
    %362 = vst [vmem:[#allocation2] sm:$0xff] %v354
    %363 = vst [vmem:[#allocation2 + $0x8] sm:$0xff] %v355
    %364 = vst [vmem:[#allocation2 + $0x10] sm:$0xff] %v356
    %365 = vst [vmem:[#allocation2 + $0x18] sm:$0xff] %v357
    %366 = vst [vmem:[#allocation2 + $0x20] sm:$0xff] %v358
    %367 = vst [vmem:[#allocation2 + $0x28] sm:$0xff] %v359
    %368 = vst [vmem:[#allocation2 + $0x30] sm:$0xff] %v360
    %369 = vst [vmem:[#allocation2 + $0x38] sm:$0xff] %v361
    %v370 = vld [vmem:[%s6] sm:$0xff]
    %v371 = vld [vmem:[%s6 + $0x8] sm:$0xff]
    %v372 = vld [vmem:[%s6 + $0x10] sm:$0xff]
    %v373 = vld [vmem:[%s6 + $0x18] sm:$0xff]
    %v374 = vld [vmem:[#allocation2] sm:$0x1]
    %v375 = vld [vmem:[#allocation2 + $0x8] sm:$0x1]
    %v376 = vld [vmem:[#allocation2 + $0x10] sm:$0x1]
    %v377 = vld [vmem:[#allocation2 + $0x18] sm:$0x1]
    %v378 = vld [vmem:[#allocation2 + $0x20] sm:$0x1]
    %v379 = vld [vmem:[#allocation2 + $0x28] sm:$0x1]
    %v380 = vld [vmem:[#allocation2 + $0x30] sm:$0x1]
    %v381 = vld [vmem:[#allocation2 + $0x38] sm:$0x1]
    %vm382 = vcmask 261120
    %v384 = vsel %vm382, 0.0, 0
    %386 = vmatprep.subr.mxu0 0.0
    %387 = vmatpush1.msra.mxu0 %v370
    %388 = vmatprep.subr.mxu0 0.0
    %389 = vmatpush1.msra.mxu0 %v371
    %390 = vmatprep.subr.mxu0 0.0
    %391 = vmatpush1.msra.mxu0 %v372
    %392 = vmatprep.subr.mxu0 0.0
    %393 = vmatpush1.msra.mxu0 %v373
    %394 = vmatprep.subr.mxu0 0.0
    %395 = vmatpush1.msra.mxu0 0.0
    %396 = vmatprep.subr.mxu0 0.0
    %397 = vmatpush1.msra.mxu0 0.0
    %398 = vmatprep.subr.mxu0 0.0
    %399 = vmatpush1.msra.mxu0 0.0
    %400 = vmatprep.subr.mxu0 0.0
    %401 = vmatpush1.msra.mxu0 0.0
    %402 = vmatprep.subr.mxu0 0.0
    %403 = vmatpush1.msra.mxu0 0.0
    %404 = vmatprep.subr.mxu0 0.0
    %405 = vmatpush1.msra.mxu0 0.0
    %406 = vmatprep.subr.mxu0 0.0
    %407 = vmatpush1.msra.mxu0 0.0
    %408 = vmatprep.subr.mxu0 0.0
    %409 = vmatpush1.msra.mxu0 0.0
    %410 = vmatprep.subr.mxu0 0.0
    %411 = vmatpush1.msra.mxu0 0.0
    %412 = vmatprep.subr.mxu0 0.0
    %413 = vmatpush1.msra.mxu0 0.0
    %414 = vmatprep.subr.mxu0 0.0
    %415 = vmatpush1.msra.mxu0 0.0
    %416 = vmatprep.subr.mxu0 0.0
    %417 = vmatpush1.msra.mxu0 0.0
    %418 = vmatprep.subr.mxu0 0.0
    %419 = vmatpush1.msra.mxu0 0.0
    %420 = vmatprep.subr.mxu0 0.0
    %421 = vmatpush1.msra.mxu0 0.0
    %422 = vmatprep.subr.mxu0 0.0
    %423 = vmatpush1.msra.mxu0 0.0
    %424 = vmatprep.subr.mxu0 0.0
    %425 = vmatpush1.msra.mxu0 0.0
    %426 = vmatprep.subr.mxu0 0.0
    %427 = vmatpush1.msra.mxu0 0.0
    %428 = vmatprep.subr.mxu0 0.0
    %429 = vmatpush1.msra.mxu0 0.0
    %430 = vmatprep.subr.mxu0 0.0
    %431 = vmatpush1.msra.mxu0 0.0
    %432 = vmatprep.subr.mxu0 0.0
    %433 = vmatpush1.msra.mxu0 0.0
    %434 = vmatprep.subr.mxu0 0.0
    %435 = vmatpush1.msra.mxu0 0.0
    %436 = vmatprep.subr.mxu0 0.0
    %437 = vmatpush1.msra.mxu0 0.0
    %438 = vmatprep.subr.mxu0 0.0
    %439 = vmatpush1.msra.mxu0 0.0
    %440 = vmatprep.subr.mxu0 0.0
    %441 = vmatpush1.msra.mxu0 0.0
    %442 = vmatprep.subr.mxu0 0.0
    %443 = vmatpush1.msra.mxu0 0.0
    %444 = vmatprep.subr.mxu0 0.0
    %445 = vmatpush1.msra.mxu0 0.0
    %446 = vmatprep.subr.mxu0 0.0
    %447 = vmatpush1.msra.mxu0 0.0
    %448 = vmatprep.subr.mxu0 0.0
    %449 = vmatpush1.msra.mxu0 0.0
    %450 = vmatprep.mubr.f32.mxu0 0.0
    %451 = vmatmul.mubr.f32.gmra.mrb[0].mxu0 %v384
    %v452 = vpop.f32.mrb[0].mxu0
    %v453 = vadd.f32 0.0, %v452
    %v454 = vpop.f32.mrb[0].mxu0
    %455 = vdwg.mxu0
    %v457 = vrot.slane %v453, 1
    %v458 = vrot.slane %v453, 2
    %v459 = vrot.slane %v453, 3
    %v460 = vrot.slane %v453, 4
    %v461 = vrot.slane %v453, 5
    %v462 = vrot.slane %v453, 6
    %v463 = vrot.slane %v453, 7
    %v472 = vadd.f32 %v374, %v453
    %v473 = vadd.f32 %v375, %v457
    %v474 = vadd.f32 %v376, %v458
    %v475 = vadd.f32 %v377, %v459
    %v476 = vadd.f32 %v378, %v460
    %v477 = vadd.f32 %v379, %v461
    %v478 = vadd.f32 %v380, %v462
    %v479 = vadd.f32 %v381, %v463
    %v480 = vxor.u32 %v472, 2147483648
    %v481 = vxor.u32 %v473, 2147483648
    %v482 = vxor.u32 %v474, 2147483648
    %v483 = vxor.u32 %v475, 2147483648
    %v484 = vxor.u32 %v476, 2147483648
    %v485 = vxor.u32 %v477, 2147483648
    %v486 = vxor.u32 %v478, 2147483648
    %v487 = vxor.u32 %v479, 2147483648
    %v488 = vmul.f32 %v480, 1.442695
    %v489 = vpow.pop %v488
    %v490 = vmul.f32 %v481, 1.442695
    %v491 = vpow.pop %v490
    %v492 = vmul.f32 %v482, 1.442695
    %v493 = vpow.pop %v492
    %v494 = vmul.f32 %v483, 1.442695
    %v495 = vpow.pop %v494
    %v496 = vmul.f32 %v484, 1.442695
    %v497 = vpow.pop %v496
    %v498 = vmul.f32 %v485, 1.442695
    %v499 = vpow.pop %v498
    %v500 = vmul.f32 %v486, 1.442695
    %v501 = vpow.pop %v500
    %v502 = vmul.f32 %v487, 1.442695
    %v503 = vpow.pop %v502
    %v504 = vadd.f32 %v489, 1.0
    %v505 = vadd.f32 %v491, 1.0
    %v506 = vadd.f32 %v493, 1.0
    %v507 = vadd.f32 %v495, 1.0
    %v508 = vadd.f32 %v497, 1.0
    %v509 = vadd.f32 %v499, 1.0
    %v510 = vadd.f32 %v501, 1.0
    %v511 = vadd.f32 %v503, 1.0
    %v512 = vrcp.pop %v504
    %v513 = vmul.f32 1.0, %v512
    %v514 = vrcp.pop %v505
    %v515 = vmul.f32 1.0, %v514
    %v516 = vrcp.pop %v506
    %v517 = vmul.f32 1.0, %v516
    %v518 = vrcp.pop %v507
    %v519 = vmul.f32 1.0, %v518
    %v520 = vrcp.pop %v508
    %v521 = vmul.f32 1.0, %v520
    %v522 = vrcp.pop %v509
    %v523 = vmul.f32 1.0, %v522
    %v524 = vrcp.pop %v510
    %v525 = vmul.f32 1.0, %v524
    %v526 = vrcp.pop %v511
    %v527 = vmul.f32 1.0, %v526
    %v528 = vtanh.pop %v472
    %v529 = vtanh.pop %v473
    %v530 = vtanh.pop %v474
    %v531 = vtanh.pop %v475
    %v532 = vtanh.pop %v476
    %v533 = vtanh.pop %v477
    %v534 = vtanh.pop %v478
    %v535 = vtanh.pop %v479
    %v536 = vmul.f32 %v513, 0.0
    %v537 = vmul.f32 %v515, 0.0
    %v538 = vmul.f32 %v517, 0.0
    %v539 = vmul.f32 %v519, 0.0
    %v540 = vmul.f32 %v521, 0.0
    %v541 = vmul.f32 %v523, 0.0
    %v542 = vmul.f32 %v525, 0.0
    %v543 = vmul.f32 %v527, 0.0
    %552 = vrot.lane.b32.xlu0 %v528, 32
    %v553 = vpop.permute.xlu0 %552
    %554 = vrot.lane.b32.xlu0 %v529, 32
    %v555 = vpop.permute.xlu0 %554
    %556 = vrot.lane.b32.xlu0 %v530, 32
    %v557 = vpop.permute.xlu0 %556
    %558 = vrot.lane.b32.xlu0 %v531, 32
    %v559 = vpop.permute.xlu0 %558
    %560 = vrot.lane.b32.xlu0 %v532, 32
    %v561 = vpop.permute.xlu0 %560
    %562 = vrot.lane.b32.xlu0 %v533, 32
    %v563 = vpop.permute.xlu0 %562
    %564 = vrot.lane.b32.xlu0 %v534, 32
    %v565 = vpop.permute.xlu0 %564
    %566 = vrot.lane.b32.xlu0 %v535, 32
    %v567 = vpop.permute.xlu0 %566
    %v576 = vmul.f32 %v513, %v553
    %v577 = vmul.f32 %v515, %v555
    %v578 = vmul.f32 %v517, %v557
    %v579 = vmul.f32 %v519, %v559
    %v580 = vmul.f32 %v521, %v561
    %v581 = vmul.f32 %v523, %v563
    %v582 = vmul.f32 %v525, %v565
    %v583 = vmul.f32 %v527, %v567
    %592 = vrot.lane.b32.xlu0 %v576, 32
    %v593 = vpop.permute.xlu0 %592
    %594 = vrot.lane.b32.xlu0 %v577, 32
    %v595 = vpop.permute.xlu0 %594
    %596 = vrot.lane.b32.xlu0 %v578, 32
    %v597 = vpop.permute.xlu0 %596
    %598 = vrot.lane.b32.xlu0 %v579, 32
    %v599 = vpop.permute.xlu0 %598
    %600 = vrot.lane.b32.xlu0 %v580, 32
    %v601 = vpop.permute.xlu0 %600
    %602 = vrot.lane.b32.xlu0 %v581, 32
    %v603 = vpop.permute.xlu0 %602
    %604 = vrot.lane.b32.xlu0 %v582, 32
    %v605 = vpop.permute.xlu0 %604
    %606 = vrot.lane.b32.xlu0 %v583, 32
    %v607 = vpop.permute.xlu0 %606
    %v616 = vadd.f32 %v536, %v593
    %v617 = vadd.f32 %v537, %v595
    %v618 = vadd.f32 %v538, %v597
    %v619 = vadd.f32 %v539, %v599
    %v620 = vadd.f32 %v540, %v601
    %v621 = vadd.f32 %v541, %v603
    %v622 = vadd.f32 %v542, %v605
    %v623 = vadd.f32 %v543, %v607
    %v624 = vtanh.pop %v616
    %v625 = vtanh.pop %v617
    %v626 = vtanh.pop %v618
    %v627 = vtanh.pop %v619
    %v628 = vtanh.pop %v620
    %v629 = vtanh.pop %v621
    %v630 = vtanh.pop %v622
    %v631 = vtanh.pop %v623
    %640 = vrot.lane.b32.xlu0 %v624, 32
    %v641 = vpop.permute.xlu0 %640
    %642 = vrot.lane.b32.xlu0 %v625, 32
    %v643 = vpop.permute.xlu0 %642
    %644 = vrot.lane.b32.xlu0 %v626, 32
    %v645 = vpop.permute.xlu0 %644
    %646 = vrot.lane.b32.xlu0 %v627, 32
    %v647 = vpop.permute.xlu0 %646
    %648 = vrot.lane.b32.xlu0 %v628, 32
    %v649 = vpop.permute.xlu0 %648
    %650 = vrot.lane.b32.xlu0 %v629, 32
    %v651 = vpop.permute.xlu0 %650
    %652 = vrot.lane.b32.xlu0 %v630, 32
    %v653 = vpop.permute.xlu0 %652
    %654 = vrot.lane.b32.xlu0 %v631, 32
    %v655 = vpop.permute.xlu0 %654
    %v664 = vmul.f32 %v513, %v641
    %v665 = vmul.f32 %v515, %v643
    %v666 = vmul.f32 %v517, %v645
    %v667 = vmul.f32 %v519, %v647
    %v668 = vmul.f32 %v521, %v649
    %v669 = vmul.f32 %v523, %v651
    %v670 = vmul.f32 %v525, %v653
    %v671 = vmul.f32 %v527, %v655
    %v672 = vld [vmem:[#allocation2 + $0x1] sm:$0x1]
    %v673 = vld [vmem:[#allocation2 + $0x9] sm:$0x1]
    %v674 = vld [vmem:[#allocation2 + $0x11] sm:$0x1]
    %v675 = vld [vmem:[#allocation2 + $0x19] sm:$0x1]
    %v676 = vld [vmem:[#allocation2 + $0x21] sm:$0x1]
    %v677 = vld [vmem:[#allocation2 + $0x29] sm:$0x1]
    %v678 = vld [vmem:[#allocation2 + $0x31] sm:$0x1]
    %v679 = vld [vmem:[#allocation2 + $0x39] sm:$0x1]
    %v688 = vrot.slane %v665, 7
    %vm689 = vcmask 1041409
    %v690 = vsel %vm689, %v688, %v664
    %v691 = vrot.slane %v666, 6
    %vm692 = vcmask 1042434
    %v693 = vsel %vm692, %v691, %v690
    %v694 = vrot.slane %v667, 5
    %vm695 = vcmask 1043459
    %v696 = vsel %vm695, %v694, %v693
    %v697 = vrot.slane %v668, 4
    %vm698 = vcmask 1044484
    %v699 = vsel %vm698, %v697, %v696
    %v700 = vrot.slane %v669, 3
    %vm701 = vcmask 1045509
    %v702 = vsel %vm701, %v700, %v699
    %v703 = vrot.slane %v670, 2
    %vm704 = vcmask 1046534
    %v705 = vsel %vm704, %v703, %v702
    %v706 = vrot.slane %v671, 1
    %vm707 = vcmask 1047559
    %v708 = vsel %vm707, %v706, %v705
    %709 = vrot.lane.b32.xlu0 %v708, 64
    %v710 = vpop.permute.xlu0 %709
    %v711 = vsel %vm382, %v710, 0
    %713 = vmatprep.subr.mxu0 0.0
    %714 = vmatpush1.msra.mxu0 %v370
    %715 = vmatprep.subr.mxu0 0.0
    %716 = vmatpush1.msra.mxu0 %v371
    %717 = vmatprep.subr.mxu0 0.0
    %718 = vmatpush1.msra.mxu0 %v372
    %719 = vmatprep.subr.mxu0 0.0
    %720 = vmatpush1.msra.mxu0 %v373
    %721 = vmatprep.subr.mxu0 0.0
    %722 = vmatpush1.msra.mxu0 0.0
    %723 = vmatprep.subr.mxu0 0.0
    %724 = vmatpush1.msra.mxu0 0.0
    %725 = vmatprep.subr.mxu0 0.0
    %726 = vmatpush1.msra.mxu0 0.0
    %727 = vmatprep.subr.mxu0 0.0
    %728 = vmatpush1.msra.mxu0 0.0
    %729 = vmatprep.subr.mxu0 0.0
    %730 = vmatpush1.msra.mxu0 0.0
    %731 = vmatprep.subr.mxu0 0.0
    %732 = vmatpush1.msra.mxu0 0.0
    %733 = vmatprep.subr.mxu0 0.0
    %734 = vmatpush1.msra.mxu0 0.0
    %735 = vmatprep.subr.mxu0 0.0
    %736 = vmatpush1.msra.mxu0 0.0
    %737 = vmatprep.subr.mxu0 0.0
    %738 = vmatpush1.msra.mxu0 0.0
    %739 = vmatprep.subr.mxu0 0.0
    %740 = vmatpush1.msra.mxu0 0.0
    %741 = vmatprep.subr.mxu0 0.0
    %742 = vmatpush1.msra.mxu0 0.0
    %743 = vmatprep.subr.mxu0 0.0
    %744 = vmatpush1.msra.mxu0 0.0
    %745 = vmatprep.subr.mxu0 0.0
    %746 = vmatpush1.msra.mxu0 0.0
    %747 = vmatprep.subr.mxu0 0.0
    %748 = vmatpush1.msra.mxu0 0.0
    %749 = vmatprep.subr.mxu0 0.0
    %750 = vmatpush1.msra.mxu0 0.0
    %751 = vmatprep.subr.mxu0 0.0
    %752 = vmatpush1.msra.mxu0 0.0
    %753 = vmatprep.subr.mxu0 0.0
    %754 = vmatpush1.msra.mxu0 0.0
    %755 = vmatprep.subr.mxu0 0.0
    %756 = vmatpush1.msra.mxu0 0.0
    %757 = vmatprep.subr.mxu0 0.0
    %758 = vmatpush1.msra.mxu0 0.0
    %759 = vmatprep.subr.mxu0 0.0
    %760 = vmatpush1.msra.mxu0 0.0
    %761 = vmatprep.subr.mxu0 0.0
    %762 = vmatpush1.msra.mxu0 0.0
    %763 = vmatprep.subr.mxu0 0.0
    %764 = vmatpush1.msra.mxu0 0.0
    %765 = vmatprep.subr.mxu0 0.0
    %766 = vmatpush1.msra.mxu0 0.0
    %767 = vmatprep.subr.mxu0 0.0
    %768 = vmatpush1.msra.mxu0 0.0
    %769 = vmatprep.subr.mxu0 0.0
    %770 = vmatpush1.msra.mxu0 0.0
    %771 = vmatprep.subr.mxu0 0.0
    %772 = vmatpush1.msra.mxu0 0.0
    %773 = vmatprep.subr.mxu0 0.0
    %774 = vmatpush1.msra.mxu0 0.0
    %775 = vmatprep.subr.mxu0 0.0
    %776 = vmatpush1.msra.mxu0 0.0
    %777 = vmatprep.mubr.f32.mxu0 0.0
    %778 = vmatmul.mubr.f32.gmra.mrb[0].mxu0 %v711
    %v779 = vpop.f32.mrb[0].mxu0
    %v780 = vadd.f32 0.0, %v779
    %v781 = vpop.f32.mrb[0].mxu0
    %782 = vdwg.mxu0
    %v784 = vrot.slane %v780, 1
    %v785 = vrot.slane %v780, 2
    %v786 = vrot.slane %v780, 3
    %v787 = vrot.slane %v780, 4
    %v788 = vrot.slane %v780, 5
    %v789 = vrot.slane %v780, 6
    %v790 = vrot.slane %v780, 7
    %v799 = vadd.f32 %v672, %v780
    %v800 = vadd.f32 %v673, %v784
    %v801 = vadd.f32 %v674, %v785
    %v802 = vadd.f32 %v675, %v786
    %v803 = vadd.f32 %v676, %v787
    %v804 = vadd.f32 %v677, %v788
    %v805 = vadd.f32 %v678, %v789
    %v806 = vadd.f32 %v679, %v790
    %v807 = vxor.u32 %v799, 2147483648
    %v808 = vxor.u32 %v800, 2147483648
    %v809 = vxor.u32 %v801, 2147483648
    %v810 = vxor.u32 %v802, 2147483648
    %v811 = vxor.u32 %v803, 2147483648
    %v812 = vxor.u32 %v804, 2147483648
    %v813 = vxor.u32 %v805, 2147483648
    %v814 = vxor.u32 %v806, 2147483648
    %v815 = vmul.f32 %v807, 1.442695
    %v816 = vpow.pop %v815
    %v817 = vmul.f32 %v808, 1.442695
    %v818 = vpow.pop %v817
    %v819 = vmul.f32 %v809, 1.442695
    %v820 = vpow.pop %v819
    %v821 = vmul.f32 %v810, 1.442695
    %v822 = vpow.pop %v821
    %v823 = vmul.f32 %v811, 1.442695
    %v824 = vpow.pop %v823
    %v825 = vmul.f32 %v812, 1.442695
    %v826 = vpow.pop %v825
    %v827 = vmul.f32 %v813, 1.442695
    %v828 = vpow.pop %v827
    %v829 = vmul.f32 %v814, 1.442695
    %v830 = vpow.pop %v829
    %v831 = vadd.f32 %v816, 1.0
    %v832 = vadd.f32 %v818, 1.0
    %v833 = vadd.f32 %v820, 1.0
    %v834 = vadd.f32 %v822, 1.0
    %v835 = vadd.f32 %v824, 1.0
    %v836 = vadd.f32 %v826, 1.0
    %v837 = vadd.f32 %v828, 1.0
    %v838 = vadd.f32 %v830, 1.0
    %v839 = vrcp.pop %v831
    %v840 = vmul.f32 1.0, %v839
    %v841 = vrcp.pop %v832
    %v842 = vmul.f32 1.0, %v841
    %v843 = vrcp.pop %v833
    %v844 = vmul.f32 1.0, %v843
    %v845 = vrcp.pop %v834
    %v846 = vmul.f32 1.0, %v845
    %v847 = vrcp.pop %v835
    %v848 = vmul.f32 1.0, %v847
    %v849 = vrcp.pop %v836
    %v850 = vmul.f32 1.0, %v849
    %v851 = vrcp.pop %v837
    %v852 = vmul.f32 1.0, %v851
    %v853 = vrcp.pop %v838
    %v854 = vmul.f32 1.0, %v853
    %v855 = vtanh.pop %v799
    %v856 = vtanh.pop %v800
    %v857 = vtanh.pop %v801
    %v858 = vtanh.pop %v802
    %v859 = vtanh.pop %v803
    %v860 = vtanh.pop %v804
    %v861 = vtanh.pop %v805
    %v862 = vtanh.pop %v806
    %v863 = vmul.f32 %v840, %v616
    %v864 = vmul.f32 %v842, %v617
    %v865 = vmul.f32 %v844, %v618
    %v866 = vmul.f32 %v846, %v619
    %v867 = vmul.f32 %v848, %v620
    %v868 = vmul.f32 %v850, %v621
    %v869 = vmul.f32 %v852, %v622
    %v870 = vmul.f32 %v854, %v623
    %879 = vrot.lane.b32.xlu0 %v855, 32
    %v880 = vpop.permute.xlu0 %879
    %881 = vrot.lane.b32.xlu0 %v856, 32
    %v882 = vpop.permute.xlu0 %881
    %883 = vrot.lane.b32.xlu0 %v857, 32
    %v884 = vpop.permute.xlu0 %883
    %885 = vrot.lane.b32.xlu0 %v858, 32
    %v886 = vpop.permute.xlu0 %885
    %887 = vrot.lane.b32.xlu0 %v859, 32
    %v888 = vpop.permute.xlu0 %887
    %889 = vrot.lane.b32.xlu0 %v860, 32
    %v890 = vpop.permute.xlu0 %889
    %891 = vrot.lane.b32.xlu0 %v861, 32
    %v892 = vpop.permute.xlu0 %891
    %893 = vrot.lane.b32.xlu0 %v862, 32
    %v894 = vpop.permute.xlu0 %893
    %v903 = vmul.f32 %v840, %v880
    %v904 = vmul.f32 %v842, %v882
    %v905 = vmul.f32 %v844, %v884
    %v906 = vmul.f32 %v846, %v886
    %v907 = vmul.f32 %v848, %v888
    %v908 = vmul.f32 %v850, %v890
    %v909 = vmul.f32 %v852, %v892
    %v910 = vmul.f32 %v854, %v894
    %919 = vrot.lane.b32.xlu0 %v903, 32
    %v920 = vpop.permute.xlu0 %919
    %921 = vrot.lane.b32.xlu0 %v904, 32
    %v922 = vpop.permute.xlu0 %921
    %923 = vrot.lane.b32.xlu0 %v905, 32
    %v924 = vpop.permute.xlu0 %923
    %925 = vrot.lane.b32.xlu0 %v906, 32
    %v926 = vpop.permute.xlu0 %925
    %927 = vrot.lane.b32.xlu0 %v907, 32
    %v928 = vpop.permute.xlu0 %927
    %929 = vrot.lane.b32.xlu0 %v908, 32
    %v930 = vpop.permute.xlu0 %929
    %931 = vrot.lane.b32.xlu0 %v909, 32
    %v932 = vpop.permute.xlu0 %931
    %933 = vrot.lane.b32.xlu0 %v910, 32
    %v934 = vpop.permute.xlu0 %933
    %v943 = vadd.f32 %v863, %v920
    %v944 = vadd.f32 %v864, %v922
    %v945 = vadd.f32 %v865, %v924
    %v946 = vadd.f32 %v866, %v926
    %v947 = vadd.f32 %v867, %v928
    %v948 = vadd.f32 %v868, %v930
    %v949 = vadd.f32 %v869, %v932
    %v950 = vadd.f32 %v870, %v934
    %v951 = vtanh.pop %v943
    %v952 = vtanh.pop %v944
    %v953 = vtanh.pop %v945
    %v954 = vtanh.pop %v946
    %v955 = vtanh.pop %v947
    %v956 = vtanh.pop %v948
    %v957 = vtanh.pop %v949
    %v958 = vtanh.pop %v950
    %967 = vrot.lane.b32.xlu0 %v951, 32
    %v968 = vpop.permute.xlu0 %967
    %969 = vrot.lane.b32.xlu0 %v952, 32
    %v970 = vpop.permute.xlu0 %969
    %971 = vrot.lane.b32.xlu0 %v953, 32
    %v972 = vpop.permute.xlu0 %971
    %973 = vrot.lane.b32.xlu0 %v954, 32
    %v974 = vpop.permute.xlu0 %973
    %975 = vrot.lane.b32.xlu0 %v955, 32
    %v976 = vpop.permute.xlu0 %975
    %977 = vrot.lane.b32.xlu0 %v956, 32
    %v978 = vpop.permute.xlu0 %977
    %979 = vrot.lane.b32.xlu0 %v957, 32
    %v980 = vpop.permute.xlu0 %979
    %981 = vrot.lane.b32.xlu0 %v958, 32
    %v982 = vpop.permute.xlu0 %981
    %v991 = vmul.f32 %v840, %v968
    %v992 = vmul.f32 %v842, %v970
    %v993 = vmul.f32 %v844, %v972
    %v994 = vmul.f32 %v846, %v974
    %v995 = vmul.f32 %v848, %v976
    %v996 = vmul.f32 %v850, %v978
    %v997 = vmul.f32 %v852, %v980
    %v998 = vmul.f32 %v854, %v982
    %v999 = vld [vmem:[#allocation2 + $0x2] sm:$0x1]
    %v1000 = vld [vmem:[#allocation2 + $0xa] sm:$0x1]
    %v1001 = vld [vmem:[#allocation2 + $0x12] sm:$0x1]
    %v1002 = vld [vmem:[#allocation2 + $0x1a] sm:$0x1]
    %v1003 = vld [vmem:[#allocation2 + $0x22] sm:$0x1]
    %v1004 = vld [vmem:[#allocation2 + $0x2a] sm:$0x1]
    %v1005 = vld [vmem:[#allocation2 + $0x32] sm:$0x1]
    %v1006 = vld [vmem:[#allocation2 + $0x3a] sm:$0x1]
    %v1015 = vrot.slane %v992, 7
    %v1016 = vsel %vm689, %v1015, %v991
    %v1017 = vrot.slane %v993, 6
    %v1018 = vsel %vm692, %v1017, %v1016
    %v1019 = vrot.slane %v994, 5
    %v1020 = vsel %vm695, %v1019, %v1018
    %v1021 = vrot.slane %v995, 4
    %v1022 = vsel %vm698, %v1021, %v1020
    %v1023 = vrot.slane %v996, 3
    %v1024 = vsel %vm701, %v1023, %v1022
    %v1025 = vrot.slane %v997, 2
    %v1026 = vsel %vm704, %v1025, %v1024
    %v1027 = vrot.slane %v998, 1
    %v1028 = vsel %vm707, %v1027, %v1026
    %1029 = vrot.lane.b32.xlu0 %v1028, 64
    %v1030 = vpop.permute.xlu0 %1029
    %v1031 = vsel %vm382, %v1030, 0
    %1033 = vmatprep.subr.mxu0 0.0
    %1034 = vmatpush1.msra.mxu0 %v370
    %1035 = vmatprep.subr.mxu0 0.0
    %1036 = vmatpush1.msra.mxu0 %v371
    %1037 = vmatprep.subr.mxu0 0.0
    %1038 = vmatpush1.msra.mxu0 %v372
    %1039 = vmatprep.subr.mxu0 0.0
    %1040 = vmatpush1.msra.mxu0 %v373
    %1041 = vmatprep.subr.mxu0 0.0
    %1042 = vmatpush1.msra.mxu0 0.0
    %1043 = vmatprep.subr.mxu0 0.0
    %1044 = vmatpush1.msra.mxu0 0.0
    %1045 = vmatprep.subr.mxu0 0.0
    %1046 = vmatpush1.msra.mxu0 0.0
    %1047 = vmatprep.subr.mxu0 0.0
    %1048 = vmatpush1.msra.mxu0 0.0
    %1049 = vmatprep.subr.mxu0 0.0
    %1050 = vmatpush1.msra.mxu0 0.0
    %1051 = vmatprep.subr.mxu0 0.0
    %1052 = vmatpush1.msra.mxu0 0.0
    %1053 = vmatprep.subr.mxu0 0.0
    %1054 = vmatpush1.msra.mxu0 0.0
    %1055 = vmatprep.subr.mxu0 0.0
    %1056 = vmatpush1.msra.mxu0 0.0
    %1057 = vmatprep.subr.mxu0 0.0
    %1058 = vmatpush1.msra.mxu0 0.0
    %1059 = vmatprep.subr.mxu0 0.0
    %1060 = vmatpush1.msra.mxu0 0.0
    %1061 = vmatprep.subr.mxu0 0.0
    %1062 = vmatpush1.msra.mxu0 0.0
    %1063 = vmatprep.subr.mxu0 0.0
    %1064 = vmatpush1.msra.mxu0 0.0
    %1065 = vmatprep.subr.mxu0 0.0
    %1066 = vmatpush1.msra.mxu0 0.0
    %1067 = vmatprep.subr.mxu0 0.0
    %1068 = vmatpush1.msra.mxu0 0.0
    %1069 = vmatprep.subr.mxu0 0.0
    %1070 = vmatpush1.msra.mxu0 0.0
    %1071 = vmatprep.subr.mxu0 0.0
    %1072 = vmatpush1.msra.mxu0 0.0
    %1073 = vmatprep.subr.mxu0 0.0
    %1074 = vmatpush1.msra.mxu0 0.0
    %1075 = vmatprep.subr.mxu0 0.0
    %1076 = vmatpush1.msra.mxu0 0.0
    %1077 = vmatprep.subr.mxu0 0.0
    %1078 = vmatpush1.msra.mxu0 0.0
    %1079 = vmatprep.subr.mxu0 0.0
    %1080 = vmatpush1.msra.mxu0 0.0
    %1081 = vmatprep.subr.mxu0 0.0
    %1082 = vmatpush1.msra.mxu0 0.0
    %1083 = vmatprep.subr.mxu0 0.0
    %1084 = vmatpush1.msra.mxu0 0.0
    %1085 = vmatprep.subr.mxu0 0.0
    %1086 = vmatpush1.msra.mxu0 0.0
    %1087 = vmatprep.subr.mxu0 0.0
    %1088 = vmatpush1.msra.mxu0 0.0
    %1089 = vmatprep.subr.mxu0 0.0
    %1090 = vmatpush1.msra.mxu0 0.0
    %1091 = vmatprep.subr.mxu0 0.0
    %1092 = vmatpush1.msra.mxu0 0.0
    %1093 = vmatprep.subr.mxu0 0.0
    %1094 = vmatpush1.msra.mxu0 0.0
    %1095 = vmatprep.subr.mxu0 0.0
    %1096 = vmatpush1.msra.mxu0 0.0
    %1097 = vmatprep.mubr.f32.mxu0 0.0
    %1098 = vmatmul.mubr.f32.gmra.mrb[0].mxu0 %v1031
    %v1099 = vpop.f32.mrb[0].mxu0
    %v1100 = vadd.f32 0.0, %v1099
    %v1101 = vpop.f32.mrb[0].mxu0
    %1102 = vdwg.mxu0
    %v1104 = vrot.slane %v1100, 1
    %v1105 = vrot.slane %v1100, 2
    %v1106 = vrot.slane %v1100, 3
    %v1107 = vrot.slane %v1100, 4
    %v1108 = vrot.slane %v1100, 5
    %v1109 = vrot.slane %v1100, 6
    %v1110 = vrot.slane %v1100, 7
    %v1119 = vadd.f32 %v999, %v1100
    %v1120 = vadd.f32 %v1000, %v1104
    %v1121 = vadd.f32 %v1001, %v1105
    %v1122 = vadd.f32 %v1002, %v1106
    %v1123 = vadd.f32 %v1003, %v1107
    %v1124 = vadd.f32 %v1004, %v1108
    %v1125 = vadd.f32 %v1005, %v1109
    %v1126 = vadd.f32 %v1006, %v1110
    %v1127 = vxor.u32 %v1119, 2147483648
    %v1128 = vxor.u32 %v1120, 2147483648
    %v1129 = vxor.u32 %v1121, 2147483648
    %v1130 = vxor.u32 %v1122, 2147483648
    %v1131 = vxor.u32 %v1123, 2147483648
    %v1132 = vxor.u32 %v1124, 2147483648
    %v1133 = vxor.u32 %v1125, 2147483648
    %v1134 = vxor.u32 %v1126, 2147483648
    %v1135 = vmul.f32 %v1127, 1.442695
    %v1136 = vpow.pop %v1135
    %v1137 = vmul.f32 %v1128, 1.442695
    %v1138 = vpow.pop %v1137
    %v1139 = vmul.f32 %v1129, 1.442695
    %v1140 = vpow.pop %v1139
    %v1141 = vmul.f32 %v1130, 1.442695
    %v1142 = vpow.pop %v1141
    %v1143 = vmul.f32 %v1131, 1.442695
    %v1144 = vpow.pop %v1143
    %v1145 = vmul.f32 %v1132, 1.442695
    %v1146 = vpow.pop %v1145
    %v1147 = vmul.f32 %v1133, 1.442695
    %v1148 = vpow.pop %v1147
    %v1149 = vmul.f32 %v1134, 1.442695
    %v1150 = vpow.pop %v1149
    %v1151 = vadd.f32 %v1136, 1.0
    %v1152 = vadd.f32 %v1138, 1.0
    %v1153 = vadd.f32 %v1140, 1.0
    %v1154 = vadd.f32 %v1142, 1.0
    %v1155 = vadd.f32 %v1144, 1.0
    %v1156 = vadd.f32 %v1146, 1.0
    %v1157 = vadd.f32 %v1148, 1.0
    %v1158 = vadd.f32 %v1150, 1.0
    %v1159 = vrcp.pop %v1151
    %v1160 = vmul.f32 1.0, %v1159
    %v1161 = vrcp.pop %v1152
    %v1162 = vmul.f32 1.0, %v1161
    %v1163 = vrcp.pop %v1153
    %v1164 = vmul.f32 1.0, %v1163
    %v1165 = vrcp.pop %v1154
    %v1166 = vmul.f32 1.0, %v1165
    %v1167 = vrcp.pop %v1155
    %v1168 = vmul.f32 1.0, %v1167
    %v1169 = vrcp.pop %v1156
    %v1170 = vmul.f32 1.0, %v1169
    %v1171 = vrcp.pop %v1157
    %v1172 = vmul.f32 1.0, %v1171
    %v1173 = vrcp.pop %v1158
    %v1174 = vmul.f32 1.0, %v1173
    %v1175 = vtanh.pop %v1119
    %v1176 = vtanh.pop %v1120
    %v1177 = vtanh.pop %v1121
    %v1178 = vtanh.pop %v1122
    %v1179 = vtanh.pop %v1123
    %v1180 = vtanh.pop %v1124
    %v1181 = vtanh.pop %v1125
    %v1182 = vtanh.pop %v1126
    %v1183 = vmul.f32 %v1160, %v943
    %v1184 = vmul.f32 %v1162, %v944
    %v1185 = vmul.f32 %v1164, %v945
    %v1186 = vmul.f32 %v1166, %v946
    %v1187 = vmul.f32 %v1168, %v947
    %v1188 = vmul.f32 %v1170, %v948
    %v1189 = vmul.f32 %v1172, %v949
    %v1190 = vmul.f32 %v1174, %v950
    %1199 = vrot.lane.b32.xlu0 %v1175, 32
    %v1200 = vpop.permute.xlu0 %1199
    %1201 = vrot.lane.b32.xlu0 %v1176, 32
    %v1202 = vpop.permute.xlu0 %1201
    %1203 = vrot.lane.b32.xlu0 %v1177, 32
    %v1204 = vpop.permute.xlu0 %1203
    %1205 = vrot.lane.b32.xlu0 %v1178, 32
    %v1206 = vpop.permute.xlu0 %1205
    %1207 = vrot.lane.b32.xlu0 %v1179, 32
    %v1208 = vpop.permute.xlu0 %1207
    %1209 = vrot.lane.b32.xlu0 %v1180, 32
    %v1210 = vpop.permute.xlu0 %1209
    %1211 = vrot.lane.b32.xlu0 %v1181, 32
    %v1212 = vpop.permute.xlu0 %1211
    %1213 = vrot.lane.b32.xlu0 %v1182, 32
    %v1214 = vpop.permute.xlu0 %1213
    %v1223 = vmul.f32 %v1160, %v1200
    %v1224 = vmul.f32 %v1162, %v1202
    %v1225 = vmul.f32 %v1164, %v1204
    %v1226 = vmul.f32 %v1166, %v1206
    %v1227 = vmul.f32 %v1168, %v1208
    %v1228 = vmul.f32 %v1170, %v1210
    %v1229 = vmul.f32 %v1172, %v1212
    %v1230 = vmul.f32 %v1174, %v1214
    %1239 = vrot.lane.b32.xlu0 %v1223, 32
    %v1240 = vpop.permute.xlu0 %1239
    %1241 = vrot.lane.b32.xlu0 %v1224, 32
    %v1242 = vpop.permute.xlu0 %1241
    %1243 = vrot.lane.b32.xlu0 %v1225, 32
    %v1244 = vpop.permute.xlu0 %1243
    %1245 = vrot.lane.b32.xlu0 %v1226, 32
    %v1246 = vpop.permute.xlu0 %1245
    %1247 = vrot.lane.b32.xlu0 %v1227, 32
    %v1248 = vpop.permute.xlu0 %1247
    %1249 = vrot.lane.b32.xlu0 %v1228, 32
    %v1250 = vpop.permute.xlu0 %1249
    %1251 = vrot.lane.b32.xlu0 %v1229, 32
    %v1252 = vpop.permute.xlu0 %1251
    %1253 = vrot.lane.b32.xlu0 %v1230, 32
    %v1254 = vpop.permute.xlu0 %1253
    %v1263 = vadd.f32 %v1183, %v1240
    %v1264 = vadd.f32 %v1184, %v1242
    %v1265 = vadd.f32 %v1185, %v1244
    %v1266 = vadd.f32 %v1186, %v1246
    %v1267 = vadd.f32 %v1187, %v1248
    %v1268 = vadd.f32 %v1188, %v1250
    %v1269 = vadd.f32 %v1189, %v1252
    %v1270 = vadd.f32 %v1190, %v1254
    %v1271 = vtanh.pop %v1263
    %v1272 = vtanh.pop %v1264
    %v1273 = vtanh.pop %v1265
    %v1274 = vtanh.pop %v1266
    %v1275 = vtanh.pop %v1267
    %v1276 = vtanh.pop %v1268
    %v1277 = vtanh.pop %v1269
    %v1278 = vtanh.pop %v1270
    %1287 = vrot.lane.b32.xlu0 %v1271, 32
    %v1288 = vpop.permute.xlu0 %1287
    %1289 = vrot.lane.b32.xlu0 %v1272, 32
    %v1290 = vpop.permute.xlu0 %1289
    %1291 = vrot.lane.b32.xlu0 %v1273, 32
    %v1292 = vpop.permute.xlu0 %1291
    %1293 = vrot.lane.b32.xlu0 %v1274, 32
    %v1294 = vpop.permute.xlu0 %1293
    %1295 = vrot.lane.b32.xlu0 %v1275, 32
    %v1296 = vpop.permute.xlu0 %1295
    %1297 = vrot.lane.b32.xlu0 %v1276, 32
    %v1298 = vpop.permute.xlu0 %1297
    %1299 = vrot.lane.b32.xlu0 %v1277, 32
    %v1300 = vpop.permute.xlu0 %1299
    %1301 = vrot.lane.b32.xlu0 %v1278, 32
    %v1302 = vpop.permute.xlu0 %1301
    %v1311 = vmul.f32 %v1160, %v1288
    %v1312 = vmul.f32 %v1162, %v1290
    %v1313 = vmul.f32 %v1164, %v1292
    %v1314 = vmul.f32 %v1166, %v1294
    %v1315 = vmul.f32 %v1168, %v1296
    %v1316 = vmul.f32 %v1170, %v1298
    %v1317 = vmul.f32 %v1172, %v1300
    %v1318 = vmul.f32 %v1174, %v1302
    %v1319 = vld [vmem:[#allocation2 + $0x3] sm:$0x1]
    %v1320 = vld [vmem:[#allocation2 + $0xb] sm:$0x1]
    %v1321 = vld [vmem:[#allocation2 + $0x13] sm:$0x1]
    %v1322 = vld [vmem:[#allocation2 + $0x1b] sm:$0x1]
    %v1323 = vld [vmem:[#allocation2 + $0x23] sm:$0x1]
    %v1324 = vld [vmem:[#allocation2 + $0x2b] sm:$0x1]
    %v1325 = vld [vmem:[#allocation2 + $0x33] sm:$0x1]
    %v1326 = vld [vmem:[#allocation2 + $0x3b] sm:$0x1]
    %v1335 = vrot.slane %v1312, 7
    %v1336 = vsel %vm689, %v1335, %v1311
    %v1337 = vrot.slane %v1313, 6
    %v1338 = vsel %vm692, %v1337, %v1336
    %v1339 = vrot.slane %v1314, 5
    %v1340 = vsel %vm695, %v1339, %v1338
    %v1341 = vrot.slane %v1315, 4
    %v1342 = vsel %vm698, %v1341, %v1340
    %v1343 = vrot.slane %v1316, 3
    %v1344 = vsel %vm701, %v1343, %v1342
    %v1345 = vrot.slane %v1317, 2
    %v1346 = vsel %vm704, %v1345, %v1344
    %v1347 = vrot.slane %v1318, 1
    %v1348 = vsel %vm707, %v1347, %v1346
    %1349 = vrot.lane.b32.xlu0 %v1348, 64
    %v1350 = vpop.permute.xlu0 %1349
    %v1351 = vsel %vm382, %v1350, 0
    %1353 = vmatprep.subr.mxu0 0.0
    %1354 = vmatpush1.msra.mxu0 %v370
    %1355 = vmatprep.subr.mxu0 0.0
    %1356 = vmatpush1.msra.mxu0 %v371
    %1357 = vmatprep.subr.mxu0 0.0
    %1358 = vmatpush1.msra.mxu0 %v372
    %1359 = vmatprep.subr.mxu0 0.0
    %1360 = vmatpush1.msra.mxu0 %v373
    %1361 = vmatprep.subr.mxu0 0.0
    %1362 = vmatpush1.msra.mxu0 0.0
    %1363 = vmatprep.subr.mxu0 0.0
    %1364 = vmatpush1.msra.mxu0 0.0
    %1365 = vmatprep.subr.mxu0 0.0
    %1366 = vmatpush1.msra.mxu0 0.0
    %1367 = vmatprep.subr.mxu0 0.0
    %1368 = vmatpush1.msra.mxu0 0.0
    %1369 = vmatprep.subr.mxu0 0.0
    %1370 = vmatpush1.msra.mxu0 0.0
    %1371 = vmatprep.subr.mxu0 0.0
    %1372 = vmatpush1.msra.mxu0 0.0
    %1373 = vmatprep.subr.mxu0 0.0
    %1374 = vmatpush1.msra.mxu0 0.0
    %1375 = vmatprep.subr.mxu0 0.0
    %1376 = vmatpush1.msra.mxu0 0.0
    %1377 = vmatprep.subr.mxu0 0.0
    %1378 = vmatpush1.msra.mxu0 0.0
    %1379 = vmatprep.subr.mxu0 0.0
    %1380 = vmatpush1.msra.mxu0 0.0
    %1381 = vmatprep.subr.mxu0 0.0
    %1382 = vmatpush1.msra.mxu0 0.0
    %1383 = vmatprep.subr.mxu0 0.0
    %1384 = vmatpush1.msra.mxu0 0.0
    %1385 = vmatprep.subr.mxu0 0.0
    %1386 = vmatpush1.msra.mxu0 0.0
    %1387 = vmatprep.subr.mxu0 0.0
    %1388 = vmatpush1.msra.mxu0 0.0
    %1389 = vmatprep.subr.mxu0 0.0
    %1390 = vmatpush1.msra.mxu0 0.0
    %1391 = vmatprep.subr.mxu0 0.0
    %1392 = vmatpush1.msra.mxu0 0.0
    %1393 = vmatprep.subr.mxu0 0.0
    %1394 = vmatpush1.msra.mxu0 0.0
    %1395 = vmatprep.subr.mxu0 0.0
    %1396 = vmatpush1.msra.mxu0 0.0
    %1397 = vmatprep.subr.mxu0 0.0
    %1398 = vmatpush1.msra.mxu0 0.0
    %1399 = vmatprep.subr.mxu0 0.0
    %1400 = vmatpush1.msra.mxu0 0.0
    %1401 = vmatprep.subr.mxu0 0.0
    %1402 = vmatpush1.msra.mxu0 0.0
    %1403 = vmatprep.subr.mxu0 0.0
    %1404 = vmatpush1.msra.mxu0 0.0
    %1405 = vmatprep.subr.mxu0 0.0
    %1406 = vmatpush1.msra.mxu0 0.0
    %1407 = vmatprep.subr.mxu0 0.0
    %1408 = vmatpush1.msra.mxu0 0.0
    %1409 = vmatprep.subr.mxu0 0.0
    %1410 = vmatpush1.msra.mxu0 0.0
    %1411 = vmatprep.subr.mxu0 0.0
    %1412 = vmatpush1.msra.mxu0 0.0
    %1413 = vmatprep.subr.mxu0 0.0
    %1414 = vmatpush1.msra.mxu0 0.0
    %1415 = vmatprep.subr.mxu0 0.0
    %1416 = vmatpush1.msra.mxu0 0.0
    %1417 = vmatprep.mubr.f32.mxu0 0.0
    %1418 = vmatmul.mubr.f32.gmra.mrb[0].mxu0 %v1351
    %v1419 = vpop.f32.mrb[0].mxu0
    %v1420 = vadd.f32 0.0, %v1419
    %v1421 = vpop.f32.mrb[0].mxu0
    %1422 = vdwg.mxu0
    %v1424 = vrot.slane %v1420, 1
    %v1425 = vrot.slane %v1420, 2
    %v1426 = vrot.slane %v1420, 3
    %v1427 = vrot.slane %v1420, 4
    %v1428 = vrot.slane %v1420, 5
    %v1429 = vrot.slane %v1420, 6
    %v1430 = vrot.slane %v1420, 7
    %v1439 = vadd.f32 %v1319, %v1420
    %v1440 = vadd.f32 %v1320, %v1424
    %v1441 = vadd.f32 %v1321, %v1425
    %v1442 = vadd.f32 %v1322, %v1426
    %v1443 = vadd.f32 %v1323, %v1427
    %v1444 = vadd.f32 %v1324, %v1428
    %v1445 = vadd.f32 %v1325, %v1429
    %v1446 = vadd.f32 %v1326, %v1430
    %v1447 = vxor.u32 %v1439, 2147483648
    %v1448 = vxor.u32 %v1440, 2147483648
    %v1449 = vxor.u32 %v1441, 2147483648
    %v1450 = vxor.u32 %v1442, 2147483648
    %v1451 = vxor.u32 %v1443, 2147483648
    %v1452 = vxor.u32 %v1444, 2147483648
    %v1453 = vxor.u32 %v1445, 2147483648
    %v1454 = vxor.u32 %v1446, 2147483648
    %v1455 = vmul.f32 %v1447, 1.442695
    %v1456 = vpow.pop %v1455
    %v1457 = vmul.f32 %v1448, 1.442695
    %v1458 = vpow.pop %v1457
    %v1459 = vmul.f32 %v1449, 1.442695
    %v1460 = vpow.pop %v1459
    %v1461 = vmul.f32 %v1450, 1.442695
    %v1462 = vpow.pop %v1461
    %v1463 = vmul.f32 %v1451, 1.442695
    %v1464 = vpow.pop %v1463
    %v1465 = vmul.f32 %v1452, 1.442695
    %v1466 = vpow.pop %v1465
    %v1467 = vmul.f32 %v1453, 1.442695
    %v1468 = vpow.pop %v1467
    %v1469 = vmul.f32 %v1454, 1.442695
    %v1470 = vpow.pop %v1469
    %v1471 = vadd.f32 %v1456, 1.0
    %v1472 = vadd.f32 %v1458, 1.0
    %v1473 = vadd.f32 %v1460, 1.0
    %v1474 = vadd.f32 %v1462, 1.0
    %v1475 = vadd.f32 %v1464, 1.0
    %v1476 = vadd.f32 %v1466, 1.0
    %v1477 = vadd.f32 %v1468, 1.0
    %v1478 = vadd.f32 %v1470, 1.0
    %v1479 = vrcp.pop %v1471
    %v1480 = vmul.f32 1.0, %v1479
    %v1481 = vrcp.pop %v1472
    %v1482 = vmul.f32 1.0, %v1481
    %v1483 = vrcp.pop %v1473
    %v1484 = vmul.f32 1.0, %v1483
    %v1485 = vrcp.pop %v1474
    %v1486 = vmul.f32 1.0, %v1485
    %v1487 = vrcp.pop %v1475
    %v1488 = vmul.f32 1.0, %v1487
    %v1489 = vrcp.pop %v1476
    %v1490 = vmul.f32 1.0, %v1489
    %v1491 = vrcp.pop %v1477
    %v1492 = vmul.f32 1.0, %v1491
    %v1493 = vrcp.pop %v1478
    %v1494 = vmul.f32 1.0, %v1493
    %v1495 = vtanh.pop %v1439
    %v1496 = vtanh.pop %v1440
    %v1497 = vtanh.pop %v1441
    %v1498 = vtanh.pop %v1442
    %v1499 = vtanh.pop %v1443
    %v1500 = vtanh.pop %v1444
    %v1501 = vtanh.pop %v1445
    %v1502 = vtanh.pop %v1446
    %v1503 = vmul.f32 %v1480, %v1263
    %v1504 = vmul.f32 %v1482, %v1264
    %v1505 = vmul.f32 %v1484, %v1265
    %v1506 = vmul.f32 %v1486, %v1266
    %v1507 = vmul.f32 %v1488, %v1267
    %v1508 = vmul.f32 %v1490, %v1268
    %v1509 = vmul.f32 %v1492, %v1269
    %v1510 = vmul.f32 %v1494, %v1270
    %1519 = vrot.lane.b32.xlu0 %v1495, 32
    %v1520 = vpop.permute.xlu0 %1519
    %1521 = vrot.lane.b32.xlu0 %v1496, 32
    %v1522 = vpop.permute.xlu0 %1521
    %1523 = vrot.lane.b32.xlu0 %v1497, 32
    %v1524 = vpop.permute.xlu0 %1523
    %1525 = vrot.lane.b32.xlu0 %v1498, 32
    %v1526 = vpop.permute.xlu0 %1525
    %1527 = vrot.lane.b32.xlu0 %v1499, 32
    %v1528 = vpop.permute.xlu0 %1527
    %1529 = vrot.lane.b32.xlu0 %v1500, 32
    %v1530 = vpop.permute.xlu0 %1529
    %1531 = vrot.lane.b32.xlu0 %v1501, 32
    %v1532 = vpop.permute.xlu0 %1531
    %1533 = vrot.lane.b32.xlu0 %v1502, 32
    %v1534 = vpop.permute.xlu0 %1533
    %v1543 = vmul.f32 %v1480, %v1520
    %v1544 = vmul.f32 %v1482, %v1522
    %v1545 = vmul.f32 %v1484, %v1524
    %v1546 = vmul.f32 %v1486, %v1526
    %v1547 = vmul.f32 %v1488, %v1528
    %v1548 = vmul.f32 %v1490, %v1530
    %v1549 = vmul.f32 %v1492, %v1532
    %v1550 = vmul.f32 %v1494, %v1534
    %1559 = vrot.lane.b32.xlu0 %v1543, 32
    %v1560 = vpop.permute.xlu0 %1559
    %1561 = vrot.lane.b32.xlu0 %v1544, 32
    %v1562 = vpop.permute.xlu0 %1561
    %1563 = vrot.lane.b32.xlu0 %v1545, 32
    %v1564 = vpop.permute.xlu0 %1563
    %1565 = vrot.lane.b32.xlu0 %v1546, 32
    %v1566 = vpop.permute.xlu0 %1565
    %1567 = vrot.lane.b32.xlu0 %v1547, 32
    %v1568 = vpop.permute.xlu0 %1567
    %1569 = vrot.lane.b32.xlu0 %v1548, 32
    %v1570 = vpop.permute.xlu0 %1569
    %1571 = vrot.lane.b32.xlu0 %v1549, 32
    %v1572 = vpop.permute.xlu0 %1571
    %1573 = vrot.lane.b32.xlu0 %v1550, 32
    %v1574 = vpop.permute.xlu0 %1573
    %v1583 = vadd.f32 %v1503, %v1560
    %v1584 = vadd.f32 %v1504, %v1562
    %v1585 = vadd.f32 %v1505, %v1564
    %v1586 = vadd.f32 %v1506, %v1566
    %v1587 = vadd.f32 %v1507, %v1568
    %v1588 = vadd.f32 %v1508, %v1570
    %v1589 = vadd.f32 %v1509, %v1572
    %v1590 = vadd.f32 %v1510, %v1574
    %v1591 = vtanh.pop %v1583
    %v1592 = vtanh.pop %v1584
    %v1593 = vtanh.pop %v1585
    %v1594 = vtanh.pop %v1586
    %v1595 = vtanh.pop %v1587
    %v1596 = vtanh.pop %v1588
    %v1597 = vtanh.pop %v1589
    %v1598 = vtanh.pop %v1590
    %1607 = vrot.lane.b32.xlu0 %v1591, 32
    %v1608 = vpop.permute.xlu0 %1607
    %1609 = vrot.lane.b32.xlu0 %v1592, 32
    %v1610 = vpop.permute.xlu0 %1609
    %1611 = vrot.lane.b32.xlu0 %v1593, 32
    %v1612 = vpop.permute.xlu0 %1611
    %1613 = vrot.lane.b32.xlu0 %v1594, 32
    %v1614 = vpop.permute.xlu0 %1613
    %1615 = vrot.lane.b32.xlu0 %v1595, 32
    %v1616 = vpop.permute.xlu0 %1615
    %1617 = vrot.lane.b32.xlu0 %v1596, 32
    %v1618 = vpop.permute.xlu0 %1617
    %1619 = vrot.lane.b32.xlu0 %v1597, 32
    %v1620 = vpop.permute.xlu0 %1619
    %1621 = vrot.lane.b32.xlu0 %v1598, 32
    %v1622 = vpop.permute.xlu0 %1621
    %v1631 = vmul.f32 %v1480, %v1608
    %v1632 = vmul.f32 %v1482, %v1610
    %v1633 = vmul.f32 %v1484, %v1612
    %v1634 = vmul.f32 %v1486, %v1614
    %v1635 = vmul.f32 %v1488, %v1616
    %v1636 = vmul.f32 %v1490, %v1618
    %v1637 = vmul.f32 %v1492, %v1620
    %v1638 = vmul.f32 %v1494, %v1622
    %v1639 = vld [vmem:[#allocation2 + $0x4] sm:$0x1]
    %v1640 = vld [vmem:[#allocation2 + $0xc] sm:$0x1]
    %v1641 = vld [vmem:[#allocation2 + $0x14] sm:$0x1]
    %v1642 = vld [vmem:[#allocation2 + $0x1c] sm:$0x1]
    %v1643 = vld [vmem:[#allocation2 + $0x24] sm:$0x1]
    %v1644 = vld [vmem:[#allocation2 + $0x2c] sm:$0x1]
    %v1645 = vld [vmem:[#allocation2 + $0x34] sm:$0x1]
    %v1646 = vld [vmem:[#allocation2 + $0x3c] sm:$0x1]
    %v1655 = vrot.slane %v1632, 7
    %v1656 = vsel %vm689, %v1655, %v1631
    %v1657 = vrot.slane %v1633, 6
    %v1658 = vsel %vm692, %v1657, %v1656
    %v1659 = vrot.slane %v1634, 5
    %v1660 = vsel %vm695, %v1659, %v1658
    %v1661 = vrot.slane %v1635, 4
    %v1662 = vsel %vm698, %v1661, %v1660
    %v1663 = vrot.slane %v1636, 3
    %v1664 = vsel %vm701, %v1663, %v1662
    %v1665 = vrot.slane %v1637, 2
    %v1666 = vsel %vm704, %v1665, %v1664
    %v1667 = vrot.slane %v1638, 1
    %v1668 = vsel %vm707, %v1667, %v1666
    %1669 = vrot.lane.b32.xlu0 %v1668, 64
    %v1670 = vpop.permute.xlu0 %1669
    %v1671 = vsel %vm382, %v1670, 0
    %1673 = vmatprep.subr.mxu0 0.0
    %1674 = vmatpush1.msra.mxu0 %v370
    %1675 = vmatprep.subr.mxu0 0.0
    %1676 = vmatpush1.msra.mxu0 %v371
    %1677 = vmatprep.subr.mxu0 0.0
    %1678 = vmatpush1.msra.mxu0 %v372
    %1679 = vmatprep.subr.mxu0 0.0
    %1680 = vmatpush1.msra.mxu0 %v373
    %1681 = vmatprep.subr.mxu0 0.0
    %1682 = vmatpush1.msra.mxu0 0.0
    %1683 = vmatprep.subr.mxu0 0.0
    %1684 = vmatpush1.msra.mxu0 0.0
    %1685 = vmatprep.subr.mxu0 0.0
    %1686 = vmatpush1.msra.mxu0 0.0
    %1687 = vmatprep.subr.mxu0 0.0
    %1688 = vmatpush1.msra.mxu0 0.0
    %1689 = vmatprep.subr.mxu0 0.0
    %1690 = vmatpush1.msra.mxu0 0.0
    %1691 = vmatprep.subr.mxu0 0.0
    %1692 = vmatpush1.msra.mxu0 0.0
    %1693 = vmatprep.subr.mxu0 0.0
    %1694 = vmatpush1.msra.mxu0 0.0
    %1695 = vmatprep.subr.mxu0 0.0
    %1696 = vmatpush1.msra.mxu0 0.0
    %1697 = vmatprep.subr.mxu0 0.0
    %1698 = vmatpush1.msra.mxu0 0.0
    %1699 = vmatprep.subr.mxu0 0.0
    %1700 = vmatpush1.msra.mxu0 0.0
    %1701 = vmatprep.subr.mxu0 0.0
    %1702 = vmatpush1.msra.mxu0 0.0
    %1703 = vmatprep.subr.mxu0 0.0
    %1704 = vmatpush1.msra.mxu0 0.0
    %1705 = vmatprep.subr.mxu0 0.0
    %1706 = vmatpush1.msra.mxu0 0.0
    %1707 = vmatprep.subr.mxu0 0.0
    %1708 = vmatpush1.msra.mxu0 0.0
    %1709 = vmatprep.subr.mxu0 0.0
    %1710 = vmatpush1.msra.mxu0 0.0
    %1711 = vmatprep.subr.mxu0 0.0
    %1712 = vmatpush1.msra.mxu0 0.0
    %1713 = vmatprep.subr.mxu0 0.0
    %1714 = vmatpush1.msra.mxu0 0.0
    %1715 = vmatprep.subr.mxu0 0.0
    %1716 = vmatpush1.msra.mxu0 0.0
    %1717 = vmatprep.subr.mxu0 0.0
    %1718 = vmatpush1.msra.mxu0 0.0
    %1719 = vmatprep.subr.mxu0 0.0
    %1720 = vmatpush1.msra.mxu0 0.0
    %1721 = vmatprep.subr.mxu0 0.0
    %1722 = vmatpush1.msra.mxu0 0.0
    %1723 = vmatprep.subr.mxu0 0.0
    %1724 = vmatpush1.msra.mxu0 0.0
    %1725 = vmatprep.subr.mxu0 0.0
    %1726 = vmatpush1.msra.mxu0 0.0
    %1727 = vmatprep.subr.mxu0 0.0
    %1728 = vmatpush1.msra.mxu0 0.0
    %1729 = vmatprep.subr.mxu0 0.0
    %1730 = vmatpush1.msra.mxu0 0.0
    %1731 = vmatprep.subr.mxu0 0.0
    %1732 = vmatpush1.msra.mxu0 0.0
    %1733 = vmatprep.subr.mxu0 0.0
    %1734 = vmatpush1.msra.mxu0 0.0
    %1735 = vmatprep.subr.mxu0 0.0
    %1736 = vmatpush1.msra.mxu0 0.0
    %1737 = vmatprep.mubr.f32.mxu0 0.0
    %1738 = vmatmul.mubr.f32.gmra.mrb[0].mxu0 %v1671
    %v1739 = vpop.f32.mrb[0].mxu0
    %v1740 = vadd.f32 0.0, %v1739
    %v1741 = vpop.f32.mrb[0].mxu0
    %1742 = vdwg.mxu0
    %v1744 = vrot.slane %v1740, 1
    %v1745 = vrot.slane %v1740, 2
    %v1746 = vrot.slane %v1740, 3
    %v1747 = vrot.slane %v1740, 4
    %v1748 = vrot.slane %v1740, 5
    %v1749 = vrot.slane %v1740, 6
    %v1750 = vrot.slane %v1740, 7
    %v1759 = vadd.f32 %v1639, %v1740
    %v1760 = vadd.f32 %v1640, %v1744
    %v1761 = vadd.f32 %v1641, %v1745
    %v1762 = vadd.f32 %v1642, %v1746
    %v1763 = vadd.f32 %v1643, %v1747
    %v1764 = vadd.f32 %v1644, %v1748
    %v1765 = vadd.f32 %v1645, %v1749
    %v1766 = vadd.f32 %v1646, %v1750
    %v1767 = vxor.u32 %v1759, 2147483648
    %v1768 = vxor.u32 %v1760, 2147483648
    %v1769 = vxor.u32 %v1761, 2147483648
    %v1770 = vxor.u32 %v1762, 2147483648
    %v1771 = vxor.u32 %v1763, 2147483648
    %v1772 = vxor.u32 %v1764, 2147483648
    %v1773 = vxor.u32 %v1765, 2147483648
    %v1774 = vxor.u32 %v1766, 2147483648
    %v1775 = vmul.f32 %v1767, 1.442695
    %v1776 = vpow.pop %v1775
    %v1777 = vmul.f32 %v1768, 1.442695
    %v1778 = vpow.pop %v1777
    %v1779 = vmul.f32 %v1769, 1.442695
    %v1780 = vpow.pop %v1779
    %v1781 = vmul.f32 %v1770, 1.442695
    %v1782 = vpow.pop %v1781
    %v1783 = vmul.f32 %v1771, 1.442695
    %v1784 = vpow.pop %v1783
    %v1785 = vmul.f32 %v1772, 1.442695
    %v1786 = vpow.pop %v1785
    %v1787 = vmul.f32 %v1773, 1.442695
    %v1788 = vpow.pop %v1787
    %v1789 = vmul.f32 %v1774, 1.442695
    %v1790 = vpow.pop %v1789
    %v1791 = vadd.f32 %v1776, 1.0
    %v1792 = vadd.f32 %v1778, 1.0
    %v1793 = vadd.f32 %v1780, 1.0
    %v1794 = vadd.f32 %v1782, 1.0
    %v1795 = vadd.f32 %v1784, 1.0
    %v1796 = vadd.f32 %v1786, 1.0
    %v1797 = vadd.f32 %v1788, 1.0
    %v1798 = vadd.f32 %v1790, 1.0
    %v1799 = vrcp.pop %v1791
    %v1800 = vmul.f32 1.0, %v1799
    %v1801 = vrcp.pop %v1792
    %v1802 = vmul.f32 1.0, %v1801
    %v1803 = vrcp.pop %v1793
    %v1804 = vmul.f32 1.0, %v1803
    %v1805 = vrcp.pop %v1794
    %v1806 = vmul.f32 1.0, %v1805
    %v1807 = vrcp.pop %v1795
    %v1808 = vmul.f32 1.0, %v1807
    %v1809 = vrcp.pop %v1796
    %v1810 = vmul.f32 1.0, %v1809
    %v1811 = vrcp.pop %v1797
    %v1812 = vmul.f32 1.0, %v1811
    %v1813 = vrcp.pop %v1798
    %v1814 = vmul.f32 1.0, %v1813
    %v1815 = vtanh.pop %v1759
    %v1816 = vtanh.pop %v1760
    %v1817 = vtanh.pop %v1761
    %v1818 = vtanh.pop %v1762
    %v1819 = vtanh.pop %v1763
    %v1820 = vtanh.pop %v1764
    %v1821 = vtanh.pop %v1765
    %v1822 = vtanh.pop %v1766
    %v1823 = vmul.f32 %v1800, %v1583
    %v1824 = vmul.f32 %v1802, %v1584
    %v1825 = vmul.f32 %v1804, %v1585
    %v1826 = vmul.f32 %v1806, %v1586
    %v1827 = vmul.f32 %v1808, %v1587
    %v1828 = vmul.f32 %v1810, %v1588
    %v1829 = vmul.f32 %v1812, %v1589
    %v1830 = vmul.f32 %v1814, %v1590
    %1839 = vrot.lane.b32.xlu0 %v1815, 32
    %v1840 = vpop.permute.xlu0 %1839
    %1841 = vrot.lane.b32.xlu0 %v1816, 32
    %v1842 = vpop.permute.xlu0 %1841
    %1843 = vrot.lane.b32.xlu0 %v1817, 32
    %v1844 = vpop.permute.xlu0 %1843
    %1845 = vrot.lane.b32.xlu0 %v1818, 32
    %v1846 = vpop.permute.xlu0 %1845
    %1847 = vrot.lane.b32.xlu0 %v1819, 32
    %v1848 = vpop.permute.xlu0 %1847
    %1849 = vrot.lane.b32.xlu0 %v1820, 32
    %v1850 = vpop.permute.xlu0 %1849
    %1851 = vrot.lane.b32.xlu0 %v1821, 32
    %v1852 = vpop.permute.xlu0 %1851
    %1853 = vrot.lane.b32.xlu0 %v1822, 32
    %v1854 = vpop.permute.xlu0 %1853
    %v1863 = vmul.f32 %v1800, %v1840
    %v1864 = vmul.f32 %v1802, %v1842
    %v1865 = vmul.f32 %v1804, %v1844
    %v1866 = vmul.f32 %v1806, %v1846
    %v1867 = vmul.f32 %v1808, %v1848
    %v1868 = vmul.f32 %v1810, %v1850
    %v1869 = vmul.f32 %v1812, %v1852
    %v1870 = vmul.f32 %v1814, %v1854
    %1879 = vrot.lane.b32.xlu0 %v1863, 32
    %v1880 = vpop.permute.xlu0 %1879
    %1881 = vrot.lane.b32.xlu0 %v1864, 32
    %v1882 = vpop.permute.xlu0 %1881
    %1883 = vrot.lane.b32.xlu0 %v1865, 32
    %v1884 = vpop.permute.xlu0 %1883
    %1885 = vrot.lane.b32.xlu0 %v1866, 32
    %v1886 = vpop.permute.xlu0 %1885
    %1887 = vrot.lane.b32.xlu0 %v1867, 32
    %v1888 = vpop.permute.xlu0 %1887
    %1889 = vrot.lane.b32.xlu0 %v1868, 32
    %v1890 = vpop.permute.xlu0 %1889
    %1891 = vrot.lane.b32.xlu0 %v1869, 32
    %v1892 = vpop.permute.xlu0 %1891
    %1893 = vrot.lane.b32.xlu0 %v1870, 32
    %v1894 = vpop.permute.xlu0 %1893
    %v1903 = vadd.f32 %v1823, %v1880
    %v1904 = vadd.f32 %v1824, %v1882
    %v1905 = vadd.f32 %v1825, %v1884
    %v1906 = vadd.f32 %v1826, %v1886
    %v1907 = vadd.f32 %v1827, %v1888
    %v1908 = vadd.f32 %v1828, %v1890
    %v1909 = vadd.f32 %v1829, %v1892
    %v1910 = vadd.f32 %v1830, %v1894
    %v1911 = vtanh.pop %v1903
    %v1912 = vtanh.pop %v1904
    %v1913 = vtanh.pop %v1905
    %v1914 = vtanh.pop %v1906
    %v1915 = vtanh.pop %v1907
    %v1916 = vtanh.pop %v1908
    %v1917 = vtanh.pop %v1909
    %v1918 = vtanh.pop %v1910
    %1927 = vrot.lane.b32.xlu0 %v1911, 32
    %v1928 = vpop.permute.xlu0 %1927
    %1929 = vrot.lane.b32.xlu0 %v1912, 32
    %v1930 = vpop.permute.xlu0 %1929
    %1931 = vrot.lane.b32.xlu0 %v1913, 32
    %v1932 = vpop.permute.xlu0 %1931
    %1933 = vrot.lane.b32.xlu0 %v1914, 32
    %v1934 = vpop.permute.xlu0 %1933
    %1935 = vrot.lane.b32.xlu0 %v1915, 32
    %v1936 = vpop.permute.xlu0 %1935
    %1937 = vrot.lane.b32.xlu0 %v1916, 32
    %v1938 = vpop.permute.xlu0 %1937
    %1939 = vrot.lane.b32.xlu0 %v1917, 32
    %v1940 = vpop.permute.xlu0 %1939
    %1941 = vrot.lane.b32.xlu0 %v1918, 32
    %v1942 = vpop.permute.xlu0 %1941
    %v1951 = vmul.f32 %v1800, %v1928
    %v1952 = vmul.f32 %v1802, %v1930
    %v1953 = vmul.f32 %v1804, %v1932
    %v1954 = vmul.f32 %v1806, %v1934
    %v1955 = vmul.f32 %v1808, %v1936
    %v1956 = vmul.f32 %v1810, %v1938
    %v1957 = vmul.f32 %v1812, %v1940
    %v1958 = vmul.f32 %v1814, %v1942
    %v1959 = vld [vmem:[#allocation2 + $0x5] sm:$0x1]
    %v1960 = vld [vmem:[#allocation2 + $0xd] sm:$0x1]
    %v1961 = vld [vmem:[#allocation2 + $0x15] sm:$0x1]
    %v1962 = vld [vmem:[#allocation2 + $0x1d] sm:$0x1]
    %v1963 = vld [vmem:[#allocation2 + $0x25] sm:$0x1]
    %v1964 = vld [vmem:[#allocation2 + $0x2d] sm:$0x1]
    %v1965 = vld [vmem:[#allocation2 + $0x35] sm:$0x1]
    %v1966 = vld [vmem:[#allocation2 + $0x3d] sm:$0x1]
    %v1975 = vrot.slane %v1952, 7
    %v1976 = vsel %vm689, %v1975, %v1951
    %v1977 = vrot.slane %v1953, 6
    %v1978 = vsel %vm692, %v1977, %v1976
    %v1979 = vrot.slane %v1954, 5
    %v1980 = vsel %vm695, %v1979, %v1978
    %v1981 = vrot.slane %v1955, 4
    %v1982 = vsel %vm698, %v1981, %v1980
    %v1983 = vrot.slane %v1956, 3
    %v1984 = vsel %vm701, %v1983, %v1982
    %v1985 = vrot.slane %v1957, 2
    %v1986 = vsel %vm704, %v1985, %v1984
    %v1987 = vrot.slane %v1958, 1
    %v1988 = vsel %vm707, %v1987, %v1986
    %1989 = vrot.lane.b32.xlu0 %v1988, 64
    %v1990 = vpop.permute.xlu0 %1989
    %v1991 = vsel %vm382, %v1990, 0
    %1993 = vmatprep.subr.mxu0 0.0
    %1994 = vmatpush1.msra.mxu0 %v370
    %1995 = vmatprep.subr.mxu0 0.0
    %1996 = vmatpush1.msra.mxu0 %v371
    %1997 = vmatprep.subr.mxu0 0.0
    %1998 = vmatpush1.msra.mxu0 %v372
    %1999 = vmatprep.subr.mxu0 0.0
    %2000 = vmatpush1.msra.mxu0 %v373
    %2001 = vmatprep.subr.mxu0 0.0
    %2002 = vmatpush1.msra.mxu0 0.0
    %2003 = vmatprep.subr.mxu0 0.0
    %2004 = vmatpush1.msra.mxu0 0.0
    %2005 = vmatprep.subr.mxu0 0.0
    %2006 = vmatpush1.msra.mxu0 0.0
    %2007 = vmatprep.subr.mxu0 0.0
    %2008 = vmatpush1.msra.mxu0 0.0
    %2009 = vmatprep.subr.mxu0 0.0
    %2010 = vmatpush1.msra.mxu0 0.0
    %2011 = vmatprep.subr.mxu0 0.0
    %2012 = vmatpush1.msra.mxu0 0.0
    %2013 = vmatprep.subr.mxu0 0.0
    %2014 = vmatpush1.msra.mxu0 0.0
    %2015 = vmatprep.subr.mxu0 0.0
    %2016 = vmatpush1.msra.mxu0 0.0
    %2017 = vmatprep.subr.mxu0 0.0
    %2018 = vmatpush1.msra.mxu0 0.0
    %2019 = vmatprep.subr.mxu0 0.0
    %2020 = vmatpush1.msra.mxu0 0.0
    %2021 = vmatprep.subr.mxu0 0.0
    %2022 = vmatpush1.msra.mxu0 0.0
    %2023 = vmatprep.subr.mxu0 0.0
    %2024 = vmatpush1.msra.mxu0 0.0
    %2025 = vmatprep.subr.mxu0 0.0
    %2026 = vmatpush1.msra.mxu0 0.0
    %2027 = vmatprep.subr.mxu0 0.0
    %2028 = vmatpush1.msra.mxu0 0.0
    %2029 = vmatprep.subr.mxu0 0.0
    %2030 = vmatpush1.msra.mxu0 0.0
    %2031 = vmatprep.subr.mxu0 0.0
    %2032 = vmatpush1.msra.mxu0 0.0
    %2033 = vmatprep.subr.mxu0 0.0
    %2034 = vmatpush1.msra.mxu0 0.0
    %2035 = vmatprep.subr.mxu0 0.0
    %2036 = vmatpush1.msra.mxu0 0.0
    %2037 = vmatprep.subr.mxu0 0.0
    %2038 = vmatpush1.msra.mxu0 0.0
    %2039 = vmatprep.subr.mxu0 0.0
    %2040 = vmatpush1.msra.mxu0 0.0
    %2041 = vmatprep.subr.mxu0 0.0
    %2042 = vmatpush1.msra.mxu0 0.0
    %2043 = vmatprep.subr.mxu0 0.0
    %2044 = vmatpush1.msra.mxu0 0.0
    %2045 = vmatprep.subr.mxu0 0.0
    %2046 = vmatpush1.msra.mxu0 0.0
    %2047 = vmatprep.subr.mxu0 0.0
    %2048 = vmatpush1.msra.mxu0 0.0
    %2049 = vmatprep.subr.mxu0 0.0
    %2050 = vmatpush1.msra.mxu0 0.0
    %2051 = vmatprep.subr.mxu0 0.0
    %2052 = vmatpush1.msra.mxu0 0.0
    %2053 = vmatprep.subr.mxu0 0.0
    %2054 = vmatpush1.msra.mxu0 0.0
    %2055 = vmatprep.subr.mxu0 0.0
    %2056 = vmatpush1.msra.mxu0 0.0
    %2057 = vmatprep.mubr.f32.mxu0 0.0
    %2058 = vmatmul.mubr.f32.gmra.mrb[0].mxu0 %v1991
    %v2059 = vpop.f32.mrb[0].mxu0
    %v2060 = vadd.f32 0.0, %v2059
    %v2061 = vpop.f32.mrb[0].mxu0
    %2062 = vdwg.mxu0
    %v2064 = vrot.slane %v2060, 1
    %v2065 = vrot.slane %v2060, 2
    %v2066 = vrot.slane %v2060, 3
    %v2067 = vrot.slane %v2060, 4
    %v2068 = vrot.slane %v2060, 5
    %v2069 = vrot.slane %v2060, 6
    %v2070 = vrot.slane %v2060, 7
    %v2079 = vadd.f32 %v1959, %v2060
    %v2080 = vadd.f32 %v1960, %v2064
    %v2081 = vadd.f32 %v1961, %v2065
    %v2082 = vadd.f32 %v1962, %v2066
    %v2083 = vadd.f32 %v1963, %v2067
    %v2084 = vadd.f32 %v1964, %v2068
    %v2085 = vadd.f32 %v1965, %v2069
    %v2086 = vadd.f32 %v1966, %v2070
    %v2087 = vxor.u32 %v2079, 2147483648
    %v2088 = vxor.u32 %v2080, 2147483648
    %v2089 = vxor.u32 %v2081, 2147483648
    %v2090 = vxor.u32 %v2082, 2147483648
    %v2091 = vxor.u32 %v2083, 2147483648
    %v2092 = vxor.u32 %v2084, 2147483648
    %v2093 = vxor.u32 %v2085, 2147483648
    %v2094 = vxor.u32 %v2086, 2147483648
    %v2095 = vmul.f32 %v2087, 1.442695
    %v2096 = vpow.pop %v2095
    %v2097 = vmul.f32 %v2088, 1.442695
    %v2098 = vpow.pop %v2097
    %v2099 = vmul.f32 %v2089, 1.442695
    %v2100 = vpow.pop %v2099
    %v2101 = vmul.f32 %v2090, 1.442695
    %v2102 = vpow.pop %v2101
    %v2103 = vmul.f32 %v2091, 1.442695
    %v2104 = vpow.pop %v2103
    %v2105 = vmul.f32 %v2092, 1.442695
    %v2106 = vpow.pop %v2105
    %v2107 = vmul.f32 %v2093, 1.442695
    %v2108 = vpow.pop %v2107
    %v2109 = vmul.f32 %v2094, 1.442695
    %v2110 = vpow.pop %v2109
    %v2111 = vadd.f32 %v2096, 1.0
    %v2112 = vadd.f32 %v2098, 1.0
    %v2113 = vadd.f32 %v2100, 1.0
    %v2114 = vadd.f32 %v2102, 1.0
    %v2115 = vadd.f32 %v2104, 1.0
    %v2116 = vadd.f32 %v2106, 1.0
    %v2117 = vadd.f32 %v2108, 1.0
    %v2118 = vadd.f32 %v2110, 1.0
    %v2119 = vrcp.pop %v2111
    %v2120 = vmul.f32 1.0, %v2119
    %v2121 = vrcp.pop %v2112
    %v2122 = vmul.f32 1.0, %v2121
    %v2123 = vrcp.pop %v2113
    %v2124 = vmul.f32 1.0, %v2123
    %v2125 = vrcp.pop %v2114
    %v2126 = vmul.f32 1.0, %v2125
    %v2127 = vrcp.pop %v2115
    %v2128 = vmul.f32 1.0, %v2127
    %v2129 = vrcp.pop %v2116
    %v2130 = vmul.f32 1.0, %v2129
    %v2131 = vrcp.pop %v2117
    %v2132 = vmul.f32 1.0, %v2131
    %v2133 = vrcp.pop %v2118
    %v2134 = vmul.f32 1.0, %v2133
    %v2135 = vtanh.pop %v2079
    %v2136 = vtanh.pop %v2080
    %v2137 = vtanh.pop %v2081
    %v2138 = vtanh.pop %v2082
    %v2139 = vtanh.pop %v2083
    %v2140 = vtanh.pop %v2084
    %v2141 = vtanh.pop %v2085
    %v2142 = vtanh.pop %v2086
    %v2143 = vmul.f32 %v2120, %v1903
    %v2144 = vmul.f32 %v2122, %v1904
    %v2145 = vmul.f32 %v2124, %v1905
    %v2146 = vmul.f32 %v2126, %v1906
    %v2147 = vmul.f32 %v2128, %v1907
    %v2148 = vmul.f32 %v2130, %v1908
    %v2149 = vmul.f32 %v2132, %v1909
    %v2150 = vmul.f32 %v2134, %v1910
    %2159 = vrot.lane.b32.xlu0 %v2135, 32
    %v2160 = vpop.permute.xlu0 %2159
    %2161 = vrot.lane.b32.xlu0 %v2136, 32
    %v2162 = vpop.permute.xlu0 %2161
    %2163 = vrot.lane.b32.xlu0 %v2137, 32
    %v2164 = vpop.permute.xlu0 %2163
    %2165 = vrot.lane.b32.xlu0 %v2138, 32
    %v2166 = vpop.permute.xlu0 %2165
    %2167 = vrot.lane.b32.xlu0 %v2139, 32
    %v2168 = vpop.permute.xlu0 %2167
    %2169 = vrot.lane.b32.xlu0 %v2140, 32
    %v2170 = vpop.permute.xlu0 %2169
    %2171 = vrot.lane.b32.xlu0 %v2141, 32
    %v2172 = vpop.permute.xlu0 %2171
    %2173 = vrot.lane.b32.xlu0 %v2142, 32
    %v2174 = vpop.permute.xlu0 %2173
    %v2183 = vmul.f32 %v2120, %v2160
    %v2184 = vmul.f32 %v2122, %v2162
    %v2185 = vmul.f32 %v2124, %v2164
    %v2186 = vmul.f32 %v2126, %v2166
    %v2187 = vmul.f32 %v2128, %v2168
    %v2188 = vmul.f32 %v2130, %v2170
    %v2189 = vmul.f32 %v2132, %v2172
    %v2190 = vmul.f32 %v2134, %v2174
    %2199 = vrot.lane.b32.xlu0 %v2183, 32
    %v2200 = vpop.permute.xlu0 %2199
    %2201 = vrot.lane.b32.xlu0 %v2184, 32
    %v2202 = vpop.permute.xlu0 %2201
    %2203 = vrot.lane.b32.xlu0 %v2185, 32
    %v2204 = vpop.permute.xlu0 %2203
    %2205 = vrot.lane.b32.xlu0 %v2186, 32
    %v2206 = vpop.permute.xlu0 %2205
    %2207 = vrot.lane.b32.xlu0 %v2187, 32
    %v2208 = vpop.permute.xlu0 %2207
    %2209 = vrot.lane.b32.xlu0 %v2188, 32
    %v2210 = vpop.permute.xlu0 %2209
    %2211 = vrot.lane.b32.xlu0 %v2189, 32
    %v2212 = vpop.permute.xlu0 %2211
    %2213 = vrot.lane.b32.xlu0 %v2190, 32
    %v2214 = vpop.permute.xlu0 %2213
    %v2223 = vadd.f32 %v2143, %v2200
    %v2224 = vadd.f32 %v2144, %v2202
    %v2225 = vadd.f32 %v2145, %v2204
    %v2226 = vadd.f32 %v2146, %v2206
    %v2227 = vadd.f32 %v2147, %v2208
    %v2228 = vadd.f32 %v2148, %v2210
    %v2229 = vadd.f32 %v2149, %v2212
    %v2230 = vadd.f32 %v2150, %v2214
    %v2231 = vtanh.pop %v2223
    %v2232 = vtanh.pop %v2224
    %v2233 = vtanh.pop %v2225
    %v2234 = vtanh.pop %v2226
    %v2235 = vtanh.pop %v2227
    %v2236 = vtanh.pop %v2228
    %v2237 = vtanh.pop %v2229
    %v2238 = vtanh.pop %v2230
    %2247 = vrot.lane.b32.xlu0 %v2231, 32
    %v2248 = vpop.permute.xlu0 %2247
    %2249 = vrot.lane.b32.xlu0 %v2232, 32
    %v2250 = vpop.permute.xlu0 %2249
    %2251 = vrot.lane.b32.xlu0 %v2233, 32
    %v2252 = vpop.permute.xlu0 %2251
    %2253 = vrot.lane.b32.xlu0 %v2234, 32
    %v2254 = vpop.permute.xlu0 %2253
    %2255 = vrot.lane.b32.xlu0 %v2235, 32
    %v2256 = vpop.permute.xlu0 %2255
    %2257 = vrot.lane.b32.xlu0 %v2236, 32
    %v2258 = vpop.permute.xlu0 %2257
    %2259 = vrot.lane.b32.xlu0 %v2237, 32
    %v2260 = vpop.permute.xlu0 %2259
    %2261 = vrot.lane.b32.xlu0 %v2238, 32
    %v2262 = vpop.permute.xlu0 %2261
    %v2271 = vmul.f32 %v2120, %v2248
    %v2272 = vmul.f32 %v2122, %v2250
    %v2273 = vmul.f32 %v2124, %v2252
    %v2274 = vmul.f32 %v2126, %v2254
    %v2275 = vmul.f32 %v2128, %v2256
    %v2276 = vmul.f32 %v2130, %v2258
    %v2277 = vmul.f32 %v2132, %v2260
    %v2278 = vmul.f32 %v2134, %v2262
    %v2279 = vld [vmem:[#allocation2 + $0x6] sm:$0x1]
    %v2280 = vld [vmem:[#allocation2 + $0xe] sm:$0x1]
    %v2281 = vld [vmem:[#allocation2 + $0x16] sm:$0x1]
    %v2282 = vld [vmem:[#allocation2 + $0x1e] sm:$0x1]
    %v2283 = vld [vmem:[#allocation2 + $0x26] sm:$0x1]
    %v2284 = vld [vmem:[#allocation2 + $0x2e] sm:$0x1]
    %v2285 = vld [vmem:[#allocation2 + $0x36] sm:$0x1]
    %v2286 = vld [vmem:[#allocation2 + $0x3e] sm:$0x1]
    %v2295 = vrot.slane %v2272, 7
    %v2296 = vsel %vm689, %v2295, %v2271
    %v2297 = vrot.slane %v2273, 6
    %v2298 = vsel %vm692, %v2297, %v2296
    %v2299 = vrot.slane %v2274, 5
    %v2300 = vsel %vm695, %v2299, %v2298
    %v2301 = vrot.slane %v2275, 4
    %v2302 = vsel %vm698, %v2301, %v2300
    %v2303 = vrot.slane %v2276, 3
    %v2304 = vsel %vm701, %v2303, %v2302
    %v2305 = vrot.slane %v2277, 2
    %v2306 = vsel %vm704, %v2305, %v2304
    %v2307 = vrot.slane %v2278, 1
    %v2308 = vsel %vm707, %v2307, %v2306
    %2309 = vrot.lane.b32.xlu0 %v2308, 64
    %v2310 = vpop.permute.xlu0 %2309
    %v2311 = vsel %vm382, %v2310, 0
    %2313 = vmatprep.subr.mxu0 0.0
    %2314 = vmatpush1.msra.mxu0 %v370
    %2315 = vmatprep.subr.mxu0 0.0
    %2316 = vmatpush1.msra.mxu0 %v371
    %2317 = vmatprep.subr.mxu0 0.0
    %2318 = vmatpush1.msra.mxu0 %v372
    %2319 = vmatprep.subr.mxu0 0.0
    %2320 = vmatpush1.msra.mxu0 %v373
    %2321 = vmatprep.subr.mxu0 0.0
    %2322 = vmatpush1.msra.mxu0 0.0
    %2323 = vmatprep.subr.mxu0 0.0
    %2324 = vmatpush1.msra.mxu0 0.0
    %2325 = vmatprep.subr.mxu0 0.0
    %2326 = vmatpush1.msra.mxu0 0.0
    %2327 = vmatprep.subr.mxu0 0.0
    %2328 = vmatpush1.msra.mxu0 0.0
    %2329 = vmatprep.subr.mxu0 0.0
    %2330 = vmatpush1.msra.mxu0 0.0
    %2331 = vmatprep.subr.mxu0 0.0
    %2332 = vmatpush1.msra.mxu0 0.0
    %2333 = vmatprep.subr.mxu0 0.0
    %2334 = vmatpush1.msra.mxu0 0.0
    %2335 = vmatprep.subr.mxu0 0.0
    %2336 = vmatpush1.msra.mxu0 0.0
    %2337 = vmatprep.subr.mxu0 0.0
    %2338 = vmatpush1.msra.mxu0 0.0
    %2339 = vmatprep.subr.mxu0 0.0
    %2340 = vmatpush1.msra.mxu0 0.0
    %2341 = vmatprep.subr.mxu0 0.0
    %2342 = vmatpush1.msra.mxu0 0.0
    %2343 = vmatprep.subr.mxu0 0.0
    %2344 = vmatpush1.msra.mxu0 0.0
    %2345 = vmatprep.subr.mxu0 0.0
    %2346 = vmatpush1.msra.mxu0 0.0
    %2347 = vmatprep.subr.mxu0 0.0
    %2348 = vmatpush1.msra.mxu0 0.0
    %2349 = vmatprep.subr.mxu0 0.0
    %2350 = vmatpush1.msra.mxu0 0.0
    %2351 = vmatprep.subr.mxu0 0.0
    %2352 = vmatpush1.msra.mxu0 0.0
    %2353 = vmatprep.subr.mxu0 0.0
    %2354 = vmatpush1.msra.mxu0 0.0
    %2355 = vmatprep.subr.mxu0 0.0
    %2356 = vmatpush1.msra.mxu0 0.0
    %2357 = vmatprep.subr.mxu0 0.0
    %2358 = vmatpush1.msra.mxu0 0.0
    %2359 = vmatprep.subr.mxu0 0.0
    %2360 = vmatpush1.msra.mxu0 0.0
    %2361 = vmatprep.subr.mxu0 0.0
    %2362 = vmatpush1.msra.mxu0 0.0
    %2363 = vmatprep.subr.mxu0 0.0
    %2364 = vmatpush1.msra.mxu0 0.0
    %2365 = vmatprep.subr.mxu0 0.0
    %2366 = vmatpush1.msra.mxu0 0.0
    %2367 = vmatprep.subr.mxu0 0.0
    %2368 = vmatpush1.msra.mxu0 0.0
    %2369 = vmatprep.subr.mxu0 0.0
    %2370 = vmatpush1.msra.mxu0 0.0
    %2371 = vmatprep.subr.mxu0 0.0
    %2372 = vmatpush1.msra.mxu0 0.0
    %2373 = vmatprep.subr.mxu0 0.0
    %2374 = vmatpush1.msra.mxu0 0.0
    %2375 = vmatprep.subr.mxu0 0.0
    %2376 = vmatpush1.msra.mxu0 0.0
    %2377 = vmatprep.mubr.f32.mxu0 0.0
    %2378 = vmatmul.mubr.f32.gmra.mrb[0].mxu0 %v2311
    %v2379 = vpop.f32.mrb[0].mxu0
    %v2380 = vadd.f32 0.0, %v2379
    %v2381 = vpop.f32.mrb[0].mxu0
    %2382 = vdwg.mxu0
    %v2384 = vrot.slane %v2380, 1
    %v2385 = vrot.slane %v2380, 2
    %v2386 = vrot.slane %v2380, 3
    %v2387 = vrot.slane %v2380, 4
    %v2388 = vrot.slane %v2380, 5
    %v2389 = vrot.slane %v2380, 6
    %v2390 = vrot.slane %v2380, 7
    %v2399 = vadd.f32 %v2279, %v2380
    %v2400 = vadd.f32 %v2280, %v2384
    %v2401 = vadd.f32 %v2281, %v2385
    %v2402 = vadd.f32 %v2282, %v2386
    %v2403 = vadd.f32 %v2283, %v2387
    %v2404 = vadd.f32 %v2284, %v2388
    %v2405 = vadd.f32 %v2285, %v2389
    %v2406 = vadd.f32 %v2286, %v2390
    %v2407 = vxor.u32 %v2399, 2147483648
    %v2408 = vxor.u32 %v2400, 2147483648
    %v2409 = vxor.u32 %v2401, 2147483648
    %v2410 = vxor.u32 %v2402, 2147483648
    %v2411 = vxor.u32 %v2403, 2147483648
    %v2412 = vxor.u32 %v2404, 2147483648
    %v2413 = vxor.u32 %v2405, 2147483648
    %v2414 = vxor.u32 %v2406, 2147483648
    %v2415 = vmul.f32 %v2407, 1.442695
    %v2416 = vpow.pop %v2415
    %v2417 = vmul.f32 %v2408, 1.442695
    %v2418 = vpow.pop %v2417
    %v2419 = vmul.f32 %v2409, 1.442695
    %v2420 = vpow.pop %v2419
    %v2421 = vmul.f32 %v2410, 1.442695
    %v2422 = vpow.pop %v2421
    %v2423 = vmul.f32 %v2411, 1.442695
    %v2424 = vpow.pop %v2423
    %v2425 = vmul.f32 %v2412, 1.442695
    %v2426 = vpow.pop %v2425
    %v2427 = vmul.f32 %v2413, 1.442695
    %v2428 = vpow.pop %v2427
    %v2429 = vmul.f32 %v2414, 1.442695
    %v2430 = vpow.pop %v2429
    %v2431 = vadd.f32 %v2416, 1.0
    %v2432 = vadd.f32 %v2418, 1.0
    %v2433 = vadd.f32 %v2420, 1.0
    %v2434 = vadd.f32 %v2422, 1.0
    %v2435 = vadd.f32 %v2424, 1.0
    %v2436 = vadd.f32 %v2426, 1.0
    %v2437 = vadd.f32 %v2428, 1.0
    %v2438 = vadd.f32 %v2430, 1.0
    %v2439 = vrcp.pop %v2431
    %v2440 = vmul.f32 1.0, %v2439
    %v2441 = vrcp.pop %v2432
    %v2442 = vmul.f32 1.0, %v2441
    %v2443 = vrcp.pop %v2433
    %v2444 = vmul.f32 1.0, %v2443
    %v2445 = vrcp.pop %v2434
    %v2446 = vmul.f32 1.0, %v2445
    %v2447 = vrcp.pop %v2435
    %v2448 = vmul.f32 1.0, %v2447
    %v2449 = vrcp.pop %v2436
    %v2450 = vmul.f32 1.0, %v2449
    %v2451 = vrcp.pop %v2437
    %v2452 = vmul.f32 1.0, %v2451
    %v2453 = vrcp.pop %v2438
    %v2454 = vmul.f32 1.0, %v2453
    %v2455 = vtanh.pop %v2399
    %v2456 = vtanh.pop %v2400
    %v2457 = vtanh.pop %v2401
    %v2458 = vtanh.pop %v2402
    %v2459 = vtanh.pop %v2403
    %v2460 = vtanh.pop %v2404
    %v2461 = vtanh.pop %v2405
    %v2462 = vtanh.pop %v2406
    %v2463 = vmul.f32 %v2440, %v2223
    %v2464 = vmul.f32 %v2442, %v2224
    %v2465 = vmul.f32 %v2444, %v2225
    %v2466 = vmul.f32 %v2446, %v2226
    %v2467 = vmul.f32 %v2448, %v2227
    %v2468 = vmul.f32 %v2450, %v2228
    %v2469 = vmul.f32 %v2452, %v2229
    %v2470 = vmul.f32 %v2454, %v2230
    %2479 = vrot.lane.b32.xlu0 %v2455, 32
    %v2480 = vpop.permute.xlu0 %2479
    %2481 = vrot.lane.b32.xlu0 %v2456, 32
    %v2482 = vpop.permute.xlu0 %2481
    %2483 = vrot.lane.b32.xlu0 %v2457, 32
    %v2484 = vpop.permute.xlu0 %2483
    %2485 = vrot.lane.b32.xlu0 %v2458, 32
    %v2486 = vpop.permute.xlu0 %2485
    %2487 = vrot.lane.b32.xlu0 %v2459, 32
    %v2488 = vpop.permute.xlu0 %2487
    %2489 = vrot.lane.b32.xlu0 %v2460, 32
    %v2490 = vpop.permute.xlu0 %2489
    %2491 = vrot.lane.b32.xlu0 %v2461, 32
    %v2492 = vpop.permute.xlu0 %2491
    %2493 = vrot.lane.b32.xlu0 %v2462, 32
    %v2494 = vpop.permute.xlu0 %2493
    %v2503 = vmul.f32 %v2440, %v2480
    %v2504 = vmul.f32 %v2442, %v2482
    %v2505 = vmul.f32 %v2444, %v2484
    %v2506 = vmul.f32 %v2446, %v2486
    %v2507 = vmul.f32 %v2448, %v2488
    %v2508 = vmul.f32 %v2450, %v2490
    %v2509 = vmul.f32 %v2452, %v2492
    %v2510 = vmul.f32 %v2454, %v2494
    %2519 = vrot.lane.b32.xlu0 %v2503, 32
    %v2520 = vpop.permute.xlu0 %2519
    %2521 = vrot.lane.b32.xlu0 %v2504, 32
    %v2522 = vpop.permute.xlu0 %2521
    %2523 = vrot.lane.b32.xlu0 %v2505, 32
    %v2524 = vpop.permute.xlu0 %2523
    %2525 = vrot.lane.b32.xlu0 %v2506, 32
    %v2526 = vpop.permute.xlu0 %2525
    %2527 = vrot.lane.b32.xlu0 %v2507, 32
    %v2528 = vpop.permute.xlu0 %2527
    %2529 = vrot.lane.b32.xlu0 %v2508, 32
    %v2530 = vpop.permute.xlu0 %2529
    %2531 = vrot.lane.b32.xlu0 %v2509, 32
    %v2532 = vpop.permute.xlu0 %2531
    %2533 = vrot.lane.b32.xlu0 %v2510, 32
    %v2534 = vpop.permute.xlu0 %2533
    %v2543 = vadd.f32 %v2463, %v2520
    %v2544 = vadd.f32 %v2464, %v2522
    %v2545 = vadd.f32 %v2465, %v2524
    %v2546 = vadd.f32 %v2466, %v2526
    %v2547 = vadd.f32 %v2467, %v2528
    %v2548 = vadd.f32 %v2468, %v2530
    %v2549 = vadd.f32 %v2469, %v2532
    %v2550 = vadd.f32 %v2470, %v2534
    %v2551 = vtanh.pop %v2543
    %v2552 = vtanh.pop %v2544
    %v2553 = vtanh.pop %v2545
    %v2554 = vtanh.pop %v2546
    %v2555 = vtanh.pop %v2547
    %v2556 = vtanh.pop %v2548
    %v2557 = vtanh.pop %v2549
    %v2558 = vtanh.pop %v2550
    %2567 = vrot.lane.b32.xlu0 %v2551, 32
    %v2568 = vpop.permute.xlu0 %2567
    %2569 = vrot.lane.b32.xlu0 %v2552, 32
    %v2570 = vpop.permute.xlu0 %2569
    %2571 = vrot.lane.b32.xlu0 %v2553, 32
    %v2572 = vpop.permute.xlu0 %2571
    %2573 = vrot.lane.b32.xlu0 %v2554, 32
    %v2574 = vpop.permute.xlu0 %2573
    %2575 = vrot.lane.b32.xlu0 %v2555, 32
    %v2576 = vpop.permute.xlu0 %2575
    %2577 = vrot.lane.b32.xlu0 %v2556, 32
    %v2578 = vpop.permute.xlu0 %2577
    %2579 = vrot.lane.b32.xlu0 %v2557, 32
    %v2580 = vpop.permute.xlu0 %2579
    %2581 = vrot.lane.b32.xlu0 %v2558, 32
    %v2582 = vpop.permute.xlu0 %2581
    %v2591 = vmul.f32 %v2440, %v2568
    %v2592 = vmul.f32 %v2442, %v2570
    %v2593 = vmul.f32 %v2444, %v2572
    %v2594 = vmul.f32 %v2446, %v2574
    %v2595 = vmul.f32 %v2448, %v2576
    %v2596 = vmul.f32 %v2450, %v2578
    %v2597 = vmul.f32 %v2452, %v2580
    %v2598 = vmul.f32 %v2454, %v2582
    %v2599 = vld [vmem:[#allocation2 + $0x7] sm:$0x1]
    %v2600 = vld [vmem:[#allocation2 + $0xf] sm:$0x1]
    %v2601 = vld [vmem:[#allocation2 + $0x17] sm:$0x1]
    %v2602 = vld [vmem:[#allocation2 + $0x1f] sm:$0x1]
    %v2603 = vld [vmem:[#allocation2 + $0x27] sm:$0x1]
    %v2604 = vld [vmem:[#allocation2 + $0x2f] sm:$0x1]
    %v2605 = vld [vmem:[#allocation2 + $0x37] sm:$0x1]
    %v2606 = vld [vmem:[#allocation2 + $0x3f] sm:$0x1]
    %v2615 = vrot.slane %v2592, 7
    %v2616 = vsel %vm689, %v2615, %v2591
    %v2617 = vrot.slane %v2593, 6
    %v2618 = vsel %vm692, %v2617, %v2616
    %v2619 = vrot.slane %v2594, 5
    %v2620 = vsel %vm695, %v2619, %v2618
    %v2621 = vrot.slane %v2595, 4
    %v2622 = vsel %vm698, %v2621, %v2620
    %v2623 = vrot.slane %v2596, 3
    %v2624 = vsel %vm701, %v2623, %v2622
    %v2625 = vrot.slane %v2597, 2
    %v2626 = vsel %vm704, %v2625, %v2624
    %v2627 = vrot.slane %v2598, 1
    %v2628 = vsel %vm707, %v2627, %v2626
    %2629 = vrot.lane.b32.xlu0 %v2628, 64
    %v2630 = vpop.permute.xlu0 %2629
    %v2631 = vsel %vm382, %v2630, 0
    %2633 = vmatprep.subr.mxu0 0.0
    %2634 = vmatpush1.msra.mxu0 %v370
    %2635 = vmatprep.subr.mxu0 0.0
    %2636 = vmatpush1.msra.mxu0 %v371
    %2637 = vmatprep.subr.mxu0 0.0
    %2638 = vmatpush1.msra.mxu0 %v372
    %2639 = vmatprep.subr.mxu0 0.0
    %2640 = vmatpush1.msra.mxu0 %v373
    %2641 = vmatprep.subr.mxu0 0.0
    %2642 = vmatpush1.msra.mxu0 0.0
    %2643 = vmatprep.subr.mxu0 0.0
    %2644 = vmatpush1.msra.mxu0 0.0
    %2645 = vmatprep.subr.mxu0 0.0
    %2646 = vmatpush1.msra.mxu0 0.0
    %2647 = vmatprep.subr.mxu0 0.0
    %2648 = vmatpush1.msra.mxu0 0.0
    %2649 = vmatprep.subr.mxu0 0.0
    %2650 = vmatpush1.msra.mxu0 0.0
    %2651 = vmatprep.subr.mxu0 0.0
    %2652 = vmatpush1.msra.mxu0 0.0
    %2653 = vmatprep.subr.mxu0 0.0
    %2654 = vmatpush1.msra.mxu0 0.0
    %2655 = vmatprep.subr.mxu0 0.0
    %2656 = vmatpush1.msra.mxu0 0.0
    %2657 = vmatprep.subr.mxu0 0.0
    %2658 = vmatpush1.msra.mxu0 0.0
    %2659 = vmatprep.subr.mxu0 0.0
    %2660 = vmatpush1.msra.mxu0 0.0
    %2661 = vmatprep.subr.mxu0 0.0
    %2662 = vmatpush1.msra.mxu0 0.0
    %2663 = vmatprep.subr.mxu0 0.0
    %2664 = vmatpush1.msra.mxu0 0.0
    %2665 = vmatprep.subr.mxu0 0.0
    %2666 = vmatpush1.msra.mxu0 0.0
    %2667 = vmatprep.subr.mxu0 0.0
    %2668 = vmatpush1.msra.mxu0 0.0
    %2669 = vmatprep.subr.mxu0 0.0
    %2670 = vmatpush1.msra.mxu0 0.0
    %2671 = vmatprep.subr.mxu0 0.0
    %2672 = vmatpush1.msra.mxu0 0.0
    %2673 = vmatprep.subr.mxu0 0.0
    %2674 = vmatpush1.msra.mxu0 0.0
    %2675 = vmatprep.subr.mxu0 0.0
    %2676 = vmatpush1.msra.mxu0 0.0
    %2677 = vmatprep.subr.mxu0 0.0
    %2678 = vmatpush1.msra.mxu0 0.0
    %2679 = vmatprep.subr.mxu0 0.0
    %2680 = vmatpush1.msra.mxu0 0.0
    %2681 = vmatprep.subr.mxu0 0.0
    %2682 = vmatpush1.msra.mxu0 0.0
    %2683 = vmatprep.subr.mxu0 0.0
    %2684 = vmatpush1.msra.mxu0 0.0
    %2685 = vmatprep.subr.mxu0 0.0
    %2686 = vmatpush1.msra.mxu0 0.0
    %2687 = vmatprep.subr.mxu0 0.0
    %2688 = vmatpush1.msra.mxu0 0.0
    %2689 = vmatprep.subr.mxu0 0.0
    %2690 = vmatpush1.msra.mxu0 0.0
    %2691 = vmatprep.subr.mxu0 0.0
    %2692 = vmatpush1.msra.mxu0 0.0
    %2693 = vmatprep.subr.mxu0 0.0
    %2694 = vmatpush1.msra.mxu0 0.0
    %2695 = vmatprep.subr.mxu0 0.0
    %2696 = vmatpush1.msra.mxu0 0.0
    %2697 = vmatprep.mubr.f32.mxu0 0.0
    %2698 = vmatmul.mubr.f32.gmra.mrb[0].mxu0 %v2631
    %v2699 = vpop.f32.mrb[0].mxu0
    %v2700 = vadd.f32 0.0, %v2699
    %v2701 = vpop.f32.mrb[0].mxu0
    %2702 = vdwg.mxu0
    %v2704 = vrot.slane %v2700, 1
    %v2705 = vrot.slane %v2700, 2
    %v2706 = vrot.slane %v2700, 3
    %v2707 = vrot.slane %v2700, 4
    %v2708 = vrot.slane %v2700, 5
    %v2709 = vrot.slane %v2700, 6
    %v2710 = vrot.slane %v2700, 7
    %v2719 = vadd.f32 %v2599, %v2700
    %v2720 = vadd.f32 %v2600, %v2704
    %v2721 = vadd.f32 %v2601, %v2705
    %v2722 = vadd.f32 %v2602, %v2706
    %v2723 = vadd.f32 %v2603, %v2707
    %v2724 = vadd.f32 %v2604, %v2708
    %v2725 = vadd.f32 %v2605, %v2709
    %v2726 = vadd.f32 %v2606, %v2710
    %v2727 = vxor.u32 %v2719, 2147483648
    %v2728 = vxor.u32 %v2720, 2147483648
    %v2729 = vxor.u32 %v2721, 2147483648
    %v2730 = vxor.u32 %v2722, 2147483648
    %v2731 = vxor.u32 %v2723, 2147483648
    %v2732 = vxor.u32 %v2724, 2147483648
    %v2733 = vxor.u32 %v2725, 2147483648
    %v2734 = vxor.u32 %v2726, 2147483648
    %v2735 = vmul.f32 %v2727, 1.442695
    %v2736 = vpow.pop %v2735
    %v2737 = vmul.f32 %v2728, 1.442695
    %v2738 = vpow.pop %v2737
    %v2739 = vmul.f32 %v2729, 1.442695
    %v2740 = vpow.pop %v2739
    %v2741 = vmul.f32 %v2730, 1.442695
    %v2742 = vpow.pop %v2741
    %v2743 = vmul.f32 %v2731, 1.442695
    %v2744 = vpow.pop %v2743
    %v2745 = vmul.f32 %v2732, 1.442695
    %v2746 = vpow.pop %v2745
    %v2747 = vmul.f32 %v2733, 1.442695
    %v2748 = vpow.pop %v2747
    %v2749 = vmul.f32 %v2734, 1.442695
    %v2750 = vpow.pop %v2749
    %v2751 = vadd.f32 %v2736, 1.0
    %v2752 = vadd.f32 %v2738, 1.0
    %v2753 = vadd.f32 %v2740, 1.0
    %v2754 = vadd.f32 %v2742, 1.0
    %v2755 = vadd.f32 %v2744, 1.0
    %v2756 = vadd.f32 %v2746, 1.0
    %v2757 = vadd.f32 %v2748, 1.0
    %v2758 = vadd.f32 %v2750, 1.0
    %v2759 = vrcp.pop %v2751
    %v2760 = vmul.f32 1.0, %v2759
    %v2761 = vrcp.pop %v2752
    %v2762 = vmul.f32 1.0, %v2761
    %v2763 = vrcp.pop %v2753
    %v2764 = vmul.f32 1.0, %v2763
    %v2765 = vrcp.pop %v2754
    %v2766 = vmul.f32 1.0, %v2765
    %v2767 = vrcp.pop %v2755
    %v2768 = vmul.f32 1.0, %v2767
    %v2769 = vrcp.pop %v2756
    %v2770 = vmul.f32 1.0, %v2769
    %v2771 = vrcp.pop %v2757
    %v2772 = vmul.f32 1.0, %v2771
    %v2773 = vrcp.pop %v2758
    %v2774 = vmul.f32 1.0, %v2773
    %v2775 = vtanh.pop %v2719
    %v2776 = vtanh.pop %v2720
    %v2777 = vtanh.pop %v2721
    %v2778 = vtanh.pop %v2722
    %v2779 = vtanh.pop %v2723
    %v2780 = vtanh.pop %v2724
    %v2781 = vtanh.pop %v2725
    %v2782 = vtanh.pop %v2726
    %v2783 = vmul.f32 %v2760, %v2543
    %v2784 = vmul.f32 %v2762, %v2544
    %v2785 = vmul.f32 %v2764, %v2545
    %v2786 = vmul.f32 %v2766, %v2546
    %v2787 = vmul.f32 %v2768, %v2547
    %v2788 = vmul.f32 %v2770, %v2548
    %v2789 = vmul.f32 %v2772, %v2549
    %v2790 = vmul.f32 %v2774, %v2550
    %2799 = vrot.lane.b32.xlu0 %v2775, 32
    %v2800 = vpop.permute.xlu0 %2799
    %2801 = vrot.lane.b32.xlu0 %v2776, 32
    %v2802 = vpop.permute.xlu0 %2801
    %2803 = vrot.lane.b32.xlu0 %v2777, 32
    %v2804 = vpop.permute.xlu0 %2803
    %2805 = vrot.lane.b32.xlu0 %v2778, 32
    %v2806 = vpop.permute.xlu0 %2805
    %2807 = vrot.lane.b32.xlu0 %v2779, 32
    %v2808 = vpop.permute.xlu0 %2807
    %2809 = vrot.lane.b32.xlu0 %v2780, 32
    %v2810 = vpop.permute.xlu0 %2809
    %2811 = vrot.lane.b32.xlu0 %v2781, 32
    %v2812 = vpop.permute.xlu0 %2811
    %2813 = vrot.lane.b32.xlu0 %v2782, 32
    %v2814 = vpop.permute.xlu0 %2813
    %v2823 = vmul.f32 %v2760, %v2800
    %v2824 = vmul.f32 %v2762, %v2802
    %v2825 = vmul.f32 %v2764, %v2804
    %v2826 = vmul.f32 %v2766, %v2806
    %v2827 = vmul.f32 %v2768, %v2808
    %v2828 = vmul.f32 %v2770, %v2810
    %v2829 = vmul.f32 %v2772, %v2812
    %v2830 = vmul.f32 %v2774, %v2814
    %2839 = vrot.lane.b32.xlu0 %v2823, 32
    %v2840 = vpop.permute.xlu0 %2839
    %2841 = vrot.lane.b32.xlu0 %v2824, 32
    %v2842 = vpop.permute.xlu0 %2841
    %2843 = vrot.lane.b32.xlu0 %v2825, 32
    %v2844 = vpop.permute.xlu0 %2843
    %2845 = vrot.lane.b32.xlu0 %v2826, 32
    %v2846 = vpop.permute.xlu0 %2845
    %2847 = vrot.lane.b32.xlu0 %v2827, 32
    %v2848 = vpop.permute.xlu0 %2847
    %2849 = vrot.lane.b32.xlu0 %v2828, 32
    %v2850 = vpop.permute.xlu0 %2849
    %2851 = vrot.lane.b32.xlu0 %v2829, 32
    %v2852 = vpop.permute.xlu0 %2851
    %2853 = vrot.lane.b32.xlu0 %v2830, 32
    %v2854 = vpop.permute.xlu0 %2853
    %v2863 = vadd.f32 %v2783, %v2840
    %v2864 = vadd.f32 %v2784, %v2842
    %v2865 = vadd.f32 %v2785, %v2844
    %v2866 = vadd.f32 %v2786, %v2846
    %v2867 = vadd.f32 %v2787, %v2848
    %v2868 = vadd.f32 %v2788, %v2850
    %v2869 = vadd.f32 %v2789, %v2852
    %v2870 = vadd.f32 %v2790, %v2854
    %v2871 = vtanh.pop %v2863
    %v2872 = vtanh.pop %v2864
    %v2873 = vtanh.pop %v2865
    %v2874 = vtanh.pop %v2866
    %v2875 = vtanh.pop %v2867
    %v2876 = vtanh.pop %v2868
    %v2877 = vtanh.pop %v2869
    %v2878 = vtanh.pop %v2870
    %2887 = vrot.lane.b32.xlu0 %v2871, 32
    %v2888 = vpop.permute.xlu0 %2887
    %2889 = vrot.lane.b32.xlu0 %v2872, 32
    %v2890 = vpop.permute.xlu0 %2889
    %2891 = vrot.lane.b32.xlu0 %v2873, 32
    %v2892 = vpop.permute.xlu0 %2891
    %2893 = vrot.lane.b32.xlu0 %v2874, 32
    %v2894 = vpop.permute.xlu0 %2893
    %2895 = vrot.lane.b32.xlu0 %v2875, 32
    %v2896 = vpop.permute.xlu0 %2895
    %2897 = vrot.lane.b32.xlu0 %v2876, 32
    %v2898 = vpop.permute.xlu0 %2897
    %2899 = vrot.lane.b32.xlu0 %v2877, 32
    %v2900 = vpop.permute.xlu0 %2899
    %2901 = vrot.lane.b32.xlu0 %v2878, 32
    %v2902 = vpop.permute.xlu0 %2901
    %v2911 = vmul.f32 %v2760, %v2888
    %v2912 = vmul.f32 %v2762, %v2890
    %v2913 = vmul.f32 %v2764, %v2892
    %v2914 = vmul.f32 %v2766, %v2894
    %v2915 = vmul.f32 %v2768, %v2896
    %v2916 = vmul.f32 %v2770, %v2898
    %v2917 = vmul.f32 %v2772, %v2900
    %v2918 = vmul.f32 %v2774, %v2902
    %v2919 = vld [vmem:[%s0] sm:$0xff]
    %v2920 = vld [vmem:[%s8] sm:$0xf]
    %v2921 = vld [vmem:[%s9] sm:$0xff]
    %v2922 = vld [vmem:[%s9 + $0x8] sm:$0xff]
    %v2923 = vld [vmem:[%s9 + $0x10] sm:$0xff]
    %v2924 = vld [vmem:[%s9 + $0x18] sm:$0xff]
    %v2933 = vrot.slane %v2912, 7
    %v2934 = vsel %vm689, %v2933, %v2911
    %v2935 = vrot.slane %v2913, 6
    %v2936 = vsel %vm692, %v2935, %v2934
    %v2937 = vrot.slane %v2914, 5
    %v2938 = vsel %vm695, %v2937, %v2936
    %v2939 = vrot.slane %v2915, 4
    %v2940 = vsel %vm698, %v2939, %v2938
    %v2941 = vrot.slane %v2916, 3
    %v2942 = vsel %vm701, %v2941, %v2940
    %v2943 = vrot.slane %v2917, 2
    %v2944 = vsel %vm704, %v2943, %v2942
    %v2945 = vrot.slane %v2918, 1
    %v2946 = vsel %vm707, %v2945, %v2944
    %2947 = vrot.lane.b32.xlu0 %v2946, 64
    %v2948 = vpop.permute.xlu0 %2947
    %v2949 = vsel %vm382, %v2948, 0
    %2951 = vmatprep.subr.mxu0 0.0
    %2952 = vmatpush1.msra.mxu0 %v2921
    %2953 = vmatprep.subr.mxu0 0.0
    %2954 = vmatpush1.msra.mxu0 %v2922
    %2955 = vmatprep.subr.mxu0 0.0
    %2956 = vmatpush1.msra.mxu0 %v2923
    %2957 = vmatprep.subr.mxu0 0.0
    %2958 = vmatpush1.msra.mxu0 %v2924
    %2959 = vmatprep.subr.mxu0 0.0
    %2960 = vmatpush1.msra.mxu0 0.0
    %2961 = vmatprep.subr.mxu0 0.0
    %2962 = vmatpush1.msra.mxu0 0.0
    %2963 = vmatprep.subr.mxu0 0.0
    %2964 = vmatpush1.msra.mxu0 0.0
    %2965 = vmatprep.subr.mxu0 0.0
    %2966 = vmatpush1.msra.mxu0 0.0
    %2967 = vmatprep.subr.mxu0 0.0
    %2968 = vmatpush1.msra.mxu0 0.0
    %2969 = vmatprep.subr.mxu0 0.0
    %2970 = vmatpush1.msra.mxu0 0.0
    %2971 = vmatprep.subr.mxu0 0.0
    %2972 = vmatpush1.msra.mxu0 0.0
    %2973 = vmatprep.subr.mxu0 0.0
    %2974 = vmatpush1.msra.mxu0 0.0
    %2975 = vmatprep.subr.mxu0 0.0
    %2976 = vmatpush1.msra.mxu0 0.0
    %2977 = vmatprep.subr.mxu0 0.0
    %2978 = vmatpush1.msra.mxu0 0.0
    %2979 = vmatprep.subr.mxu0 0.0
    %2980 = vmatpush1.msra.mxu0 0.0
    %2981 = vmatprep.subr.mxu0 0.0
    %2982 = vmatpush1.msra.mxu0 0.0
    %2983 = vmatprep.subr.mxu0 0.0
    %2984 = vmatpush1.msra.mxu0 0.0
    %2985 = vmatprep.subr.mxu0 0.0
    %2986 = vmatpush1.msra.mxu0 0.0
    %2987 = vmatprep.subr.mxu0 0.0
    %2988 = vmatpush1.msra.mxu0 0.0
    %2989 = vmatprep.subr.mxu0 0.0
    %2990 = vmatpush1.msra.mxu0 0.0
    %2991 = vmatprep.subr.mxu0 0.0
    %2992 = vmatpush1.msra.mxu0 0.0
    %2993 = vmatprep.subr.mxu0 0.0
    %2994 = vmatpush1.msra.mxu0 0.0
    %2995 = vmatprep.subr.mxu0 0.0
    %2996 = vmatpush1.msra.mxu0 0.0
    %2997 = vmatprep.subr.mxu0 0.0
    %2998 = vmatpush1.msra.mxu0 0.0
    %2999 = vmatprep.subr.mxu0 0.0
    %3000 = vmatpush1.msra.mxu0 0.0
    %3001 = vmatprep.subr.mxu0 0.0
    %3002 = vmatpush1.msra.mxu0 0.0
    %3003 = vmatprep.subr.mxu0 0.0
    %3004 = vmatpush1.msra.mxu0 0.0
    %3005 = vmatprep.subr.mxu0 0.0
    %3006 = vmatpush1.msra.mxu0 0.0
    %3007 = vmatprep.subr.mxu0 0.0
    %3008 = vmatpush1.msra.mxu0 0.0
    %3009 = vmatprep.subr.mxu0 0.0
    %3010 = vmatpush1.msra.mxu0 0.0
    %3011 = vmatprep.subr.mxu0 0.0
    %3012 = vmatpush1.msra.mxu0 0.0
    %3013 = vmatprep.subr.mxu0 0.0
    %3014 = vmatpush1.msra.mxu0 0.0
    %3015 = vmatprep.mubr.f32.mxu0 0.0
    %3016 = vmatmul.mubr.f32.gmra.mrb[0].mxu0 %v2949
    %v3017 = vpop.f32.mrb[0].mxu0
    %v3018 = vadd.f32 0.0, %v3017
    %v3019 = vpop.f32.mrb[0].mxu0
    %3020 = vdwg.mxu0
    %v3022 = vsel %vm213, %v2919, 0
    %v3025 = vsel %vm238, %v2920, 0
    %3027 = vmatprep.subr.mxu0 0.0
    %3028 = vmatpush1.msra.mxu0 %v3025
    %3029 = vmatprep.subr.mxu0 0.0
    %3030 = vmatpush1.msra.mxu0 0.0
    %3031 = vmatprep.subr.mxu0 0.0
    %3032 = vmatpush1.msra.mxu0 0.0
    %3033 = vmatprep.subr.mxu0 0.0
    %3034 = vmatpush1.msra.mxu0 0.0
    %3035 = vmatprep.subr.mxu0 0.0
    %3036 = vmatpush1.msra.mxu0 0.0
    %3037 = vmatprep.subr.mxu0 0.0
    %3038 = vmatpush1.msra.mxu0 0.0
    %3039 = vmatprep.subr.mxu0 0.0
    %3040 = vmatpush1.msra.mxu0 0.0
    %3041 = vmatprep.subr.mxu0 0.0
    %3042 = vmatpush1.msra.mxu0 0.0
    %3043 = vmatprep.subr.mxu0 0.0
    %3044 = vmatpush1.msra.mxu0 0.0
    %3045 = vmatprep.subr.mxu0 0.0
    %3046 = vmatpush1.msra.mxu0 0.0
    %3047 = vmatprep.subr.mxu0 0.0
    %3048 = vmatpush1.msra.mxu0 0.0
    %3049 = vmatprep.subr.mxu0 0.0
    %3050 = vmatpush1.msra.mxu0 0.0
    %3051 = vmatprep.subr.mxu0 0.0
    %3052 = vmatpush1.msra.mxu0 0.0
    %3053 = vmatprep.subr.mxu0 0.0
    %3054 = vmatpush1.msra.mxu0 0.0
    %3055 = vmatprep.subr.mxu0 0.0
    %3056 = vmatpush1.msra.mxu0 0.0
    %3057 = vmatprep.subr.mxu0 0.0
    %3058 = vmatpush1.msra.mxu0 0.0
    %3059 = vmatprep.subr.mxu0 0.0
    %3060 = vmatpush1.msra.mxu0 0.0
    %3061 = vmatprep.subr.mxu0 0.0
    %3062 = vmatpush1.msra.mxu0 0.0
    %3063 = vmatprep.subr.mxu0 0.0
    %3064 = vmatpush1.msra.mxu0 0.0
    %3065 = vmatprep.subr.mxu0 0.0
    %3066 = vmatpush1.msra.mxu0 0.0
    %3067 = vmatprep.subr.mxu0 0.0
    %3068 = vmatpush1.msra.mxu0 0.0
    %3069 = vmatprep.subr.mxu0 0.0
    %3070 = vmatpush1.msra.mxu0 0.0
    %3071 = vmatprep.subr.mxu0 0.0
    %3072 = vmatpush1.msra.mxu0 0.0
    %3073 = vmatprep.subr.mxu0 0.0
    %3074 = vmatpush1.msra.mxu0 0.0
    %3075 = vmatprep.subr.mxu0 0.0
    %3076 = vmatpush1.msra.mxu0 0.0
    %3077 = vmatprep.subr.mxu0 0.0
    %3078 = vmatpush1.msra.mxu0 0.0
    %3079 = vmatprep.subr.mxu0 0.0
    %3080 = vmatpush1.msra.mxu0 0.0
    %3081 = vmatprep.subr.mxu0 0.0
    %3082 = vmatpush1.msra.mxu0 0.0
    %3083 = vmatprep.subr.mxu0 0.0
    %3084 = vmatpush1.msra.mxu0 0.0
    %3085 = vmatprep.subr.mxu0 0.0
    %3086 = vmatpush1.msra.mxu0 0.0
    %3087 = vmatprep.subr.mxu0 0.0
    %3088 = vmatpush1.msra.mxu0 0.0
    %3089 = vmatprep.subr.mxu0 0.0
    %3090 = vmatpush1.msra.mxu0 0.0
    %3091 = vmatprep.mubr.f32.mxu0 0.0
    %3092 = vmatmul.mubr.f32.gmra.mrb[0].mxu0 %v3022
    %v3093 = vpop.f32.mrb[0].mxu0
    %v3094 = vadd.f32 %v3018, %v3093
    %v3095 = vpop.f32.mrb[0].mxu0
    %3096 = vdwg.mxu0
    %v3097 = vld [vmem:[%s10] sm:$0x1]
    %v3099 = vlaneseq
    %v3100 = vshrl.u32 %v3099, 7
    %v3101 = vsub.s32 0, %v3100
    %v3102 = vrot.slane %v3097, %v3101
    %v3104 = vadd.f32 %v3094, %v3102
    %vm3105 = vcmp.gt.f32.partialorder %v3104, 0.0
    %v3106 = vmin.f32 %v3104, 0.0
    %v3107 = vmul.f32 %v3106, 1.442695
    %v3108 = vpow.pop %v3107
    %v3109 = vsub.f32 %v3108, 1.0
    %v3110 = vsel %vm3105, %v3104, %v3109
    %v3111 = vld [vmem:[%s11] sm:$0xff]
    %v3112 = vld [vmem:[%s11 + $0x8] sm:$0xff]
    %v3113 = vld [vmem:[%s11 + $0x10] sm:$0xff]
    %v3114 = vld [vmem:[%s11 + $0x18] sm:$0xff]
    %v3115 = vld [vmem:[%s12] sm:$0x1]
    %v3117 = vlaneseq
    %v3118 = vshrl.u32 %v3117, 7
    %v3119 = vsub.s32 0, %v3118
    %v3120 = vrot.slane %v3115, %v3119
    %v3123 = vsel %vm382, %v3110, 0
    %3125 = vmatprep.subr.mxu0 0.0
    %3126 = vmatpush1.msra.mxu0 %v3111
    %3127 = vmatprep.subr.mxu0 0.0
    %3128 = vmatpush1.msra.mxu0 %v3112
    %3129 = vmatprep.subr.mxu0 0.0
    %3130 = vmatpush1.msra.mxu0 %v3113
    %3131 = vmatprep.subr.mxu0 0.0
    %3132 = vmatpush1.msra.mxu0 %v3114
    %3133 = vmatprep.subr.mxu0 0.0
    %3134 = vmatpush1.msra.mxu0 0.0
    %3135 = vmatprep.subr.mxu0 0.0
    %3136 = vmatpush1.msra.mxu0 0.0
    %3137 = vmatprep.subr.mxu0 0.0
    %3138 = vmatpush1.msra.mxu0 0.0
    %3139 = vmatprep.subr.mxu0 0.0
    %3140 = vmatpush1.msra.mxu0 0.0
    %3141 = vmatprep.subr.mxu0 0.0
    %3142 = vmatpush1.msra.mxu0 0.0
    %3143 = vmatprep.subr.mxu0 0.0
    %3144 = vmatpush1.msra.mxu0 0.0
    %3145 = vmatprep.subr.mxu0 0.0
    %3146 = vmatpush1.msra.mxu0 0.0
    %3147 = vmatprep.subr.mxu0 0.0
    %3148 = vmatpush1.msra.mxu0 0.0
    %3149 = vmatprep.subr.mxu0 0.0
    %3150 = vmatpush1.msra.mxu0 0.0
    %3151 = vmatprep.subr.mxu0 0.0
    %3152 = vmatpush1.msra.mxu0 0.0
    %3153 = vmatprep.subr.mxu0 0.0
    %3154 = vmatpush1.msra.mxu0 0.0
    %3155 = vmatprep.subr.mxu0 0.0
    %3156 = vmatpush1.msra.mxu0 0.0
    %3157 = vmatprep.subr.mxu0 0.0
    %3158 = vmatpush1.msra.mxu0 0.0
    %3159 = vmatprep.subr.mxu0 0.0
    %3160 = vmatpush1.msra.mxu0 0.0
    %3161 = vmatprep.subr.mxu0 0.0
    %3162 = vmatpush1.msra.mxu0 0.0
    %3163 = vmatprep.subr.mxu0 0.0
    %3164 = vmatpush1.msra.mxu0 0.0
    %3165 = vmatprep.subr.mxu0 0.0
    %3166 = vmatpush1.msra.mxu0 0.0
    %3167 = vmatprep.subr.mxu0 0.0
    %3168 = vmatpush1.msra.mxu0 0.0
    %3169 = vmatprep.subr.mxu0 0.0
    %3170 = vmatpush1.msra.mxu0 0.0
    %3171 = vmatprep.subr.mxu0 0.0
    %3172 = vmatpush1.msra.mxu0 0.0
    %3173 = vmatprep.subr.mxu0 0.0
    %3174 = vmatpush1.msra.mxu0 0.0
    %3175 = vmatprep.subr.mxu0 0.0
    %3176 = vmatpush1.msra.mxu0 0.0
    %3177 = vmatprep.subr.mxu0 0.0
    %3178 = vmatpush1.msra.mxu0 0.0
    %3179 = vmatprep.subr.mxu0 0.0
    %3180 = vmatpush1.msra.mxu0 0.0
    %3181 = vmatprep.subr.mxu0 0.0
    %3182 = vmatpush1.msra.mxu0 0.0
    %3183 = vmatprep.subr.mxu0 0.0
    %3184 = vmatpush1.msra.mxu0 0.0
    %3185 = vmatprep.subr.mxu0 0.0
    %3186 = vmatpush1.msra.mxu0 0.0
    %3187 = vmatprep.subr.mxu0 0.0
    %3188 = vmatpush1.msra.mxu0 0.0
    %3189 = vmatprep.mubr.f32.mxu0 0.0
    %3190 = vmatmul.mubr.f32.gmra.mrb[0].mxu0 %v3123
    %v3191 = vpop.f32.mrb[0].mxu0
    %v3192 = vadd.f32 %v3120, %v3191
    %v3193 = vpop.f32.mrb[0].mxu0
    %3194 = vdwg.mxu0
    %vm3195 = vcmp.gt.f32.partialorder %v3192, 0.0
    %v3196 = vmin.f32 %v3192, 0.0
    %v3197 = vmul.f32 %v3196, 1.442695
    %v3198 = vpow.pop %v3197
    %v3199 = vsub.f32 %v3198, 1.0
    %v3200 = vsel %vm3195, %v3192, %v3199
    %v3201 = vld [vmem:[%s13] sm:$0xff]
    %v3202 = vld [vmem:[%s13 + $0x8] sm:$0xff]
    %v3203 = vld [vmem:[%s1] sm:$0xff]
    %v3204 = vld [vmem:[%s14] sm:$0x3]
    %v3206 = vsel %vm79, %v3203, 0
    %v3209 = vsel %vm104, %v3204, 0
    %3211 = vmatprep.subr.mxu0 0.0
    %3212 = vmatpush1.msra.mxu0 %v3209
    %3213 = vmatprep.subr.mxu0 0.0
    %3214 = vmatpush1.msra.mxu0 0.0
    %3215 = vmatprep.subr.mxu0 0.0
    %3216 = vmatpush1.msra.mxu0 0.0
    %3217 = vmatprep.subr.mxu0 0.0
    %3218 = vmatpush1.msra.mxu0 0.0
    %3219 = vmatprep.subr.mxu0 0.0
    %3220 = vmatpush1.msra.mxu0 0.0
    %3221 = vmatprep.subr.mxu0 0.0
    %3222 = vmatpush1.msra.mxu0 0.0
    %3223 = vmatprep.subr.mxu0 0.0
    %3224 = vmatpush1.msra.mxu0 0.0
    %3225 = vmatprep.subr.mxu0 0.0
    %3226 = vmatpush1.msra.mxu0 0.0
    %3227 = vmatprep.subr.mxu0 0.0
    %3228 = vmatpush1.msra.mxu0 0.0
    %3229 = vmatprep.subr.mxu0 0.0
    %3230 = vmatpush1.msra.mxu0 0.0
    %3231 = vmatprep.subr.mxu0 0.0
    %3232 = vmatpush1.msra.mxu0 0.0
    %3233 = vmatprep.subr.mxu0 0.0
    %3234 = vmatpush1.msra.mxu0 0.0
    %3235 = vmatprep.subr.mxu0 0.0
    %3236 = vmatpush1.msra.mxu0 0.0
    %3237 = vmatprep.subr.mxu0 0.0
    %3238 = vmatpush1.msra.mxu0 0.0
    %3239 = vmatprep.subr.mxu0 0.0
    %3240 = vmatpush1.msra.mxu0 0.0
    %3241 = vmatprep.subr.mxu0 0.0
    %3242 = vmatpush1.msra.mxu0 0.0
    %3243 = vmatprep.subr.mxu0 0.0
    %3244 = vmatpush1.msra.mxu0 0.0
    %3245 = vmatprep.subr.mxu0 0.0
    %3246 = vmatpush1.msra.mxu0 0.0
    %3247 = vmatprep.subr.mxu0 0.0
    %3248 = vmatpush1.msra.mxu0 0.0
    %3249 = vmatprep.subr.mxu0 0.0
    %3250 = vmatpush1.msra.mxu0 0.0
    %3251 = vmatprep.subr.mxu0 0.0
    %3252 = vmatpush1.msra.mxu0 0.0
    %3253 = vmatprep.subr.mxu0 0.0
    %3254 = vmatpush1.msra.mxu0 0.0
    %3255 = vmatprep.subr.mxu0 0.0
    %3256 = vmatpush1.msra.mxu0 0.0
    %3257 = vmatprep.subr.mxu0 0.0
    %3258 = vmatpush1.msra.mxu0 0.0
    %3259 = vmatprep.subr.mxu0 0.0
    %3260 = vmatpush1.msra.mxu0 0.0
    %3261 = vmatprep.subr.mxu0 0.0
    %3262 = vmatpush1.msra.mxu0 0.0
    %3263 = vmatprep.subr.mxu0 0.0
    %3264 = vmatpush1.msra.mxu0 0.0
    %3265 = vmatprep.subr.mxu0 0.0
    %3266 = vmatpush1.msra.mxu0 0.0
    %3267 = vmatprep.subr.mxu0 0.0
    %3268 = vmatpush1.msra.mxu0 0.0
    %3269 = vmatprep.subr.mxu0 0.0
    %3270 = vmatpush1.msra.mxu0 0.0
    %3271 = vmatprep.subr.mxu0 0.0
    %3272 = vmatpush1.msra.mxu0 0.0
    %3273 = vmatprep.subr.mxu0 0.0
    %3274 = vmatpush1.msra.mxu0 0.0
    %3275 = vmatprep.mubr.f32.mxu0 0.0
    %3276 = vmatmul.mubr.f32.gmra.mrb[0].mxu0 %v3206
    %v3277 = vpop.f32.mrb[0].mxu0
    %v3278 = vadd.f32 0.0, %v3277
    %v3279 = vpop.f32.mrb[0].mxu0
    %3280 = vdwg.mxu0
    %vm3281 = vcmask 130048
    %v3283 = vsel %vm3281, %v3200, 0
    %3285 = vmatprep.subr.mxu0 0.0
    %3286 = vmatpush1.msra.mxu0 %v3201
    %3287 = vmatprep.subr.mxu0 0.0
    %3288 = vmatpush1.msra.mxu0 %v3202
    %3289 = vmatprep.subr.mxu0 0.0
    %3290 = vmatpush1.msra.mxu0 0.0
    %3291 = vmatprep.subr.mxu0 0.0
    %3292 = vmatpush1.msra.mxu0 0.0
    %3293 = vmatprep.subr.mxu0 0.0
    %3294 = vmatpush1.msra.mxu0 0.0
    %3295 = vmatprep.subr.mxu0 0.0
    %3296 = vmatpush1.msra.mxu0 0.0
    %3297 = vmatprep.subr.mxu0 0.0
    %3298 = vmatpush1.msra.mxu0 0.0
    %3299 = vmatprep.subr.mxu0 0.0
    %3300 = vmatpush1.msra.mxu0 0.0
    %3301 = vmatprep.subr.mxu0 0.0
    %3302 = vmatpush1.msra.mxu0 0.0
    %3303 = vmatprep.subr.mxu0 0.0
    %3304 = vmatpush1.msra.mxu0 0.0
    %3305 = vmatprep.subr.mxu0 0.0
    %3306 = vmatpush1.msra.mxu0 0.0
    %3307 = vmatprep.subr.mxu0 0.0
    %3308 = vmatpush1.msra.mxu0 0.0
    %3309 = vmatprep.subr.mxu0 0.0
    %3310 = vmatpush1.msra.mxu0 0.0
    %3311 = vmatprep.subr.mxu0 0.0
    %3312 = vmatpush1.msra.mxu0 0.0
    %3313 = vmatprep.subr.mxu0 0.0
    %3314 = vmatpush1.msra.mxu0 0.0
    %3315 = vmatprep.subr.mxu0 0.0
    %3316 = vmatpush1.msra.mxu0 0.0
    %3317 = vmatprep.subr.mxu0 0.0
    %3318 = vmatpush1.msra.mxu0 0.0
    %3319 = vmatprep.subr.mxu0 0.0
    %3320 = vmatpush1.msra.mxu0 0.0
    %3321 = vmatprep.subr.mxu0 0.0
    %3322 = vmatpush1.msra.mxu0 0.0
    %3323 = vmatprep.subr.mxu0 0.0
    %3324 = vmatpush1.msra.mxu0 0.0
    %3325 = vmatprep.subr.mxu0 0.0
    %3326 = vmatpush1.msra.mxu0 0.0
    %3327 = vmatprep.subr.mxu0 0.0
    %3328 = vmatpush1.msra.mxu0 0.0
    %3329 = vmatprep.subr.mxu0 0.0
    %3330 = vmatpush1.msra.mxu0 0.0
    %3331 = vmatprep.subr.mxu0 0.0
    %3332 = vmatpush1.msra.mxu0 0.0
    %3333 = vmatprep.subr.mxu0 0.0
    %3334 = vmatpush1.msra.mxu0 0.0
    %3335 = vmatprep.subr.mxu0 0.0
    %3336 = vmatpush1.msra.mxu0 0.0
    %3337 = vmatprep.subr.mxu0 0.0
    %3338 = vmatpush1.msra.mxu0 0.0
    %3339 = vmatprep.subr.mxu0 0.0
    %3340 = vmatpush1.msra.mxu0 0.0
    %3341 = vmatprep.subr.mxu0 0.0
    %3342 = vmatpush1.msra.mxu0 0.0
    %3343 = vmatprep.subr.mxu0 0.0
    %3344 = vmatpush1.msra.mxu0 0.0
    %3345 = vmatprep.subr.mxu0 0.0
    %3346 = vmatpush1.msra.mxu0 0.0
    %3347 = vmatprep.subr.mxu0 0.0
    %3348 = vmatpush1.msra.mxu0 0.0
    %3349 = vmatprep.mubr.f32.mxu0 0.0
    %3350 = vmatmul.mubr.f32.gmra.mrb[0].mxu0 %v3283
    %v3351 = vpop.f32.mrb[0].mxu0
    %v3352 = vadd.f32 %v3278, %v3351
    %v3353 = vpop.f32.mrb[0].mxu0
    %3354 = vdwg.mxu0
    %v3355 = vld [vmem:[%s15] sm:$0xff]
    %v3356 = vld [vmem:[%s15 + $0x8] sm:$0xff]
    %v3357 = vld [vmem:[%s16] sm:$0x1]
    %v3359 = vlaneseq
    %v3360 = vshrl.u32 %v3359, 7
    %v3361 = vsub.s32 0, %v3360
    %v3362 = vrot.slane %v3357, %v3361
    %v3365 = vsel %vm3281, %v3352, 0
    %3367 = vmatprep.subr.mxu0 0.0
    %3368 = vmatpush1.msra.mxu0 %v3355
    %3369 = vmatprep.subr.mxu0 0.0
    %3370 = vmatpush1.msra.mxu0 %v3356
    %3371 = vmatprep.subr.mxu0 0.0
    %3372 = vmatpush1.msra.mxu0 0.0
    %3373 = vmatprep.subr.mxu0 0.0
    %3374 = vmatpush1.msra.mxu0 0.0
    %3375 = vmatprep.subr.mxu0 0.0
    %3376 = vmatpush1.msra.mxu0 0.0
    %3377 = vmatprep.subr.mxu0 0.0
    %3378 = vmatpush1.msra.mxu0 0.0
    %3379 = vmatprep.subr.mxu0 0.0
    %3380 = vmatpush1.msra.mxu0 0.0
    %3381 = vmatprep.subr.mxu0 0.0
    %3382 = vmatpush1.msra.mxu0 0.0
    %3383 = vmatprep.subr.mxu0 0.0
    %3384 = vmatpush1.msra.mxu0 0.0
    %3385 = vmatprep.subr.mxu0 0.0
    %3386 = vmatpush1.msra.mxu0 0.0
    %3387 = vmatprep.subr.mxu0 0.0
    %3388 = vmatpush1.msra.mxu0 0.0
    %3389 = vmatprep.subr.mxu0 0.0
    %3390 = vmatpush1.msra.mxu0 0.0
    %3391 = vmatprep.subr.mxu0 0.0
    %3392 = vmatpush1.msra.mxu0 0.0
    %3393 = vmatprep.subr.mxu0 0.0
    %3394 = vmatpush1.msra.mxu0 0.0
    %3395 = vmatprep.subr.mxu0 0.0
    %3396 = vmatpush1.msra.mxu0 0.0
    %3397 = vmatprep.subr.mxu0 0.0
    %3398 = vmatpush1.msra.mxu0 0.0
    %3399 = vmatprep.subr.mxu0 0.0
    %3400 = vmatpush1.msra.mxu0 0.0
    %3401 = vmatprep.subr.mxu0 0.0
    %3402 = vmatpush1.msra.mxu0 0.0
    %3403 = vmatprep.subr.mxu0 0.0
    %3404 = vmatpush1.msra.mxu0 0.0
    %3405 = vmatprep.subr.mxu0 0.0
    %3406 = vmatpush1.msra.mxu0 0.0
    %3407 = vmatprep.subr.mxu0 0.0
    %3408 = vmatpush1.msra.mxu0 0.0
    %3409 = vmatprep.subr.mxu0 0.0
    %3410 = vmatpush1.msra.mxu0 0.0
    %3411 = vmatprep.subr.mxu0 0.0
    %3412 = vmatpush1.msra.mxu0 0.0
    %3413 = vmatprep.subr.mxu0 0.0
    %3414 = vmatpush1.msra.mxu0 0.0
    %3415 = vmatprep.subr.mxu0 0.0
    %3416 = vmatpush1.msra.mxu0 0.0
    %3417 = vmatprep.subr.mxu0 0.0
    %3418 = vmatpush1.msra.mxu0 0.0
    %3419 = vmatprep.subr.mxu0 0.0
    %3420 = vmatpush1.msra.mxu0 0.0
    %3421 = vmatprep.subr.mxu0 0.0
    %3422 = vmatpush1.msra.mxu0 0.0
    %3423 = vmatprep.subr.mxu0 0.0
    %3424 = vmatpush1.msra.mxu0 0.0
    %3425 = vmatprep.subr.mxu0 0.0
    %3426 = vmatpush1.msra.mxu0 0.0
    %3427 = vmatprep.subr.mxu0 0.0
    %3428 = vmatpush1.msra.mxu0 0.0
    %3429 = vmatprep.subr.mxu0 0.0
    %3430 = vmatpush1.msra.mxu0 0.0
    %3431 = vmatprep.mubr.f32.mxu0 0.0
    %3432 = vmatmul.mubr.f32.gmra.mrb[0].mxu0 %v3365
    %v3433 = vpop.f32.mrb[0].mxu0
    %v3434 = vadd.f32 %v3362, %v3433
    %v3435 = vpop.f32.mrb[0].mxu0
    %3436 = vdwg.mxu0
    %3437 = vst.msk [vmem:[#allocation3] sm:$0xff] %vm3281, %v3200
    %3438 = vst.msk [vmem:[#allocation5] sm:$0xff] %vm3281, %v3352
    %3439 = vst.msk [vmem:[%s19] sm:$0xff] %vm213, %v3434
    // Predicated region
    $region70: #{lko_lstm_forward.1} parent=1 // pred_check
      _
    $region71: #{lko_lstm_forward.1} parent=1 // pred_check_branch
      %3441 = sbr.rel (0) target = $region73
    $region72: #{lko_lstm_forward.1} parent=1 // pred_region
      %s3443 = ssub.s32 128, 128
      %3444 = vsyncadd [#allocation4], %s3443
      %s3446 = sshll.u32 [#allocation3], 4
      %s3447 = int_to_ptr.vmem [resolvable:$true] %s3446
      %3449 = dma.vmem_to_hbm [thread:$0]  %s3447, 128, %s17, [#allocation4]
    $region73: #{lko_lstm_forward.1} parent=1 // pred_fallthru
      _
    // Predicated region
    $region74: #{lko_lstm_forward.1} parent=1 // pred_check
      _
    $region75: #{lko_lstm_forward.1} parent=1 // pred_check_branch
      %3451 = sbr.rel (0) target = $region77
    $region76: #{lko_lstm_forward.1} parent=1 // pred_region
      %s3453 = ssub.s32 128, 128
      %3454 = vsyncadd [#allocation6], %s3453
      %s3456 = sshll.u32 [#allocation5], 4
      %s3457 = int_to_ptr.vmem [resolvable:$true] %s3456
      %3459 = dma.vmem_to_hbm [thread:$0]  %s3457, 128, %s18, [#allocation6]
    $region77: #{lko_lstm_forward.1} parent=1 // pred_fallthru
      _
    // Predicated region
    $region78: #{lko_lstm_forward.1} parent=1 // pred_check
      _
    $region79: #{lko_lstm_forward.1} parent=1 // pred_check_branch
      %3461 = sbr.rel (0) target = $region81
    $region80: #{lko_lstm_forward.1} parent=1 // pred_region
      _
    $region81: #{lko_lstm_forward.1} parent=1 // pred_fallthru
      _
    // Predicated region
    $region82: #{lko_lstm_forward.1} parent=1 // pred_check
      _
    $region83: #{lko_lstm_forward.1} parent=1 // pred_check_branch
      %3463 = sbr.rel (0) target = $region85
    $region84: #{lko_lstm_forward.1} parent=1 // pred_region
      %3464 = dma.done [#allocation4], 128
    $region85: #{lko_lstm_forward.1} parent=1 // pred_fallthru
      _
    // Predicated region
    $region86: #{lko_lstm_forward.1} parent=1 // pred_check
      _
    $region87: #{lko_lstm_forward.1} parent=1 // pred_check_branch
      %3466 = sbr.rel (0) target = $region89
    $region88: #{lko_lstm_forward.1} parent=1 // pred_region
      %3467 = dma.done [#allocation6], 128
    $region89: #{lko_lstm_forward.1} parent=1 // pred_fallthru
      _
    // Predicated region
    $region90: #{lko_lstm_forward.1} parent=1 // pred_check
      _
    $region91: #{lko_lstm_forward.1} parent=1 // pred_check_branch
      %3469 = sbr.rel (0) target = $region93
    $region92: #{lko_lstm_forward.1} parent=1 // pred_region
      _
    $region93: #{lko_lstm_forward.1} parent=1 // pred_fallthru
      _
    %3470 = vsyncpa [#allocation4], 1
    %3471 = vsyncpa [#allocation6], 1

</llo_original>
